<compile_context>
chip_gen: v6e
topology: v6e:2x2x1
jax: 0.10.0
libtpu: 0.0.40
codegen_flags: <defaults>
</compile_context>

<pallas_src>
import functools

import numpy as np
import jax
import jax.numpy as jnp
from jax.experimental import pallas as pl
from jax.experimental.pallas import tpu as pltpu


_NEG_BIG = -1e30  # bias for padded (dummy) classes -> exp() == 0 in softmax


# ----------------------------------------------------------------------------
# Fused forward kernel
# ----------------------------------------------------------------------------

def _convnet_kernel(x_ref, w1b_ref, b1t_ref, w2b_ref, b2t_ref, wl_ref, bl_ref,
                    logits_ref, probas_ref, y1_ref, p1_ref, y2_ref):
    tb = x_ref.shape[1]
    f32 = jnp.float32

    # ---- stage 1: conv1 (3x3, 1->8, pad 1) as 3 banded matmuls, + bias + ReLU
    # x_ref: (30, tb, 30) = (h_pad, b, w_pad).  Rows of the flat view are
    # h_pad*tb + b, so the per-dy LHS is a contiguous, aligned row slice.
    xflat = x_ref[...].reshape(30 * tb, 30)
    y1_ref[...] = jnp.dot(xflat[0 * tb:28 * tb, :], w1b_ref[0],
                          preferred_element_type=f32)
    y1_ref[...] += jnp.dot(xflat[1 * tb:29 * tb, :], w1b_ref[1],
                           preferred_element_type=f32)
    y1_ref[...] += jnp.dot(xflat[2 * tb:30 * tb, :], w1b_ref[2],
                           preferred_element_type=f32)
    # y1 rows: h*tb + b (h in 0..27); lanes: 8*w + c (w in 0..27, c in 0..7)
    y1_ref[...] = jnp.maximum(y1_ref[...] + b1t_ref[...], 0.0)

    # ---- pool1 (2x2) -> p1, with explicit zero row-blocks as the H zero-pad
    # for conv2 (the W zero-pad is folded into the stage-2 banded weights).
    p1_ref[0:tb, :] = jnp.zeros((tb, 224), f32)
    p1_ref[15 * tb:16 * tb, :] = jnp.zeros((tb, 224), f32)
    for hp in range(14):
        a = y1_ref[(2 * hp) * tb:(2 * hp + 1) * tb, :]
        b = y1_ref[(2 * hp + 1) * tb:(2 * hp + 2) * tb, :]
        v = jnp.maximum(a, b)                                   # vertical max
        vs = jnp.concatenate([v[:, 8:], v[:, :8]], axis=1)       # shift by 8
        # valid pooled data lives at lanes 16*wp + c (c < 8); the other lanes
        # hold finite junk that the stage-2 weights zero out.
        p1_ref[(hp + 1) * tb:(hp + 2) * tb, :] = jnp.maximum(v, vs)

    # ---- stage 2: conv2 (3x3, 8->16, pad 1) as 3 banded matmuls, + bias + ReLU
    y2_ref[...] = jnp.dot(p1_ref[0 * tb:14 * tb, :], w2b_ref[0],
                          preferred_element_type=f32)
    y2_ref[...] += jnp.dot(p1_ref[1 * tb:15 * tb, :], w2b_ref[1],
                           preferred_element_type=f32)
    y2_ref[...] += jnp.dot(p1_ref[2 * tb:16 * tb, :], w2b_ref[2],
                           preferred_element_type=f32)
    # y2 rows: h2*tb + b (h2 in 0..13); lanes: 16*w2 + c (w2 in 0..13, c in 0..15)
    y2_ref[...] = jnp.maximum(y2_ref[...] + b2t_ref[...], 0.0)

    # ---- pool2 (2x2) fused with the classifier: one (tb,224)@(224,128) matmul
    # per pooled output row, accumulated into the logits.
    acc = None
    for hp in range(7):
        a = y2_ref[(2 * hp) * tb:(2 * hp + 1) * tb, :]
        b = y2_ref[(2 * hp + 1) * tb:(2 * hp + 2) * tb, :]
        v = jnp.maximum(a, b)                                   # vertical max
        vs = jnp.concatenate([v[:, 16:], v[:, :16]], axis=1)     # shift by 16
        m = jnp.maximum(v, vs)       # valid at lanes 32*wp2 + c (c < 16)
        d = jnp.dot(m, wl_ref[hp], preferred_element_type=f32)  # (tb, 128)
        acc = d if acc is None else acc + d
    logits = acc + bl_ref[...]
    logits_ref[...] = logits

    # ---- softmax (exact reciprocal keeps row sums == 1 to ~1e-7) -------------
    mx = jnp.max(logits, axis=-1, keepdims=True)
    e = jnp.exp(logits - mx)                  # padded classes -> exp(-1e30) = 0
    s = jnp.sum(e, axis=-1, keepdims=True)
    probas_ref[...] = e / s


# ----------------------------------------------------------------------------
# Parameters: deterministic Xavier-uniform / zero-bias init (torch layouts) and
# a ONE-TIME host-side repack into the banded, lane-dense kernel layouts.
# ----------------------------------------------------------------------------

def _xavier_uniform(key, shape, fan_in, fan_out):
    a = (6.0 / (fan_in + fan_out)) ** 0.5
    return jax.random.uniform(key, shape, jnp.float32, -a, a)


def init_convnet_params(num_classes, seed=0):
    k1, k2, k3 = jax.random.split(jax.random.PRNGKey(seed), 3)
    return {
        # Conv2d(1 -> 8, 3x3), torch layout (Cout, Cin, KH, KW)
        "conv1_w": _xavier_uniform(k1, (8, 1, 3, 3), 1 * 9, 8 * 9),
        "conv1_b": jnp.zeros((8,), jnp.float32),
        # Conv2d(8 -> 16, 3x3)
        "conv2_w": _xavier_uniform(k2, (16, 8, 3, 3), 8 * 9, 16 * 9),
        "conv2_b": jnp.zeros((16,), jnp.float32),
        # Linear(49*16 -> num_classes) stored as (in, out); rows in torch NCHW
        # flatten order (c, h, w).
        "lin_w": _xavier_uniform(k3, (49 * 16, num_classes), 49 * 16, num_classes),
        "lin_b": jnp.zeros((num_classes,), jnp.float32),
    }


def prepare_kernel_params(params, num_classes):
    """One-time repack of torch-layout params into banded kernel weights."""
    assert num_classes <= 128
    w1 = np.asarray(params["conv1_w"], np.float32)   # (8,1,3,3)
    b1 = np.asarray(params["conv1_b"], np.float32)
    w2 = np.asarray(params["conv2_w"], np.float32)   # (16,8,3,3)
    b2 = np.asarray(params["conv2_b"], np.float32)
    lw = np.asarray(params["lin_w"], np.float32)     # (784, nc)
    lb = np.asarray(params["lin_b"], np.float32)
    nc = num_classes

    # stage-1 banded weights: rows = padded input col wi (0..29),
    # cols = 8*w_out + cout.  One matrix per kernel row dy.
    w1b = np.zeros((3, 30, 224), np.float32)
    for dy in range(3):
        for w in range(28):
            for dx in range(3):
                w1b[dy, w + dx, 8 * w:8 * w + 8] = w1[:, 0, dy, dx]
    b1t = np.tile(b1, 28).reshape(1, 224)

    # stage-2 banded weights: rows = input lane 16*wp_in + cin (cin < 8; the
    # "junk" half-lanes left by pool1 get zero rows), cols = 16*w_out + cout.
    w2b = np.zeros((3, 224, 224), np.float32)
    for dy in range(3):
        for wo in range(14):
            for dx in range(3):
                wi = wo + dx - 1
                if 0 <= wi < 14:
                    w2b[dy, 16 * wi:16 * wi + 8, 16 * wo:16 * wo + 16] = \
                        w2[:, :, dy, dx].T
    b2t = np.tile(b2, 14).reshape(1, 224)

    # classifier weights, one (224, 128) slab per pooled row h: rows = lane
    # 32*w + cout of the pooled stage-2 activations (junk lanes -> zero rows),
    # cols = class, padded to 128 lanes (zero weights, -1e30 bias).
    wlk = np.zeros((7, 224, 128), np.float32)
    for h in range(7):
        for w in range(7):
            for co in range(16):
                wlk[h, 32 * w + co, :nc] = lw[co * 49 + h * 7 + w, :]
    blk = np.full((1, 128), _NEG_BIG, np.float32)
    blk[0, :nc] = lb

    out = dict(w1b=w1b, b1t=b1t, w2b=w2b, b2t=b2t, wl=wlk, bl=blk)
    return {k: jnp.asarray(v) for k, v in out.items()}


# ----------------------------------------------------------------------------
# Forward pass
# ----------------------------------------------------------------------------

def _round_up(n, m):
    return ((n + m - 1) // m) * m


@functools.partial(jax.jit, static_argnames=("num_classes", "tile_b"))
def convnet_forward(kparams, x_nchw, *, num_classes, tile_b=64):
    """x_nchw: (B, 1, 28, 28) float32 -> (logits, probas), each (B, num_classes)."""
    assert x_nchw.shape[1:] == (1, 28, 28)
    assert tile_b % 8 == 0
    B = x_nchw.shape[0]
    tb = min(tile_b, _round_up(B, 8))
    Bp = _round_up(B, tb)

    # Layout-only glue in XLA: squeeze C=1, 1-px spatial zero pad, batch pad,
    # transpose to (h_pad, b, w_pad) so in-kernel rows are h*tb + b.
    x = x_nchw.reshape(B, 28, 28).astype(jnp.float32)
    x = jnp.pad(x, ((0, Bp - B), (1, 1), (1, 1)))     # (Bp, 30, 30)
    xt = jnp.transpose(x, (1, 0, 2))                  # (30, Bp, 30)

    grid = (Bp // tb,)
    logits_p, probas_p = pl.pallas_call(
        _convnet_kernel,
        out_shape=(jax.ShapeDtypeStruct((Bp, 128), jnp.float32),
                   jax.ShapeDtypeStruct((Bp, 128), jnp.float32)),
        grid_spec=pltpu.PrefetchScalarGridSpec(
            num_scalar_prefetch=0,
            grid=grid,
            in_specs=[
                # padded input, tiled over batch (squeezed C dim)
                pl.BlockSpec((30, tb, 30), lambda i: (0, i, 0)),
                # weights: constant index maps -> resident in VMEM
                pl.BlockSpec((3, 30, 224), lambda i: (0, 0, 0)),
                pl.BlockSpec((1, 224), lambda i: (0, 0)),
                pl.BlockSpec((3, 224, 224), lambda i: (0, 0, 0)),
                pl.BlockSpec((1, 224), lambda i: (0, 0)),
                pl.BlockSpec((7, 224, 128), lambda i: (0, 0, 0)),
                pl.BlockSpec((1, 128), lambda i: (0, 0)),
            ],
            out_specs=(pl.BlockSpec((tb, 128), lambda i: (i, 0)),
                       pl.BlockSpec((tb, 128), lambda i: (i, 0))),
            scratch_shapes=[
                pltpu.VMEM((28 * tb, 224), jnp.float32),   # conv1+ReLU output
                pltpu.VMEM((16 * tb, 224), jnp.float32),   # pooled + H-padded
                pltpu.VMEM((14 * tb, 224), jnp.float32),   # conv2+ReLU output
            ],
        ),
        compiler_params=pltpu.CompilerParams(
            dimension_semantics=("parallel",),
            vmem_limit_bytes=32 * 1024 * 1024,
        ),
    )(xt, kparams["w1b"], kparams["b1t"], kparams["w2b"], kparams["b2t"],
      kparams["wl"], kparams["bl"])

    return logits_p[:B, :num_classes], probas_p[:B, :num_classes]


# ----------------------------------------------------------------------------
# Pure-JAX reference (for the correctness check)
# ----------------------------------------------------------------------------

def _reference_forward(params, x_nchw):
    hi = jax.lax.Precision.HIGHEST

    def conv(x, w, b):
        y = jax.lax.conv_general_dilated(
            x, w, (1, 1), ((1, 1), (1, 1)),
            dimension_numbers=("NCHW", "OIHW", "NCHW"), precision=hi)
        return y + b[None, :, None, None]

    def pool(x):
        return jax.lax.reduce_window(x, -jnp.inf, jax.lax.max,
                                     (1, 1, 2, 2), (1, 1, 2, 2), "VALID")

    h = pool(jax.nn.relu(conv(x_nchw, params["conv1_w"], params["conv1_b"])))
    h = pool(jax.nn.relu(conv(h, params["conv2_w"], params["conv2_b"])))
    feats = h.reshape(h.shape[0], -1)                  # NCHW flatten (c, h, w)
    logits = jnp.dot(feats, params["lin_w"], precision=hi) + params["lin_b"]
    return logits, jax.nn.softmax(logits, axis=-1)


if __name__ == "__main__":
    num_classes = 10
    batch = 2

    key = jax.random.PRNGKey(0)
    x = jax.random.normal(key, (batch, 1, 28, 28), jnp.float32)

    params = init_convnet_params(num_classes, seed=0)
    kparams = prepare_kernel_params(params, num_classes)   # one-time repack

    logits, probas = convnet_forward(kparams, x, num_classes=num_classes)
    logits, probas = jax.block_until_ready((logits, probas))

    assert logits.shape == (batch, num_classes)
    assert probas.shape == (batch, num_classes)

    ref_logits, ref_probas = _reference_forward(params, x)
    assert float(jnp.max(jnp.abs(logits - ref_logits))) < 3e-2
    assert float(jnp.max(jnp.abs(probas - ref_probas))) < 3e-2
    assert bool(jnp.all(jnp.abs(jnp.sum(probas, axis=1) - 1.0) < 1e-5))

    print("KERNEL_OK")
</pallas_src>

<mosaic_0001>
module attributes {stable_mosaic.version = 11 : i64} {
  func.func @_convnet_kernel(%arg0: i32, %arg1: memref<30x8x30xf32, #tpu.memory_space<vmem>>, %arg2: memref<3x30x224xf32, #tpu.memory_space<vmem>>, %arg3: memref<1x224xf32, #tpu.memory_space<vmem>>, %arg4: memref<3x224x224xf32, #tpu.memory_space<vmem>>, %arg5: memref<1x224xf32, #tpu.memory_space<vmem>>, %arg6: memref<7x224x128xf32, #tpu.memory_space<vmem>>, %arg7: memref<1x128xf32, #tpu.memory_space<vmem>>, %arg8: memref<8x128xf32, #tpu.memory_space<vmem>>, %arg9: memref<8x128xf32, #tpu.memory_space<vmem>>, %arg10: memref<224x224xf32, #tpu.memory_space<vmem>>, %arg11: memref<128x224xf32, #tpu.memory_space<vmem>>, %arg12: memref<112x224xf32, #tpu.memory_space<vmem>>) attributes {dimension_semantics = [#tpu.dimension_semantics<parallel>], iteration_bounds = array<i64: 1>, scalar_prefetch = 0 : i64, scratch_operands = 3 : i64, tpu.core_type = #tpu.core_type<tc>, window_params = [{transform_indices = @transform_0, window_bounds = array<i64: 30, 8, 30>}, {pipeline_mode = #tpu.pipeline_mode<synchronous>, transform_indices = @transform_1, window_bounds = array<i64: 3, 30, 224>}, {pipeline_mode = #tpu.pipeline_mode<synchronous>, transform_indices = @transform_2, window_bounds = array<i64: 1, 224>}, {pipeline_mode = #tpu.pipeline_mode<synchronous>, transform_indices = @transform_3, window_bounds = array<i64: 3, 224, 224>}, {pipeline_mode = #tpu.pipeline_mode<synchronous>, transform_indices = @transform_4, window_bounds = array<i64: 1, 224>}, {pipeline_mode = #tpu.pipeline_mode<synchronous>, transform_indices = @transform_5, window_bounds = array<i64: 7, 224, 128>}, {pipeline_mode = #tpu.pipeline_mode<synchronous>, transform_indices = @transform_6, window_bounds = array<i64: 1, 128>}, {transform_indices = @transform_7, window_bounds = array<i64: 8, 128>}, {transform_indices = @transform_8, window_bounds = array<i64: 8, 128>}]} {
    %c0 = arith.constant 0 : index
    %c0_0 = arith.constant 0 : index
    %c0_1 = arith.constant 0 : index
    %0 = vector.load %arg1[%c0, %c0_0, %c0_1] : memref<30x8x30xf32, #tpu.memory_space<vmem>>, vector<30x8x30xf32>
    %1 = vector.shape_cast %0 : vector<30x8x30xf32> to vector<240x30xf32>
    %2 = vector.extract_strided_slice %1 {offsets = [0, 0], sizes = [224, 30], strides = [1, 1]} : vector<240x30xf32> to vector<224x30xf32>
    %c0_2 = arith.constant 0 : index
    %c0_3 = arith.constant 0 : index
    %c0_4 = arith.constant 0 : index
    %3 = vector.load %arg2[%c0_2, %c0_3, %c0_4] : memref<3x30x224xf32, #tpu.memory_space<vmem>>, vector<1x30x224xf32>
    %4 = vector.shape_cast %3 : vector<1x30x224xf32> to vector<30x224xf32>
    %cst = arith.constant dense<0.000000e+00> : vector<224x224xf32>
    %5 = tpu.matmul %2, %4, %cst {dimension_numbers = #tpu.dot_dimension_numbers<[1], [0], [0], [1], [0, 0, 1, 1], [], []>} : vector<224x30xf32>, vector<30x224xf32>, vector<224x224xf32> -> vector<224x224xf32>
    %c0_5 = arith.constant 0 : index
    %c0_6 = arith.constant 0 : index
    %6 = vector.load %arg10[%c0_5, %c0_6] : memref<224x224xf32, #tpu.memory_space<vmem>>, vector<224x224xf32>
    tpu.vector_store %arg10[%c0_5, %c0_6], %5 {strides = array<i32>} : memref<224x224xf32, #tpu.memory_space<vmem>>, vector<224x224xf32>,
    %c0_7 = arith.constant 0 : index
    %c0_8 = arith.constant 0 : index
    %7 = vector.load %arg10[%c0_7, %c0_8] : memref<224x224xf32, #tpu.memory_space<vmem>>, vector<224x224xf32>
    %8 = vector.extract_strided_slice %1 {offsets = [8, 0], sizes = [224, 30], strides = [1, 1]} : vector<240x30xf32> to vector<224x30xf32>
    %c1 = arith.constant 1 : index
    %c0_9 = arith.constant 0 : index
    %c0_10 = arith.constant 0 : index
    %9 = vector.load %arg2[%c1, %c0_9, %c0_10] : memref<3x30x224xf32, #tpu.memory_space<vmem>>, vector<1x30x224xf32>
    %10 = vector.shape_cast %9 : vector<1x30x224xf32> to vector<30x224xf32>
    %cst_11 = arith.constant dense<0.000000e+00> : vector<224x224xf32>
    %11 = tpu.matmul %8, %10, %cst_11 {dimension_numbers = #tpu.dot_dimension_numbers<[1], [0], [0], [1], [0, 0, 1, 1], [], []>} : vector<224x30xf32>, vector<30x224xf32>, vector<224x224xf32> -> vector<224x224xf32>
    %12 = arith.addf %7, %11 : vector<224x224xf32>
    %c0_12 = arith.constant 0 : index
    %c0_13 = arith.constant 0 : index
    %13 = vector.load %arg10[%c0_12, %c0_13] : memref<224x224xf32, #tpu.memory_space<vmem>>, vector<224x224xf32>
    tpu.vector_store %arg10[%c0_12, %c0_13], %12 {strides = array<i32>} : memref<224x224xf32, #tpu.memory_space<vmem>>, vector<224x224xf32>,
    %c0_14 = arith.constant 0 : index
    %c0_15 = arith.constant 0 : index
    %14 = vector.load %arg10[%c0_14, %c0_15] : memref<224x224xf32, #tpu.memory_space<vmem>>, vector<224x224xf32>
    %15 = vector.extract_strided_slice %1 {offsets = [16, 0], sizes = [224, 30], strides = [1, 1]} : vector<240x30xf32> to vector<224x30xf32>
    %c2 = arith.constant 2 : index
    %c0_16 = arith.constant 0 : index
    %c0_17 = arith.constant 0 : index
    %16 = vector.load %arg2[%c2, %c0_16, %c0_17] : memref<3x30x224xf32, #tpu.memory_space<vmem>>, vector<1x30x224xf32>
    %17 = vector.shape_cast %16 : vector<1x30x224xf32> to vector<30x224xf32>
    %cst_18 = arith.constant dense<0.000000e+00> : vector<224x224xf32>
    %18 = tpu.matmul %15, %17, %cst_18 {dimension_numbers = #tpu.dot_dimension_numbers<[1], [0], [0], [1], [0, 0, 1, 1], [], []>} : vector<224x30xf32>, vector<30x224xf32>, vector<224x224xf32> -> vector<224x224xf32>
    %19 = arith.addf %14, %18 : vector<224x224xf32>
    %c0_19 = arith.constant 0 : index
    %c0_20 = arith.constant 0 : index
    %20 = vector.load %arg10[%c0_19, %c0_20] : memref<224x224xf32, #tpu.memory_space<vmem>>, vector<224x224xf32>
    tpu.vector_store %arg10[%c0_19, %c0_20], %19 {strides = array<i32>} : memref<224x224xf32, #tpu.memory_space<vmem>>, vector<224x224xf32>,
    %c0_21 = arith.constant 0 : index
    %c0_22 = arith.constant 0 : index
    %21 = vector.load %arg10[%c0_21, %c0_22] : memref<224x224xf32, #tpu.memory_space<vmem>>, vector<224x224xf32>
    %c0_23 = arith.constant 0 : index
    %c0_24 = arith.constant 0 : index
    %22 = vector.load %arg3[%c0_23, %c0_24] : memref<1x224xf32, #tpu.memory_space<vmem>>, vector<1x224xf32>
    %23 = vector.broadcast %22 : vector<1x224xf32> to vector<224x224xf32>
    %24 = arith.addf %21, %23 : vector<224x224xf32>
    %cst_25 = arith.constant 0.000000e+00 : f32
    %25 = vector.broadcast %cst_25 : f32 to vector<224x224xf32>
    %26 = arith.maximumf %24, %25 : vector<224x224xf32>
    %c0_26 = arith.constant 0 : index
    %c0_27 = arith.constant 0 : index
    %27 = vector.load %arg10[%c0_26, %c0_27] : memref<224x224xf32, #tpu.memory_space<vmem>>, vector<224x224xf32>
    tpu.vector_store %arg10[%c0_26, %c0_27], %26 {strides = array<i32>} : memref<224x224xf32, #tpu.memory_space<vmem>>, vector<224x224xf32>,
    %cst_28 = arith.constant 0.000000e+00 : f32
    %28 = vector.broadcast %cst_28 : f32 to vector<8x224xf32>
    %c0_29 = arith.constant 0 : index
    %c0_30 = arith.constant 0 : index
    %29 = vector.load %arg11[%c0_29, %c0_30] : memref<128x224xf32, #tpu.memory_space<vmem>>, vector<8x224xf32>
    tpu.vector_store %arg11[%c0_29, %c0_30], %28 {strides = array<i32>} : memref<128x224xf32, #tpu.memory_space<vmem>>, vector<8x224xf32>,
    %cst_31 = arith.constant 0.000000e+00 : f32
    %30 = vector.broadcast %cst_31 : f32 to vector<8x224xf32>
    %c120 = arith.constant 120 : index
    %c0_32 = arith.constant 0 : index
    %31 = vector.load %arg11[%c120, %c0_32] : memref<128x224xf32, #tpu.memory_space<vmem>>, vector<8x224xf32>
    tpu.vector_store %arg11[%c120, %c0_32], %30 {strides = array<i32>} : memref<128x224xf32, #tpu.memory_space<vmem>>, vector<8x224xf32>,
    %c0_33 = arith.constant 0 : index
    %c0_34 = arith.constant 0 : index
    %32 = vector.load %arg10[%c0_33, %c0_34] : memref<224x224xf32, #tpu.memory_space<vmem>>, vector<8x224xf32>
    %c8 = arith.constant 8 : index
    %c0_35 = arith.constant 0 : index
    %33 = vector.load %arg10[%c8, %c0_35] : memref<224x224xf32, #tpu.memory_space<vmem>>, vector<8x224xf32>
    %34 = arith.maximumf %32, %33 : vector<8x224xf32>
    %35 = vector.extract_strided_slice %34 {offsets = [0, 8], sizes = [8, 216], strides = [1, 1]} : vector<8x224xf32> to vector<8x216xf32>
    %36 = vector.extract_strided_slice %34 {offsets = [0, 0], sizes = [8, 8], strides = [1, 1]} : vector<8x224xf32> to vector<8x8xf32>
    %37 = tpu.concatenate %35, %36 in 1 : vector<8x216xf32>, vector<8x8xf32> -> vector<8x224xf32>
    %38 = arith.maximumf %34, %37 : vector<8x224xf32>
    %c8_36 = arith.constant 8 : index
    %c0_37 = arith.constant 0 : index
    %39 = vector.load %arg11[%c8_36, %c0_37] : memref<128x224xf32, #tpu.memory_space<vmem>>, vector<8x224xf32>
    tpu.vector_store %arg11[%c8_36, %c0_37], %38 {strides = array<i32>} : memref<128x224xf32, #tpu.memory_space<vmem>>, vector<8x224xf32>,
    %c16 = arith.constant 16 : index
    %c0_38 = arith.constant 0 : index
    %40 = vector.load %arg10[%c16, %c0_38] : memref<224x224xf32, #tpu.memory_space<vmem>>, vector<8x224xf32>
    %c24 = arith.constant 24 : index
    %c0_39 = arith.constant 0 : index
    %41 = vector.load %arg10[%c24, %c0_39] : memref<224x224xf32, #tpu.memory_space<vmem>>, vector<8x224xf32>
    %42 = arith.maximumf %40, %41 : vector<8x224xf32>
    %43 = vector.extract_strided_slice %42 {offsets = [0, 8], sizes = [8, 216], strides = [1, 1]} : vector<8x224xf32> to vector<8x216xf32>
    %44 = vector.extract_strided_slice %42 {offsets = [0, 0], sizes = [8, 8], strides = [1, 1]} : vector<8x224xf32> to vector<8x8xf32>
    %45 = tpu.concatenate %43, %44 in 1 : vector<8x216xf32>, vector<8x8xf32> -> vector<8x224xf32>
    %46 = arith.maximumf %42, %45 : vector<8x224xf32>
    %c16_40 = arith.constant 16 : index
    %c0_41 = arith.constant 0 : index
    %47 = vector.load %arg11[%c16_40, %c0_41] : memref<128x224xf32, #tpu.memory_space<vmem>>, vector<8x224xf32>
    tpu.vector_store %arg11[%c16_40, %c0_41], %46 {strides = array<i32>} : memref<128x224xf32, #tpu.memory_space<vmem>>, vector<8x224xf32>,
    %c32 = arith.constant 32 : index
    %c0_42 = arith.constant 0 : index
    %48 = vector.load %arg10[%c32, %c0_42] : memref<224x224xf32, #tpu.memory_space<vmem>>, vector<8x224xf32>
    %c40 = arith.constant 40 : index
    %c0_43 = arith.constant 0 : index
    %49 = vector.load %arg10[%c40, %c0_43] : memref<224x224xf32, #tpu.memory_space<vmem>>, vector<8x224xf32>
    %50 = arith.maximumf %48, %49 : vector<8x224xf32>
    %51 = vector.extract_strided_slice %50 {offsets = [0, 8], sizes = [8, 216], strides = [1, 1]} : vector<8x224xf32> to vector<8x216xf32>
    %52 = vector.extract_strided_slice %50 {offsets = [0, 0], sizes = [8, 8], strides = [1, 1]} : vector<8x224xf32> to vector<8x8xf32>
    %53 = tpu.concatenate %51, %52 in 1 : vector<8x216xf32>, vector<8x8xf32> -> vector<8x224xf32>
    %54 = arith.maximumf %50, %53 : vector<8x224xf32>
    %c24_44 = arith.constant 24 : index
    %c0_45 = arith.constant 0 : index
    %55 = vector.load %arg11[%c24_44, %c0_45] : memref<128x224xf32, #tpu.memory_space<vmem>>, vector<8x224xf32>
    tpu.vector_store %arg11[%c24_44, %c0_45], %54 {strides = array<i32>} : memref<128x224xf32, #tpu.memory_space<vmem>>, vector<8x224xf32>,
    %c48 = arith.constant 48 : index
    %c0_46 = arith.constant 0 : index
    %56 = vector.load %arg10[%c48, %c0_46] : memref<224x224xf32, #tpu.memory_space<vmem>>, vector<8x224xf32>
    %c56 = arith.constant 56 : index
    %c0_47 = arith.constant 0 : index
    %57 = vector.load %arg10[%c56, %c0_47] : memref<224x224xf32, #tpu.memory_space<vmem>>, vector<8x224xf32>
    %58 = arith.maximumf %56, %57 : vector<8x224xf32>
    %59 = vector.extract_strided_slice %58 {offsets = [0, 8], sizes = [8, 216], strides = [1, 1]} : vector<8x224xf32> to vector<8x216xf32>
    %60 = vector.extract_strided_slice %58 {offsets = [0, 0], sizes = [8, 8], strides = [1, 1]} : vector<8x224xf32> to vector<8x8xf32>
    %61 = tpu.concatenate %59, %60 in 1 : vector<8x216xf32>, vector<8x8xf32> -> vector<8x224xf32>
    %62 = arith.maximumf %58, %61 : vector<8x224xf32>
    %c32_48 = arith.constant 32 : index
    %c0_49 = arith.constant 0 : index
    %63 = vector.load %arg11[%c32_48, %c0_49] : memref<128x224xf32, #tpu.memory_space<vmem>>, vector<8x224xf32>
    tpu.vector_store %arg11[%c32_48, %c0_49], %62 {strides = array<i32>} : memref<128x224xf32, #tpu.memory_space<vmem>>, vector<8x224xf32>,
    %c64 = arith.constant 64 : index
    %c0_50 = arith.constant 0 : index
    %64 = vector.load %arg10[%c64, %c0_50] : memref<224x224xf32, #tpu.memory_space<vmem>>, vector<8x224xf32>
    %c72 = arith.constant 72 : index
    %c0_51 = arith.constant 0 : index
    %65 = vector.load %arg10[%c72, %c0_51] : memref<224x224xf32, #tpu.memory_space<vmem>>, vector<8x224xf32>
    %66 = arith.maximumf %64, %65 : vector<8x224xf32>
    %67 = vector.extract_strided_slice %66 {offsets = [0, 8], sizes = [8, 216], strides = [1, 1]} : vector<8x224xf32> to vector<8x216xf32>
    %68 = vector.extract_strided_slice %66 {offsets = [0, 0], sizes = [8, 8], strides = [1, 1]} : vector<8x224xf32> to vector<8x8xf32>
    %69 = tpu.concatenate %67, %68 in 1 : vector<8x216xf32>, vector<8x8xf32> -> vector<8x224xf32>
    %70 = arith.maximumf %66, %69 : vector<8x224xf32>
    %c40_52 = arith.constant 40 : index
    %c0_53 = arith.constant 0 : index
    %71 = vector.load %arg11[%c40_52, %c0_53] : memref<128x224xf32, #tpu.memory_space<vmem>>, vector<8x224xf32>
    tpu.vector_store %arg11[%c40_52, %c0_53], %70 {strides = array<i32>} : memref<128x224xf32, #tpu.memory_space<vmem>>, vector<8x224xf32>,
    %c80 = arith.constant 80 : index
    %c0_54 = arith.constant 0 : index
    %72 = vector.load %arg10[%c80, %c0_54] : memref<224x224xf32, #tpu.memory_space<vmem>>, vector<8x224xf32>
    %c88 = arith.constant 88 : index
    %c0_55 = arith.constant 0 : index
    %73 = vector.load %arg10[%c88, %c0_55] : memref<224x224xf32, #tpu.memory_space<vmem>>, vector<8x224xf32>
    %74 = arith.maximumf %72, %73 : vector<8x224xf32>
    %75 = vector.extract_strided_slice %74 {offsets = [0, 8], sizes = [8, 216], strides = [1, 1]} : vector<8x224xf32> to vector<8x216xf32>
    %76 = vector.extract_strided_slice %74 {offsets = [0, 0], sizes = [8, 8], strides = [1, 1]} : vector<8x224xf32> to vector<8x8xf32>
    %77 = tpu.concatenate %75, %76 in 1 : vector<8x216xf32>, vector<8x8xf32> -> vector<8x224xf32>
    %78 = arith.maximumf %74, %77 : vector<8x224xf32>
    %c48_56 = arith.constant 48 : index
    %c0_57 = arith.constant 0 : index
    %79 = vector.load %arg11[%c48_56, %c0_57] : memref<128x224xf32, #tpu.memory_space<vmem>>, vector<8x224xf32>
    tpu.vector_store %arg11[%c48_56, %c0_57], %78 {strides = array<i32>} : memref<128x224xf32, #tpu.memory_space<vmem>>, vector<8x224xf32>,
    %c96 = arith.constant 96 : index
    %c0_58 = arith.constant 0 : index
    %80 = vector.load %arg10[%c96, %c0_58] : memref<224x224xf32, #tpu.memory_space<vmem>>, vector<8x224xf32>
    %c104 = arith.constant 104 : index
    %c0_59 = arith.constant 0 : index
    %81 = vector.load %arg10[%c104, %c0_59] : memref<224x224xf32, #tpu.memory_space<vmem>>, vector<8x224xf32>
    %82 = arith.maximumf %80, %81 : vector<8x224xf32>
    %83 = vector.extract_strided_slice %82 {offsets = [0, 8], sizes = [8, 216], strides = [1, 1]} : vector<8x224xf32> to vector<8x216xf32>
    %84 = vector.extract_strided_slice %82 {offsets = [0, 0], sizes = [8, 8], strides = [1, 1]} : vector<8x224xf32> to vector<8x8xf32>
    %85 = tpu.concatenate %83, %84 in 1 : vector<8x216xf32>, vector<8x8xf32> -> vector<8x224xf32>
    %86 = arith.maximumf %82, %85 : vector<8x224xf32>
    %c56_60 = arith.constant 56 : index
    %c0_61 = arith.constant 0 : index
    %87 = vector.load %arg11[%c56_60, %c0_61] : memref<128x224xf32, #tpu.memory_space<vmem>>, vector<8x224xf32>
    tpu.vector_store %arg11[%c56_60, %c0_61], %86 {strides = array<i32>} : memref<128x224xf32, #tpu.memory_space<vmem>>, vector<8x224xf32>,
    %c112 = arith.constant 112 : index
    %c0_62 = arith.constant 0 : index
    %88 = vector.load %arg10[%c112, %c0_62] : memref<224x224xf32, #tpu.memory_space<vmem>>, vector<8x224xf32>
    %c120_63 = arith.constant 120 : index
    %c0_64 = arith.constant 0 : index
    %89 = vector.load %arg10[%c120_63, %c0_64] : memref<224x224xf32, #tpu.memory_space<vmem>>, vector<8x224xf32>
    %90 = arith.maximumf %88, %89 : vector<8x224xf32>
    %91 = vector.extract_strided_slice %90 {offsets = [0, 8], sizes = [8, 216], strides = [1, 1]} : vector<8x224xf32> to vector<8x216xf32>
    %92 = vector.extract_strided_slice %90 {offsets = [0, 0], sizes = [8, 8], strides = [1, 1]} : vector<8x224xf32> to vector<8x8xf32>
    %93 = tpu.concatenate %91, %92 in 1 : vector<8x216xf32>, vector<8x8xf32> -> vector<8x224xf32>
    %94 = arith.maximumf %90, %93 : vector<8x224xf32>
    %c64_65 = arith.constant 64 : index
    %c0_66 = arith.constant 0 : index
    %95 = vector.load %arg11[%c64_65, %c0_66] : memref<128x224xf32, #tpu.memory_space<vmem>>, vector<8x224xf32>
    tpu.vector_store %arg11[%c64_65, %c0_66], %94 {strides = array<i32>} : memref<128x224xf32, #tpu.memory_space<vmem>>, vector<8x224xf32>,
    %c128 = arith.constant 128 : index
    %c0_67 = arith.constant 0 : index
    %96 = vector.load %arg10[%c128, %c0_67] : memref<224x224xf32, #tpu.memory_space<vmem>>, vector<8x224xf32>
    %c136 = arith.constant 136 : index
    %c0_68 = arith.constant 0 : index
    %97 = vector.load %arg10[%c136, %c0_68] : memref<224x224xf32, #tpu.memory_space<vmem>>, vector<8x224xf32>
    %98 = arith.maximumf %96, %97 : vector<8x224xf32>
    %99 = vector.extract_strided_slice %98 {offsets = [0, 8], sizes = [8, 216], strides = [1, 1]} : vector<8x224xf32> to vector<8x216xf32>
    %100 = vector.extract_strided_slice %98 {offsets = [0, 0], sizes = [8, 8], strides = [1, 1]} : vector<8x224xf32> to vector<8x8xf32>
    %101 = tpu.concatenate %99, %100 in 1 : vector<8x216xf32>, vector<8x8xf32> -> vector<8x224xf32>
    %102 = arith.maximumf %98, %101 : vector<8x224xf32>
    %c72_69 = arith.constant 72 : index
    %c0_70 = arith.constant 0 : index
    %103 = vector.load %arg11[%c72_69, %c0_70] : memref<128x224xf32, #tpu.memory_space<vmem>>, vector<8x224xf32>
    tpu.vector_store %arg11[%c72_69, %c0_70], %102 {strides = array<i32>} : memref<128x224xf32, #tpu.memory_space<vmem>>, vector<8x224xf32>,
    %c144 = arith.constant 144 : index
    %c0_71 = arith.constant 0 : index
    %104 = vector.load %arg10[%c144, %c0_71] : memref<224x224xf32, #tpu.memory_space<vmem>>, vector<8x224xf32>
    %c152 = arith.constant 152 : index
    %c0_72 = arith.constant 0 : index
    %105 = vector.load %arg10[%c152, %c0_72] : memref<224x224xf32, #tpu.memory_space<vmem>>, vector<8x224xf32>
    %106 = arith.maximumf %104, %105 : vector<8x224xf32>
    %107 = vector.extract_strided_slice %106 {offsets = [0, 8], sizes = [8, 216], strides = [1, 1]} : vector<8x224xf32> to vector<8x216xf32>
    %108 = vector.extract_strided_slice %106 {offsets = [0, 0], sizes = [8, 8], strides = [1, 1]} : vector<8x224xf32> to vector<8x8xf32>
    %109 = tpu.concatenate %107, %108 in 1 : vector<8x216xf32>, vector<8x8xf32> -> vector<8x224xf32>
    %110 = arith.maximumf %106, %109 : vector<8x224xf32>
    %c80_73 = arith.constant 80 : index
    %c0_74 = arith.constant 0 : index
    %111 = vector.load %arg11[%c80_73, %c0_74] : memref<128x224xf32, #tpu.memory_space<vmem>>, vector<8x224xf32>
    tpu.vector_store %arg11[%c80_73, %c0_74], %110 {strides = array<i32>} : memref<128x224xf32, #tpu.memory_space<vmem>>, vector<8x224xf32>,
    %c160 = arith.constant 160 : index
    %c0_75 = arith.constant 0 : index
    %112 = vector.load %arg10[%c160, %c0_75] : memref<224x224xf32, #tpu.memory_space<vmem>>, vector<8x224xf32>
    %c168 = arith.constant 168 : index
    %c0_76 = arith.constant 0 : index
    %113 = vector.load %arg10[%c168, %c0_76] : memref<224x224xf32, #tpu.memory_space<vmem>>, vector<8x224xf32>
    %114 = arith.maximumf %112, %113 : vector<8x224xf32>
    %115 = vector.extract_strided_slice %114 {offsets = [0, 8], sizes = [8, 216], strides = [1, 1]} : vector<8x224xf32> to vector<8x216xf32>
    %116 = vector.extract_strided_slice %114 {offsets = [0, 0], sizes = [8, 8], strides = [1, 1]} : vector<8x224xf32> to vector<8x8xf32>
    %117 = tpu.concatenate %115, %116 in 1 : vector<8x216xf32>, vector<8x8xf32> -> vector<8x224xf32>
    %118 = arith.maximumf %114, %117 : vector<8x224xf32>
    %c88_77 = arith.constant 88 : index
    %c0_78 = arith.constant 0 : index
    %119 = vector.load %arg11[%c88_77, %c0_78] : memref<128x224xf32, #tpu.memory_space<vmem>>, vector<8x224xf32>
    tpu.vector_store %arg11[%c88_77, %c0_78], %118 {strides = array<i32>} : memref<128x224xf32, #tpu.memory_space<vmem>>, vector<8x224xf32>,
    %c176 = arith.constant 176 : index
    %c0_79 = arith.constant 0 : index
    %120 = vector.load %arg10[%c176, %c0_79] : memref<224x224xf32, #tpu.memory_space<vmem>>, vector<8x224xf32>
    %c184 = arith.constant 184 : index
    %c0_80 = arith.constant 0 : index
    %121 = vector.load %arg10[%c184, %c0_80] : memref<224x224xf32, #tpu.memory_space<vmem>>, vector<8x224xf32>
    %122 = arith.maximumf %120, %121 : vector<8x224xf32>
    %123 = vector.extract_strided_slice %122 {offsets = [0, 8], sizes = [8, 216], strides = [1, 1]} : vector<8x224xf32> to vector<8x216xf32>
    %124 = vector.extract_strided_slice %122 {offsets = [0, 0], sizes = [8, 8], strides = [1, 1]} : vector<8x224xf32> to vector<8x8xf32>
    %125 = tpu.concatenate %123, %124 in 1 : vector<8x216xf32>, vector<8x8xf32> -> vector<8x224xf32>
    %126 = arith.maximumf %122, %125 : vector<8x224xf32>
    %c96_81 = arith.constant 96 : index
    %c0_82 = arith.constant 0 : index
    %127 = vector.load %arg11[%c96_81, %c0_82] : memref<128x224xf32, #tpu.memory_space<vmem>>, vector<8x224xf32>
    tpu.vector_store %arg11[%c96_81, %c0_82], %126 {strides = array<i32>} : memref<128x224xf32, #tpu.memory_space<vmem>>, vector<8x224xf32>,
    %c192 = arith.constant 192 : index
    %c0_83 = arith.constant 0 : index
    %128 = vector.load %arg10[%c192, %c0_83] : memref<224x224xf32, #tpu.memory_space<vmem>>, vector<8x224xf32>
    %c200 = arith.constant 200 : index
    %c0_84 = arith.constant 0 : index
    %129 = vector.load %arg10[%c200, %c0_84] : memref<224x224xf32, #tpu.memory_space<vmem>>, vector<8x224xf32>
    %130 = arith.maximumf %128, %129 : vector<8x224xf32>
    %131 = vector.extract_strided_slice %130 {offsets = [0, 8], sizes = [8, 216], strides = [1, 1]} : vector<8x224xf32> to vector<8x216xf32>
    %132 = vector.extract_strided_slice %130 {offsets = [0, 0], sizes = [8, 8], strides = [1, 1]} : vector<8x224xf32> to vector<8x8xf32>
    %133 = tpu.concatenate %131, %132 in 1 : vector<8x216xf32>, vector<8x8xf32> -> vector<8x224xf32>
    %134 = arith.maximumf %130, %133 : vector<8x224xf32>
    %c104_85 = arith.constant 104 : index
    %c0_86 = arith.constant 0 : index
    %135 = vector.load %arg11[%c104_85, %c0_86] : memref<128x224xf32, #tpu.memory_space<vmem>>, vector<8x224xf32>
    tpu.vector_store %arg11[%c104_85, %c0_86], %134 {strides = array<i32>} : memref<128x224xf32, #tpu.memory_space<vmem>>, vector<8x224xf32>,
    %c208 = arith.constant 208 : index
    %c0_87 = arith.constant 0 : index
    %136 = vector.load %arg10[%c208, %c0_87] : memref<224x224xf32, #tpu.memory_space<vmem>>, vector<8x224xf32>
    %c216 = arith.constant 216 : index
    %c0_88 = arith.constant 0 : index
    %137 = vector.load %arg10[%c216, %c0_88] : memref<224x224xf32, #tpu.memory_space<vmem>>, vector<8x224xf32>
    %138 = arith.maximumf %136, %137 : vector<8x224xf32>
    %139 = vector.extract_strided_slice %138 {offsets = [0, 8], sizes = [8, 216], strides = [1, 1]} : vector<8x224xf32> to vector<8x216xf32>
    %140 = vector.extract_strided_slice %138 {offsets = [0, 0], sizes = [8, 8], strides = [1, 1]} : vector<8x224xf32> to vector<8x8xf32>
    %141 = tpu.concatenate %139, %140 in 1 : vector<8x216xf32>, vector<8x8xf32> -> vector<8x224xf32>
    %142 = arith.maximumf %138, %141 : vector<8x224xf32>
    %c112_89 = arith.constant 112 : index
    %c0_90 = arith.constant 0 : index
    %143 = vector.load %arg11[%c112_89, %c0_90] : memref<128x224xf32, #tpu.memory_space<vmem>>, vector<8x224xf32>
    tpu.vector_store %arg11[%c112_89, %c0_90], %142 {strides = array<i32>} : memref<128x224xf32, #tpu.memory_space<vmem>>, vector<8x224xf32>,
    %c0_91 = arith.constant 0 : index
    %c0_92 = arith.constant 0 : index
    %144 = vector.load %arg11[%c0_91, %c0_92] : memref<128x224xf32, #tpu.memory_space<vmem>>, vector<112x224xf32>
    %c0_93 = arith.constant 0 : index
    %c0_94 = arith.constant 0 : index
    %c0_95 = arith.constant 0 : index
    %145 = vector.load %arg4[%c0_93, %c0_94, %c0_95] : memref<3x224x224xf32, #tpu.memory_space<vmem>>, vector<1x224x224xf32>
    %146 = vector.shape_cast %145 : vector<1x224x224xf32> to vector<224x224xf32>
    %cst_96 = arith.constant dense<0.000000e+00> : vector<112x224xf32>
    %147 = tpu.matmul %144, %146, %cst_96 {dimension_numbers = #tpu.dot_dimension_numbers<[1], [0], [0], [1], [0, 0, 1, 1], [], []>} : vector<112x224xf32>, vector<224x224xf32>, vector<112x224xf32> -> vector<112x224xf32>
    %c0_97 = arith.constant 0 : index
    %c0_98 = arith.constant 0 : index
    %148 = vector.load %arg12[%c0_97, %c0_98] : memref<112x224xf32, #tpu.memory_space<vmem>>, vector<112x224xf32>
    tpu.vector_store %arg12[%c0_97, %c0_98], %147 {strides = array<i32>} : memref<112x224xf32, #tpu.memory_space<vmem>>, vector<112x224xf32>,
    %c0_99 = arith.constant 0 : index
    %c0_100 = arith.constant 0 : index
    %149 = vector.load %arg12[%c0_99, %c0_100] : memref<112x224xf32, #tpu.memory_space<vmem>>, vector<112x224xf32>
    %c8_101 = arith.constant 8 : index
    %c0_102 = arith.constant 0 : index
    %150 = vector.load %arg11[%c8_101, %c0_102] : memref<128x224xf32, #tpu.memory_space<vmem>>, vector<112x224xf32>
    %c1_103 = arith.constant 1 : index
    %c0_104 = arith.constant 0 : index
    %c0_105 = arith.constant 0 : index
    %151 = vector.load %arg4[%c1_103, %c0_104, %c0_105] : memref<3x224x224xf32, #tpu.memory_space<vmem>>, vector<1x224x224xf32>
    %152 = vector.shape_cast %151 : vector<1x224x224xf32> to vector<224x224xf32>
    %cst_106 = arith.constant dense<0.000000e+00> : vector<112x224xf32>
    %153 = tpu.matmul %150, %152, %cst_106 {dimension_numbers = #tpu.dot_dimension_numbers<[1], [0], [0], [1], [0, 0, 1, 1], [], []>} : vector<112x224xf32>, vector<224x224xf32>, vector<112x224xf32> -> vector<112x224xf32>
    %154 = arith.addf %149, %153 : vector<112x224xf32>
    %c0_107 = arith.constant 0 : index
    %c0_108 = arith.constant 0 : index
    %155 = vector.load %arg12[%c0_107, %c0_108] : memref<112x224xf32, #tpu.memory_space<vmem>>, vector<112x224xf32>
    tpu.vector_store %arg12[%c0_107, %c0_108], %154 {strides = array<i32>} : memref<112x224xf32, #tpu.memory_space<vmem>>, vector<112x224xf32>,
    %c0_109 = arith.constant 0 : index
    %c0_110 = arith.constant 0 : index
    %156 = vector.load %arg12[%c0_109, %c0_110] : memref<112x224xf32, #tpu.memory_space<vmem>>, vector<112x224xf32>
    %c16_111 = arith.constant 16 : index
    %c0_112 = arith.constant 0 : index
    %157 = vector.load %arg11[%c16_111, %c0_112] : memref<128x224xf32, #tpu.memory_space<vmem>>, vector<112x224xf32>
    %c2_113 = arith.constant 2 : index
    %c0_114 = arith.constant 0 : index
    %c0_115 = arith.constant 0 : index
    %158 = vector.load %arg4[%c2_113, %c0_114, %c0_115] : memref<3x224x224xf32, #tpu.memory_space<vmem>>, vector<1x224x224xf32>
    %159 = vector.shape_cast %158 : vector<1x224x224xf32> to vector<224x224xf32>
    %cst_116 = arith.constant dense<0.000000e+00> : vector<112x224xf32>
    %160 = tpu.matmul %157, %159, %cst_116 {dimension_numbers = #tpu.dot_dimension_numbers<[1], [0], [0], [1], [0, 0, 1, 1], [], []>} : vector<112x224xf32>, vector<224x224xf32>, vector<112x224xf32> -> vector<112x224xf32>
    %161 = arith.addf %156, %160 : vector<112x224xf32>
    %c0_117 = arith.constant 0 : index
    %c0_118 = arith.constant 0 : index
    %162 = vector.load %arg12[%c0_117, %c0_118] : memref<112x224xf32, #tpu.memory_space<vmem>>, vector<112x224xf32>
    tpu.vector_store %arg12[%c0_117, %c0_118], %161 {strides = array<i32>} : memref<112x224xf32, #tpu.memory_space<vmem>>, vector<112x224xf32>,
    %c0_119 = arith.constant 0 : index
    %c0_120 = arith.constant 0 : index
    %163 = vector.load %arg12[%c0_119, %c0_120] : memref<112x224xf32, #tpu.memory_space<vmem>>, vector<112x224xf32>
    %c0_121 = arith.constant 0 : index
    %c0_122 = arith.constant 0 : index
    %164 = vector.load %arg5[%c0_121, %c0_122] : memref<1x224xf32, #tpu.memory_space<vmem>>, vector<1x224xf32>
    %165 = vector.broadcast %164 : vector<1x224xf32> to vector<112x224xf32>
    %166 = arith.addf %163, %165 : vector<112x224xf32>
    %cst_123 = arith.constant 0.000000e+00 : f32
    %167 = vector.broadcast %cst_123 : f32 to vector<112x224xf32>
    %168 = arith.maximumf %166, %167 : vector<112x224xf32>
    %c0_124 = arith.constant 0 : index
    %c0_125 = arith.constant 0 : index
    %169 = vector.load %arg12[%c0_124, %c0_125] : memref<112x224xf32, #tpu.memory_space<vmem>>, vector<112x224xf32>
    tpu.vector_store %arg12[%c0_124, %c0_125], %168 {strides = array<i32>} : memref<112x224xf32, #tpu.memory_space<vmem>>, vector<112x224xf32>,
    %c0_126 = arith.constant 0 : index
    %c0_127 = arith.constant 0 : index
    %170 = vector.load %arg12[%c0_126, %c0_127] : memref<112x224xf32, #tpu.memory_space<vmem>>, vector<8x224xf32>
    %c8_128 = arith.constant 8 : index
    %c0_129 = arith.constant 0 : index
    %171 = vector.load %arg12[%c8_128, %c0_129] : memref<112x224xf32, #tpu.memory_space<vmem>>, vector<8x224xf32>
    %172 = arith.maximumf %170, %171 : vector<8x224xf32>
    %173 = vector.extract_strided_slice %172 {offsets = [0, 16], sizes = [8, 208], strides = [1, 1]} : vector<8x224xf32> to vector<8x208xf32>
    %174 = vector.extract_strided_slice %172 {offsets = [0, 0], sizes = [8, 16], strides = [1, 1]} : vector<8x224xf32> to vector<8x16xf32>
    %175 = tpu.concatenate %173, %174 in 1 : vector<8x208xf32>, vector<8x16xf32> -> vector<8x224xf32>
    %176 = arith.maximumf %172, %175 : vector<8x224xf32>
    %c0_130 = arith.constant 0 : index
    %c0_131 = arith.constant 0 : index
    %c0_132 = arith.constant 0 : index
    %177 = vector.load %arg6[%c0_130, %c0_131, %c0_132] : memref<7x224x128xf32, #tpu.memory_space<vmem>>, vector<1x224x128xf32>
    %178 = vector.shape_cast %177 : vector<1x224x128xf32> to vector<224x128xf32>
    %cst_133 = arith.constant dense<0.000000e+00> : vector<8x128xf32>
    %179 = tpu.matmul %176, %178, %cst_133 {dimension_numbers = #tpu.dot_dimension_numbers<[1], [0], [0], [1], [0, 0, 1, 1], [], []>} : vector<8x224xf32>, vector<224x128xf32>, vector<8x128xf32> -> vector<8x128xf32>
    %c16_134 = arith.constant 16 : index
    %c0_135 = arith.constant 0 : index
    %180 = vector.load %arg12[%c16_134, %c0_135] : memref<112x224xf32, #tpu.memory_space<vmem>>, vector<8x224xf32>
    %c24_136 = arith.constant 24 : index
    %c0_137 = arith.constant 0 : index
    %181 = vector.load %arg12[%c24_136, %c0_137] : memref<112x224xf32, #tpu.memory_space<vmem>>, vector<8x224xf32>
    %182 = arith.maximumf %180, %181 : vector<8x224xf32>
    %183 = vector.extract_strided_slice %182 {offsets = [0, 16], sizes = [8, 208], strides = [1, 1]} : vector<8x224xf32> to vector<8x208xf32>
    %184 = vector.extract_strided_slice %182 {offsets = [0, 0], sizes = [8, 16], strides = [1, 1]} : vector<8x224xf32> to vector<8x16xf32>
    %185 = tpu.concatenate %183, %184 in 1 : vector<8x208xf32>, vector<8x16xf32> -> vector<8x224xf32>
    %186 = arith.maximumf %182, %185 : vector<8x224xf32>
    %c1_138 = arith.constant 1 : index
    %c0_139 = arith.constant 0 : index
    %c0_140 = arith.constant 0 : index
    %187 = vector.load %arg6[%c1_138, %c0_139, %c0_140] : memref<7x224x128xf32, #tpu.memory_space<vmem>>, vector<1x224x128xf32>
    %188 = vector.shape_cast %187 : vector<1x224x128xf32> to vector<224x128xf32>
    %cst_141 = arith.constant dense<0.000000e+00> : vector<8x128xf32>
    %189 = tpu.matmul %186, %188, %cst_141 {dimension_numbers = #tpu.dot_dimension_numbers<[1], [0], [0], [1], [0, 0, 1, 1], [], []>} : vector<8x224xf32>, vector<224x128xf32>, vector<8x128xf32> -> vector<8x128xf32>
    %190 = arith.addf %179, %189 : vector<8x128xf32>
    %c32_142 = arith.constant 32 : index
    %c0_143 = arith.constant 0 : index
    %191 = vector.load %arg12[%c32_142, %c0_143] : memref<112x224xf32, #tpu.memory_space<vmem>>, vector<8x224xf32>
    %c40_144 = arith.constant 40 : index
    %c0_145 = arith.constant 0 : index
    %192 = vector.load %arg12[%c40_144, %c0_145] : memref<112x224xf32, #tpu.memory_space<vmem>>, vector<8x224xf32>
    %193 = arith.maximumf %191, %192 : vector<8x224xf32>
    %194 = vector.extract_strided_slice %193 {offsets = [0, 16], sizes = [8, 208], strides = [1, 1]} : vector<8x224xf32> to vector<8x208xf32>
    %195 = vector.extract_strided_slice %193 {offsets = [0, 0], sizes = [8, 16], strides = [1, 1]} : vector<8x224xf32> to vector<8x16xf32>
    %196 = tpu.concatenate %194, %195 in 1 : vector<8x208xf32>, vector<8x16xf32> -> vector<8x224xf32>
    %197 = arith.maximumf %193, %196 : vector<8x224xf32>
    %c2_146 = arith.constant 2 : index
    %c0_147 = arith.constant 0 : index
    %c0_148 = arith.constant 0 : index
    %198 = vector.load %arg6[%c2_146, %c0_147, %c0_148] : memref<7x224x128xf32, #tpu.memory_space<vmem>>, vector<1x224x128xf32>
    %199 = vector.shape_cast %198 : vector<1x224x128xf32> to vector<224x128xf32>
    %cst_149 = arith.constant dense<0.000000e+00> : vector<8x128xf32>
    %200 = tpu.matmul %197, %199, %cst_149 {dimension_numbers = #tpu.dot_dimension_numbers<[1], [0], [0], [1], [0, 0, 1, 1], [], []>} : vector<8x224xf32>, vector<224x128xf32>, vector<8x128xf32> -> vector<8x128xf32>
    %201 = arith.addf %190, %200 : vector<8x128xf32>
    %c48_150 = arith.constant 48 : index
    %c0_151 = arith.constant 0 : index
    %202 = vector.load %arg12[%c48_150, %c0_151] : memref<112x224xf32, #tpu.memory_space<vmem>>, vector<8x224xf32>
    %c56_152 = arith.constant 56 : index
    %c0_153 = arith.constant 0 : index
    %203 = vector.load %arg12[%c56_152, %c0_153] : memref<112x224xf32, #tpu.memory_space<vmem>>, vector<8x224xf32>
    %204 = arith.maximumf %202, %203 : vector<8x224xf32>
    %205 = vector.extract_strided_slice %204 {offsets = [0, 16], sizes = [8, 208], strides = [1, 1]} : vector<8x224xf32> to vector<8x208xf32>
    %206 = vector.extract_strided_slice %204 {offsets = [0, 0], sizes = [8, 16], strides = [1, 1]} : vector<8x224xf32> to vector<8x16xf32>
    %207 = tpu.concatenate %205, %206 in 1 : vector<8x208xf32>, vector<8x16xf32> -> vector<8x224xf32>
    %208 = arith.maximumf %204, %207 : vector<8x224xf32>
    %c3 = arith.constant 3 : index
    %c0_154 = arith.constant 0 : index
    %c0_155 = arith.constant 0 : index
    %209 = vector.load %arg6[%c3, %c0_154, %c0_155] : memref<7x224x128xf32, #tpu.memory_space<vmem>>, vector<1x224x128xf32>
    %210 = vector.shape_cast %209 : vector<1x224x128xf32> to vector<224x128xf32>
    %cst_156 = arith.constant dense<0.000000e+00> : vector<8x128xf32>
    %211 = tpu.matmul %208, %210, %cst_156 {dimension_numbers = #tpu.dot_dimension_numbers<[1], [0], [0], [1], [0, 0, 1, 1], [], []>} : vector<8x224xf32>, vector<224x128xf32>, vector<8x128xf32> -> vector<8x128xf32>
    %212 = arith.addf %201, %211 : vector<8x128xf32>
    %c64_157 = arith.constant 64 : index
    %c0_158 = arith.constant 0 : index
    %213 = vector.load %arg12[%c64_157, %c0_158] : memref<112x224xf32, #tpu.memory_space<vmem>>, vector<8x224xf32>
    %c72_159 = arith.constant 72 : index
    %c0_160 = arith.constant 0 : index
    %214 = vector.load %arg12[%c72_159, %c0_160] : memref<112x224xf32, #tpu.memory_space<vmem>>, vector<8x224xf32>
    %215 = arith.maximumf %213, %214 : vector<8x224xf32>
    %216 = vector.extract_strided_slice %215 {offsets = [0, 16], sizes = [8, 208], strides = [1, 1]} : vector<8x224xf32> to vector<8x208xf32>
    %217 = vector.extract_strided_slice %215 {offsets = [0, 0], sizes = [8, 16], strides = [1, 1]} : vector<8x224xf32> to vector<8x16xf32>
    %218 = tpu.concatenate %216, %217 in 1 : vector<8x208xf32>, vector<8x16xf32> -> vector<8x224xf32>
    %219 = arith.maximumf %215, %218 : vector<8x224xf32>
    %c4 = arith.constant 4 : index
    %c0_161 = arith.constant 0 : index
    %c0_162 = arith.constant 0 : index
    %220 = vector.load %arg6[%c4, %c0_161, %c0_162] : memref<7x224x128xf32, #tpu.memory_space<vmem>>, vector<1x224x128xf32>
    %221 = vector.shape_cast %220 : vector<1x224x128xf32> to vector<224x128xf32>
    %cst_163 = arith.constant dense<0.000000e+00> : vector<8x128xf32>
    %222 = tpu.matmul %219, %221, %cst_163 {dimension_numbers = #tpu.dot_dimension_numbers<[1], [0], [0], [1], [0, 0, 1, 1], [], []>} : vector<8x224xf32>, vector<224x128xf32>, vector<8x128xf32> -> vector<8x128xf32>
    %223 = arith.addf %212, %222 : vector<8x128xf32>
    %c80_164 = arith.constant 80 : index
    %c0_165 = arith.constant 0 : index
    %224 = vector.load %arg12[%c80_164, %c0_165] : memref<112x224xf32, #tpu.memory_space<vmem>>, vector<8x224xf32>
    %c88_166 = arith.constant 88 : index
    %c0_167 = arith.constant 0 : index
    %225 = vector.load %arg12[%c88_166, %c0_167] : memref<112x224xf32, #tpu.memory_space<vmem>>, vector<8x224xf32>
    %226 = arith.maximumf %224, %225 : vector<8x224xf32>
    %227 = vector.extract_strided_slice %226 {offsets = [0, 16], sizes = [8, 208], strides = [1, 1]} : vector<8x224xf32> to vector<8x208xf32>
    %228 = vector.extract_strided_slice %226 {offsets = [0, 0], sizes = [8, 16], strides = [1, 1]} : vector<8x224xf32> to vector<8x16xf32>
    %229 = tpu.concatenate %227, %228 in 1 : vector<8x208xf32>, vector<8x16xf32> -> vector<8x224xf32>
    %230 = arith.maximumf %226, %229 : vector<8x224xf32>
    %c5 = arith.constant 5 : index
    %c0_168 = arith.constant 0 : index
    %c0_169 = arith.constant 0 : index
    %231 = vector.load %arg6[%c5, %c0_168, %c0_169] : memref<7x224x128xf32, #tpu.memory_space<vmem>>, vector<1x224x128xf32>
    %232 = vector.shape_cast %231 : vector<1x224x128xf32> to vector<224x128xf32>
    %cst_170 = arith.constant dense<0.000000e+00> : vector<8x128xf32>
    %233 = tpu.matmul %230, %232, %cst_170 {dimension_numbers = #tpu.dot_dimension_numbers<[1], [0], [0], [1], [0, 0, 1, 1], [], []>} : vector<8x224xf32>, vector<224x128xf32>, vector<8x128xf32> -> vector<8x128xf32>
    %234 = arith.addf %223, %233 : vector<8x128xf32>
    %c96_171 = arith.constant 96 : index
    %c0_172 = arith.constant 0 : index
    %235 = vector.load %arg12[%c96_171, %c0_172] : memref<112x224xf32, #tpu.memory_space<vmem>>, vector<8x224xf32>
    %c104_173 = arith.constant 104 : index
    %c0_174 = arith.constant 0 : index
    %236 = vector.load %arg12[%c104_173, %c0_174] : memref<112x224xf32, #tpu.memory_space<vmem>>, vector<8x224xf32>
    %237 = arith.maximumf %235, %236 : vector<8x224xf32>
    %238 = vector.extract_strided_slice %237 {offsets = [0, 16], sizes = [8, 208], strides = [1, 1]} : vector<8x224xf32> to vector<8x208xf32>
    %239 = vector.extract_strided_slice %237 {offsets = [0, 0], sizes = [8, 16], strides = [1, 1]} : vector<8x224xf32> to vector<8x16xf32>
    %240 = tpu.concatenate %238, %239 in 1 : vector<8x208xf32>, vector<8x16xf32> -> vector<8x224xf32>
    %241 = arith.maximumf %237, %240 : vector<8x224xf32>
    %c6 = arith.constant 6 : index
    %c0_175 = arith.constant 0 : index
    %c0_176 = arith.constant 0 : index
    %242 = vector.load %arg6[%c6, %c0_175, %c0_176] : memref<7x224x128xf32, #tpu.memory_space<vmem>>, vector<1x224x128xf32>
    %243 = vector.shape_cast %242 : vector<1x224x128xf32> to vector<224x128xf32>
    %cst_177 = arith.constant dense<0.000000e+00> : vector<8x128xf32>
    %244 = tpu.matmul %241, %243, %cst_177 {dimension_numbers = #tpu.dot_dimension_numbers<[1], [0], [0], [1], [0, 0, 1, 1], [], []>} : vector<8x224xf32>, vector<224x128xf32>, vector<8x128xf32> -> vector<8x128xf32>
    %245 = arith.addf %234, %244 : vector<8x128xf32>
    %c0_178 = arith.constant 0 : index
    %c0_179 = arith.constant 0 : index
    %246 = vector.load %arg7[%c0_178, %c0_179] : memref<1x128xf32, #tpu.memory_space<vmem>>, vector<1x128xf32>
    %247 = vector.broadcast %246 : vector<1x128xf32> to vector<8x128xf32>
    %248 = arith.addf %245, %247 : vector<8x128xf32>
    %c0_180 = arith.constant 0 : index
    %c0_181 = arith.constant 0 : index
    %249 = vector.load %arg8[%c0_180, %c0_181] : memref<8x128xf32, #tpu.memory_space<vmem>>, vector<8x128xf32>
    tpu.vector_store %arg8[%c0_180, %c0_181], %248 {strides = array<i32>} : memref<8x128xf32, #tpu.memory_space<vmem>>, vector<8x128xf32>,
    %cst_182 = arith.constant dense<0xFF800000> : vector<8xf32>
    %250 = vector.multi_reduction <maximumf>, %248, %cst_182 [1] : vector<8x128xf32> to vector<8xf32>
    %251 = vector.shape_cast %250 : vector<8xf32> to vector<8x1xf32>
    %252 = vector.broadcast %251 : vector<8x1xf32> to vector<8x128xf32>
    %253 = arith.subf %248, %252 : vector<8x128xf32>
    %254 = math.exp %253 : vector<8x128xf32>
    %cst_183 = arith.constant dense<0.000000e+00> : vector<8xf32>
    %255 = vector.multi_reduction <add>, %254, %cst_183 [1] : vector<8x128xf32> to vector<8xf32>
    %256 = vector.shape_cast %255 : vector<8xf32> to vector<8x1xf32>
    %257 = vector.broadcast %256 : vector<8x1xf32> to vector<8x128xf32>
    %258 = arith.divf %254, %257 : vector<8x128xf32>
    %c0_184 = arith.constant 0 : index
    %c0_185 = arith.constant 0 : index
    %259 = vector.load %arg9[%c0_184, %c0_185] : memref<8x128xf32, #tpu.memory_space<vmem>>, vector<8x128xf32>
    tpu.vector_store %arg9[%c0_184, %c0_185], %258 {strides = array<i32>} : memref<8x128xf32, #tpu.memory_space<vmem>>, vector<8x128xf32>,
    return
  }
  func.func @transform_0(%arg0: i32) -> (i32, i32, i32) {
    %c0_i32 = arith.constant 0 : i32
    %c0_i32_0 = arith.constant 0 : i32
    %c0_i32_1 = arith.constant 0 : i32
    return %c0_i32, %arg0, %c0_i32_0 : i32, i32, i32
  }
  func.func @transform_1(%arg0: i32) -> (i32, i32, i32) {
    %c0_i32 = arith.constant 0 : i32
    %c0_i32_0 = arith.constant 0 : i32
    %c0_i32_1 = arith.constant 0 : i32
    %c0_i32_2 = arith.constant 0 : i32
    return %c0_i32, %c0_i32_0, %c0_i32_1 : i32, i32, i32
  }
  func.func @transform_2(%arg0: i32) -> (i32, i32) {
    %c0_i32 = arith.constant 0 : i32
    %c0_i32_0 = arith.constant 0 : i32
    %c0_i32_1 = arith.constant 0 : i32
    return %c0_i32, %c0_i32_0 : i32, i32
  }
  func.func @transform_3(%arg0: i32) -> (i32, i32, i32) {
    %c0_i32 = arith.constant 0 : i32
    %c0_i32_0 = arith.constant 0 : i32
    %c0_i32_1 = arith.constant 0 : i32
    %c0_i32_2 = arith.constant 0 : i32
    return %c0_i32, %c0_i32_0, %c0_i32_1 : i32, i32, i32
  }
  func.func @transform_4(%arg0: i32) -> (i32, i32) {
    %c0_i32 = arith.constant 0 : i32
    %c0_i32_0 = arith.constant 0 : i32
    %c0_i32_1 = arith.constant 0 : i32
    return %c0_i32, %c0_i32_0 : i32, i32
  }
  func.func @transform_5(%arg0: i32) -> (i32, i32, i32) {
    %c0_i32 = arith.constant 0 : i32
    %c0_i32_0 = arith.constant 0 : i32
    %c0_i32_1 = arith.constant 0 : i32
    %c0_i32_2 = arith.constant 0 : i32
    return %c0_i32, %c0_i32_0, %c0_i32_1 : i32, i32, i32
  }
  func.func @transform_6(%arg0: i32) -> (i32, i32) {
    %c0_i32 = arith.constant 0 : i32
    %c0_i32_0 = arith.constant 0 : i32
    %c0_i32_1 = arith.constant 0 : i32
    return %c0_i32, %c0_i32_0 : i32, i32
  }
  func.func @transform_7(%arg0: i32) -> (i32, i32) {
    %c0_i32 = arith.constant 0 : i32
    %c0_i32_0 = arith.constant 0 : i32
    return %arg0, %c0_i32 : i32, i32
  }
  func.func @transform_8(%arg0: i32) -> (i32, i32) {
    %c0_i32 = arith.constant 0 : i32
    %c0_i32_0 = arith.constant 0 : i32
    return %arg0, %c0_i32 : i32, i32
  }
}

</mosaic_0001>

<llo_original>
// kernel: convnet_forward.1
$region0: #{convnet_forward.1}
  #allocation0 [shape = 'u32[]', space=smem, size = 0x4, offset = 0x4, fixed_abs, tag = 'smem constant byte address 0x4 - core index']
  #allocation1 [shape = 'u32[144,128]{1,0:T(1,128)}', space=vmem, size = 0x12000, scoped, tag = 'internal scratch']
  #allocation2 [shape = 'f32[224,224]{1,0:T(8,128)}', space=vmem, size = 0x38000, scoped, tag = 'scratch operand']
  #allocation3 [shape = 'f32[128,224]{1,0:T(8,128)}', space=vmem, size = 0x20000, scoped, tag = 'scratch operand']
  #allocation4 [shape = 'f32[112,224]{1,0:T(8,128)}', space=vmem, size = 0x1c000, scoped, tag = 'scratch operand']
  %s0 = inlined_call_operand.vmem [shape: f32[30,8,30], index: 0, kind: input, shape index: {}]
  %s1 = inlined_call_operand.vmem [shape: f32[3,30,224], index: 1, kind: input, shape index: {}]
  %s2 = inlined_call_operand.vmem [shape: f32[1,224], index: 2, kind: input, shape index: {}]
  %s3 = inlined_call_operand.hbm [shape: f32[3,224,224], index: 3, kind: input, shape index: {}]
  %s4 = inlined_call_operand.vmem [shape: f32[1,224], index: 4, kind: input, shape index: {}]
  %s5 = inlined_call_operand.hbm [shape: f32[7,224,128], index: 5, kind: input, shape index: {}]
  %s6 = inlined_call_operand.vmem [shape: f32[1,128], index: 6, kind: input, shape index: {}]
  %s7 = inlined_call_operand.vmem [shape: f32[8,128], index: 7, kind: output, shape index: {0}]
  %s8 = inlined_call_operand.vmem [shape: f32[8,128], index: 8, kind: output, shape index: {1}]
  %9 = xla_tuple %s7, %s8
  %s10 = sld [smem:[#allocation0]]
  $region54: #{convnet_forward.1} parent=0
    _
  %s12 = ssub.s32 1, %s10
  %s13 = scalar_select 0, %s12, %s10
  $region1: #{convnet_forward.1} parent=0
    #allocation5 [shape = 'u8[688128]{0}', space=vmem, size = 0xa8000, scoped, tag = 'input window, operand 3, single buffered']
    #allocation6 [shape = 's32[1]{0}', space=sflag, size = 0x4, scoped, tag = 'scoped memory for convnet_forward.1']
    #allocation7 [shape = 'u8[802816]{0}', space=vmem, size = 0xc4000, scoped, tag = 'input window, operand 5, single buffered']
    #allocation8 [shape = 's32[1]{0}', space=sflag, size = 0x4, scoped, tag = 'scoped memory for convnet_forward.1']
    %14 = vsyncpa [#allocation6], 0
    %15 = vsyncpa [#allocation8], 0
    // Predicated region
    $region2: #{convnet_forward.1} parent=1 // pred_check
      _
    $region3: #{convnet_forward.1} parent=1 // pred_check_branch
      %17 = sbr.rel (0) target = $region5
    $region4: #{convnet_forward.1} parent=1 // pred_region
      _
    $region5: #{convnet_forward.1} parent=1 // pred_fallthru
      _
    // Predicated region
    $region6: #{convnet_forward.1} parent=1 // pred_check
      _
    $region7: #{convnet_forward.1} parent=1 // pred_check_branch
      %19 = sbr.rel (0) target = $region9
    $region8: #{convnet_forward.1} parent=1 // pred_region
      _
    $region9: #{convnet_forward.1} parent=1 // pred_fallthru
      _
    // Predicated region
    $region10: #{convnet_forward.1} parent=1 // pred_check
      _
    $region11: #{convnet_forward.1} parent=1 // pred_check_branch
      %21 = sbr.rel (0) target = $region13
    $region12: #{convnet_forward.1} parent=1 // pred_region
      _
    $region13: #{convnet_forward.1} parent=1 // pred_fallthru
      _
    // Predicated region
    $region14: #{convnet_forward.1} parent=1 // pred_check
      _
    $region15: #{convnet_forward.1} parent=1 // pred_check_branch
      %23 = sbr.rel (0) target = $region17
    $region16: #{convnet_forward.1} parent=1 // pred_region
      %s25 = ssub.s32 21504, 21504
      %26 = vsyncadd [#allocation6], %s25
      %s27 = sshll.u32 [#allocation5], 4
      %s28 = int_to_ptr.vmem [resolvable:$true] %s27
      %33 = dma.hbm_to_vmem [thread:$0]  %s3, 21504, %s28, [#allocation6], 256, 256, 16
    $region17: #{convnet_forward.1} parent=1 // pred_fallthru
      _
    // Predicated region
    $region18: #{convnet_forward.1} parent=1 // pred_check
      _
    $region19: #{convnet_forward.1} parent=1 // pred_check_branch
      %35 = sbr.rel (0) target = $region21
    $region20: #{convnet_forward.1} parent=1 // pred_region
      _
    $region21: #{convnet_forward.1} parent=1 // pred_fallthru
      _
    // Predicated region
    $region22: #{convnet_forward.1} parent=1 // pred_check
      _
    $region23: #{convnet_forward.1} parent=1 // pred_check_branch
      %37 = sbr.rel (0) target = $region25
    $region24: #{convnet_forward.1} parent=1 // pred_region
      %s39 = ssub.s32 25088, 25088
      %40 = vsyncadd [#allocation8], %s39
      %s41 = sshll.u32 [#allocation7], 4
      %s42 = int_to_ptr.vmem [resolvable:$true] %s41
      %47 = dma.hbm_to_vmem [thread:$0]  %s5, 25088, %s42, [#allocation8], 128, 128, 8
    $region25: #{convnet_forward.1} parent=1 // pred_fallthru
      _
    // Predicated region
    $region26: #{convnet_forward.1} parent=1 // pred_check
      _
    $region27: #{convnet_forward.1} parent=1 // pred_check_branch
      %49 = sbr.rel (0) target = $region29
    $region28: #{convnet_forward.1} parent=1 // pred_region
      _
    $region29: #{convnet_forward.1} parent=1 // pred_fallthru
      _
    // Predicated region
    $region30: #{convnet_forward.1} parent=1 // pred_check
      _
    $region31: #{convnet_forward.1} parent=1 // pred_check_branch
      %51 = sbr.rel (0) target = $region33
    $region32: #{convnet_forward.1} parent=1 // pred_region
      %52 = dma.done [#allocation6], 21504
    $region33: #{convnet_forward.1} parent=1 // pred_fallthru
      _
    // Predicated region
    $region34: #{convnet_forward.1} parent=1 // pred_check
      _
    $region35: #{convnet_forward.1} parent=1 // pred_check_branch
      %54 = sbr.rel (0) target = $region37
    $region36: #{convnet_forward.1} parent=1 // pred_region
      %55 = dma.done [#allocation8], 25088
    $region37: #{convnet_forward.1} parent=1 // pred_fallthru
      _
    %v56 = vld [vmem:[%s0] sm:$0xff]
    %v57 = vld [vmem:[%s0 + $0x8] sm:$0xff]
    %v58 = vld [vmem:[%s0 + $0x10] sm:$0xff]
    %v59 = vld [vmem:[%s0 + $0x18] sm:$0xff]
    %v60 = vld [vmem:[%s0 + $0x20] sm:$0xff]
    %v61 = vld [vmem:[%s0 + $0x28] sm:$0xff]
    %v62 = vld [vmem:[%s0 + $0x30] sm:$0xff]
    %v63 = vld [vmem:[%s0 + $0x38] sm:$0xff]
    %v64 = vld [vmem:[%s0 + $0x40] sm:$0xff]
    %v65 = vld [vmem:[%s0 + $0x48] sm:$0xff]
    %v66 = vld [vmem:[%s0 + $0x50] sm:$0xff]
    %v67 = vld [vmem:[%s0 + $0x58] sm:$0xff]
    %v68 = vld [vmem:[%s0 + $0x60] sm:$0xff]
    %v69 = vld [vmem:[%s0 + $0x68] sm:$0xff]
    %v70 = vld [vmem:[%s0 + $0x70] sm:$0xff]
    %v71 = vld [vmem:[%s0 + $0x78] sm:$0xff]
    %v72 = vld [vmem:[%s0 + $0x80] sm:$0xff]
    %v73 = vld [vmem:[%s0 + $0x88] sm:$0xff]
    %v74 = vld [vmem:[%s0 + $0x90] sm:$0xff]
    %v75 = vld [vmem:[%s0 + $0x98] sm:$0xff]
    %v76 = vld [vmem:[%s0 + $0xa0] sm:$0xff]
    %v77 = vld [vmem:[%s0 + $0xa8] sm:$0xff]
    %v78 = vld [vmem:[%s0 + $0xb0] sm:$0xff]
    %v79 = vld [vmem:[%s0 + $0xb8] sm:$0xff]
    %v80 = vld [vmem:[%s0 + $0xc0] sm:$0xff]
    %v81 = vld [vmem:[%s0 + $0xc8] sm:$0xff]
    %v82 = vld [vmem:[%s0 + $0xd0] sm:$0xff]
    %v83 = vld [vmem:[%s0 + $0xd8] sm:$0xff]
    %v84 = vld [vmem:[%s0 + $0xe0] sm:$0xff]
    %v85 = vld [vmem:[%s0 + $0xe8] sm:$0xff]
    %v86 = vld [vmem:[%s1] sm:$0xff]
    %v87 = vld [vmem:[%s1 + $0x8] sm:$0xff]
    %v88 = vld [vmem:[%s1 + $0x10] sm:$0xff]
    %v89 = vld [vmem:[%s1 + $0x18] sm:$0xff]
    %v90 = vld [vmem:[%s1 + $0x20] sm:$0xff]
    %v91 = vld [vmem:[%s1 + $0x28] sm:$0xff]
    %v92 = vld [vmem:[%s1 + $0x30] sm:$0x3f]
    %v93 = vld [vmem:[%s1 + $0x38] sm:$0x3f]
    %vm94 = vcmask 244736
    %v96 = vsel %vm94, %v56, 0
    %v99 = vsel %vm94, %v57, 0
    %v102 = vsel %vm94, %v58, 0
    %v105 = vsel %vm94, %v59, 0
    %v108 = vsel %vm94, %v60, 0
    %v111 = vsel %vm94, %v61, 0
    %v114 = vsel %vm94, %v62, 0
    %v117 = vsel %vm94, %v63, 0
    %v120 = vsel %vm94, %v64, 0
    %v123 = vsel %vm94, %v65, 0
    %v126 = vsel %vm94, %v66, 0
    %v129 = vsel %vm94, %v67, 0
    %v132 = vsel %vm94, %v68, 0
    %v135 = vsel %vm94, %v69, 0
    %v138 = vsel %vm94, %v70, 0
    %v141 = vsel %vm94, %v71, 0
    %v144 = vsel %vm94, %v72, 0
    %v147 = vsel %vm94, %v73, 0
    %v150 = vsel %vm94, %v74, 0
    %v153 = vsel %vm94, %v75, 0
    %v156 = vsel %vm94, %v76, 0
    %v159 = vsel %vm94, %v77, 0
    %v162 = vsel %vm94, %v78, 0
    %v165 = vsel %vm94, %v79, 0
    %v168 = vsel %vm94, %v80, 0
    %v171 = vsel %vm94, %v81, 0
    %v174 = vsel %vm94, %v82, 0
    %v177 = vsel %vm94, %v83, 0
    %vm179 = vcmask 1045504
    %v181 = vsel %vm179, %v92, 0
    %v184 = vsel %vm179, %v93, 0
    %186 = vmatprep.subr.mxu0 0.0
    %187 = vmatpush1.msra.mxu0 0.0
    %188 = vmatprep.subr.mxu0 0.0
    %189 = vmatpush1.msra.mxu0 0.0
    %190 = vmatprep.subr.mxu0 0.0
    %191 = vmatpush1.msra.mxu0 0.0
    %192 = vmatprep.subr.mxu0 0.0
    %193 = vmatpush1.msra.mxu0 0.0
    %194 = vmatprep.subr.mxu0 0.0
    %195 = vmatpush1.msra.mxu0 0.0
    %196 = vmatprep.subr.mxu0 0.0
    %197 = vmatpush1.msra.mxu0 0.0
    %198 = vmatprep.subr.mxu0 0.0
    %199 = vmatpush1.msra.mxu0 0.0
    %200 = vmatprep.subr.mxu0 0.0
    %201 = vmatpush1.msra.mxu0 0.0
    %202 = vmatprep.subr.mxu0 0.0
    %203 = vmatpush1.msra.mxu0 0.0
    %204 = vmatprep.subr.mxu0 0.0
    %205 = vmatpush1.msra.mxu0 0.0
    %206 = vmatprep.subr.mxu0 0.0
    %207 = vmatpush1.msra.mxu0 0.0
    %208 = vmatprep.subr.mxu0 0.0
    %209 = vmatpush1.msra.mxu0 0.0
    %210 = vmatprep.subr.mxu0 %v184
    %211 = vmatpush1.msra.mxu0 %v181
    %212 = vmatprep.subr.mxu0 %v91
    %213 = vmatpush1.msra.mxu0 %v90
    %214 = vmatprep.subr.mxu0 %v89
    %215 = vmatpush1.msra.mxu0 %v88
    %216 = vmatprep.subr.mxu0 %v87
    %217 = vmatpush1.msra.mxu0 %v86
    %218 = vmatprep.subr.mxu0 0.0
    %219 = vmatpush2.msra.mxu0 0.0
    %220 = vmatprep.subr.mxu0 0.0
    %221 = vmatpush2.msra.mxu0 0.0
    %222 = vmatprep.subr.mxu0 0.0
    %223 = vmatpush2.msra.mxu0 0.0
    %224 = vmatprep.subr.mxu0 0.0
    %225 = vmatpush2.msra.mxu0 0.0
    %226 = vmatprep.subr.mxu0 0.0
    %227 = vmatpush2.msra.mxu0 0.0
    %228 = vmatprep.subr.mxu0 0.0
    %229 = vmatpush2.msra.mxu0 0.0
    %230 = vmatprep.subr.mxu0 0.0
    %231 = vmatpush2.msra.mxu0 0.0
    %232 = vmatprep.subr.mxu0 0.0
    %233 = vmatpush2.msra.mxu0 0.0
    %234 = vmatprep.subr.mxu0 0.0
    %235 = vmatpush2.msra.mxu0 0.0
    %236 = vmatprep.subr.mxu0 0.0
    %237 = vmatpush2.msra.mxu0 0.0
    %238 = vmatprep.subr.mxu0 0.0
    %239 = vmatpush2.msra.mxu0 0.0
    %240 = vmatprep.subr.mxu0 0.0
    %241 = vmatpush2.msra.mxu0 0.0
    %242 = vmatprep.subr.mxu0 0.0
    %243 = vmatpush2.msra.mxu0 0.0
    %244 = vmatprep.subr.mxu0 0.0
    %245 = vmatpush2.msra.mxu0 0.0
    %246 = vmatprep.subr.mxu0 0.0
    %247 = vmatpush2.msra.mxu0 0.0
    %248 = vmatprep.subr.mxu0 0.0
    %249 = vmatpush2.msra.mxu0 0.0
    %250 = vmatprep.mubr.f32.mxu0 0.0
    %251 = vmatmul.mubr.f32.gmra.mxu0 %v96
    %v252 = vpop.f32.mrf.mxu0
    %v253 = vadd.f32 0.0, %v252
    %v254 = vpop.f32.mrf.mxu0
    %v255 = vadd.f32 0.0, %v254
    %256 = vmatprep.mubr.f32.mxu0 0.0
    %257 = vmatmul.mubr.f32.gmra.mxu0 %v99
    %v258 = vpop.f32.mrf.mxu0
    %v259 = vadd.f32 0.0, %v258
    %v260 = vpop.f32.mrf.mxu0
    %v261 = vadd.f32 0.0, %v260
    %262 = vmatprep.mubr.f32.mxu0 0.0
    %263 = vmatmul.mubr.f32.gmra.mxu0 %v102
    %v264 = vpop.f32.mrf.mxu0
    %v265 = vadd.f32 0.0, %v264
    %v266 = vpop.f32.mrf.mxu0
    %v267 = vadd.f32 0.0, %v266
    %268 = vmatprep.mubr.f32.mxu0 0.0
    %269 = vmatmul.mubr.f32.gmra.mxu0 %v105
    %v270 = vpop.f32.mrf.mxu0
    %v271 = vadd.f32 0.0, %v270
    %v272 = vpop.f32.mrf.mxu0
    %v273 = vadd.f32 0.0, %v272
    %274 = vmatprep.mubr.f32.mxu0 0.0
    %275 = vmatmul.mubr.f32.gmra.mxu0 %v108
    %v276 = vpop.f32.mrf.mxu0
    %v277 = vadd.f32 0.0, %v276
    %v278 = vpop.f32.mrf.mxu0
    %v279 = vadd.f32 0.0, %v278
    %280 = vmatprep.mubr.f32.mxu0 0.0
    %281 = vmatmul.mubr.f32.gmra.mxu0 %v111
    %v282 = vpop.f32.mrf.mxu0
    %v283 = vadd.f32 0.0, %v282
    %v284 = vpop.f32.mrf.mxu0
    %v285 = vadd.f32 0.0, %v284
    %286 = vmatprep.mubr.f32.mxu0 0.0
    %287 = vmatmul.mubr.f32.gmra.mxu0 %v114
    %v288 = vpop.f32.mrf.mxu0
    %v289 = vadd.f32 0.0, %v288
    %v290 = vpop.f32.mrf.mxu0
    %v291 = vadd.f32 0.0, %v290
    %292 = vmatprep.mubr.f32.mxu0 0.0
    %293 = vmatmul.mubr.f32.gmra.mxu0 %v117
    %v294 = vpop.f32.mrf.mxu0
    %v295 = vadd.f32 0.0, %v294
    %v296 = vpop.f32.mrf.mxu0
    %v297 = vadd.f32 0.0, %v296
    %298 = vmatprep.mubr.f32.mxu0 0.0
    %299 = vmatmul.mubr.f32.gmra.mxu0 %v120
    %v300 = vpop.f32.mrf.mxu0
    %v301 = vadd.f32 0.0, %v300
    %v302 = vpop.f32.mrf.mxu0
    %v303 = vadd.f32 0.0, %v302
    %304 = vmatprep.mubr.f32.mxu0 0.0
    %305 = vmatmul.mubr.f32.gmra.mxu0 %v123
    %v306 = vpop.f32.mrf.mxu0
    %v307 = vadd.f32 0.0, %v306
    %v308 = vpop.f32.mrf.mxu0
    %v309 = vadd.f32 0.0, %v308
    %310 = vmatprep.mubr.f32.mxu0 0.0
    %311 = vmatmul.mubr.f32.gmra.mxu0 %v126
    %v312 = vpop.f32.mrf.mxu0
    %v313 = vadd.f32 0.0, %v312
    %v314 = vpop.f32.mrf.mxu0
    %v315 = vadd.f32 0.0, %v314
    %316 = vmatprep.mubr.f32.mxu0 0.0
    %317 = vmatmul.mubr.f32.gmra.mxu0 %v129
    %v318 = vpop.f32.mrf.mxu0
    %v319 = vadd.f32 0.0, %v318
    %v320 = vpop.f32.mrf.mxu0
    %v321 = vadd.f32 0.0, %v320
    %322 = vmatprep.mubr.f32.mxu0 0.0
    %323 = vmatmul.mubr.f32.gmra.mxu0 %v132
    %v324 = vpop.f32.mrf.mxu0
    %v325 = vadd.f32 0.0, %v324
    %v326 = vpop.f32.mrf.mxu0
    %v327 = vadd.f32 0.0, %v326
    %328 = vmatprep.mubr.f32.mxu0 0.0
    %329 = vmatmul.mubr.f32.gmra.mxu0 %v135
    %v330 = vpop.f32.mrf.mxu0
    %v331 = vadd.f32 0.0, %v330
    %v332 = vpop.f32.mrf.mxu0
    %v333 = vadd.f32 0.0, %v332
    %334 = vmatprep.mubr.f32.mxu0 0.0
    %335 = vmatmul.mubr.f32.gmra.mxu0 %v138
    %v336 = vpop.f32.mrf.mxu0
    %v337 = vadd.f32 0.0, %v336
    %v338 = vpop.f32.mrf.mxu0
    %v339 = vadd.f32 0.0, %v338
    %340 = vmatprep.mubr.f32.mxu0 0.0
    %341 = vmatmul.mubr.f32.gmra.mxu0 %v141
    %v342 = vpop.f32.mrf.mxu0
    %v343 = vadd.f32 0.0, %v342
    %v344 = vpop.f32.mrf.mxu0
    %v345 = vadd.f32 0.0, %v344
    %346 = vmatprep.mubr.f32.mxu0 0.0
    %347 = vmatmul.mubr.f32.gmra.mxu0 %v144
    %v348 = vpop.f32.mrf.mxu0
    %v349 = vadd.f32 0.0, %v348
    %v350 = vpop.f32.mrf.mxu0
    %v351 = vadd.f32 0.0, %v350
    %352 = vmatprep.mubr.f32.mxu0 0.0
    %353 = vmatmul.mubr.f32.gmra.mxu0 %v147
    %v354 = vpop.f32.mrf.mxu0
    %v355 = vadd.f32 0.0, %v354
    %v356 = vpop.f32.mrf.mxu0
    %v357 = vadd.f32 0.0, %v356
    %358 = vmatprep.mubr.f32.mxu0 0.0
    %359 = vmatmul.mubr.f32.gmra.mxu0 %v150
    %v360 = vpop.f32.mrf.mxu0
    %v361 = vadd.f32 0.0, %v360
    %v362 = vpop.f32.mrf.mxu0
    %v363 = vadd.f32 0.0, %v362
    %364 = vmatprep.mubr.f32.mxu0 0.0
    %365 = vmatmul.mubr.f32.gmra.mxu0 %v153
    %v366 = vpop.f32.mrf.mxu0
    %v367 = vadd.f32 0.0, %v366
    %v368 = vpop.f32.mrf.mxu0
    %v369 = vadd.f32 0.0, %v368
    %370 = vmatprep.mubr.f32.mxu0 0.0
    %371 = vmatmul.mubr.f32.gmra.mxu0 %v156
    %v372 = vpop.f32.mrf.mxu0
    %v373 = vadd.f32 0.0, %v372
    %v374 = vpop.f32.mrf.mxu0
    %v375 = vadd.f32 0.0, %v374
    %376 = vmatprep.mubr.f32.mxu0 0.0
    %377 = vmatmul.mubr.f32.gmra.mxu0 %v159
    %v378 = vpop.f32.mrf.mxu0
    %v379 = vadd.f32 0.0, %v378
    %v380 = vpop.f32.mrf.mxu0
    %v381 = vadd.f32 0.0, %v380
    %382 = vmatprep.mubr.f32.mxu0 0.0
    %383 = vmatmul.mubr.f32.gmra.mxu0 %v162
    %v384 = vpop.f32.mrf.mxu0
    %v385 = vadd.f32 0.0, %v384
    %v386 = vpop.f32.mrf.mxu0
    %v387 = vadd.f32 0.0, %v386
    %388 = vmatprep.mubr.f32.mxu0 0.0
    %389 = vmatmul.mubr.f32.gmra.mxu0 %v165
    %v390 = vpop.f32.mrf.mxu0
    %v391 = vadd.f32 0.0, %v390
    %v392 = vpop.f32.mrf.mxu0
    %v393 = vadd.f32 0.0, %v392
    %394 = vmatprep.mubr.f32.mxu0 0.0
    %395 = vmatmul.mubr.f32.gmra.mxu0 %v168
    %v396 = vpop.f32.mrf.mxu0
    %v397 = vadd.f32 0.0, %v396
    %v398 = vpop.f32.mrf.mxu0
    %v399 = vadd.f32 0.0, %v398
    %400 = vmatprep.mubr.f32.mxu0 0.0
    %401 = vmatmul.mubr.f32.gmra.mxu0 %v171
    %v402 = vpop.f32.mrf.mxu0
    %v403 = vadd.f32 0.0, %v402
    %v404 = vpop.f32.mrf.mxu0
    %v405 = vadd.f32 0.0, %v404
    %406 = vmatprep.mubr.f32.mxu0 0.0
    %407 = vmatmul.mubr.f32.gmra.mxu0 %v174
    %v408 = vpop.f32.mrf.mxu0
    %v409 = vadd.f32 0.0, %v408
    %v410 = vpop.f32.mrf.mxu0
    %v411 = vadd.f32 0.0, %v410
    %412 = vmatprep.mubr.f32.mxu0 0.0
    %413 = vmatmul.mubr.f32.gmra.mxu0 %v177
    %v414 = vpop.f32.mrf.mxu0
    %v415 = vadd.f32 0.0, %v414
    %v416 = vpop.f32.mrf.mxu0
    %v417 = vadd.f32 0.0, %v416
    %418 = vdwg.mxu0
    %419 = vst [vmem:[#allocation2] sm:$0xff] %v253
    %vm420 = vcmask 785408
    %421 = vst.msk [vmem:[#allocation2 + $0x8] sm:$0xff] %vm420, %v255
    %422 = vst [vmem:[#allocation2 + $0x10] sm:$0xff] %v259
    %423 = vst.msk [vmem:[#allocation2 + $0x18] sm:$0xff] %vm420, %v261
    %424 = vst [vmem:[#allocation2 + $0x20] sm:$0xff] %v265
    %425 = vst.msk [vmem:[#allocation2 + $0x28] sm:$0xff] %vm420, %v267
    %426 = vst [vmem:[#allocation2 + $0x30] sm:$0xff] %v271
    %427 = vst.msk [vmem:[#allocation2 + $0x38] sm:$0xff] %vm420, %v273
    %428 = vst [vmem:[#allocation2 + $0x40] sm:$0xff] %v277
    %429 = vst.msk [vmem:[#allocation2 + $0x48] sm:$0xff] %vm420, %v279
    %430 = vst [vmem:[#allocation2 + $0x50] sm:$0xff] %v283
    %431 = vst.msk [vmem:[#allocation2 + $0x58] sm:$0xff] %vm420, %v285
    %432 = vst [vmem:[#allocation2 + $0x60] sm:$0xff] %v289
    %433 = vst.msk [vmem:[#allocation2 + $0x68] sm:$0xff] %vm420, %v291
    %434 = vst [vmem:[#allocation2 + $0x70] sm:$0xff] %v295
    %435 = vst.msk [vmem:[#allocation2 + $0x78] sm:$0xff] %vm420, %v297
    %436 = vst [vmem:[#allocation2 + $0x80] sm:$0xff] %v301
    %437 = vst.msk [vmem:[#allocation2 + $0x88] sm:$0xff] %vm420, %v303
    %438 = vst [vmem:[#allocation2 + $0x90] sm:$0xff] %v307
    %439 = vst.msk [vmem:[#allocation2 + $0x98] sm:$0xff] %vm420, %v309
    %440 = vst [vmem:[#allocation2 + $0xa0] sm:$0xff] %v313
    %441 = vst.msk [vmem:[#allocation2 + $0xa8] sm:$0xff] %vm420, %v315
    %442 = vst [vmem:[#allocation2 + $0xb0] sm:$0xff] %v319
    %443 = vst.msk [vmem:[#allocation2 + $0xb8] sm:$0xff] %vm420, %v321
    %444 = vst [vmem:[#allocation2 + $0xc0] sm:$0xff] %v325
    %445 = vst.msk [vmem:[#allocation2 + $0xc8] sm:$0xff] %vm420, %v327
    %446 = vst [vmem:[#allocation2 + $0xd0] sm:$0xff] %v331
    %447 = vst.msk [vmem:[#allocation2 + $0xd8] sm:$0xff] %vm420, %v333
    %448 = vst [vmem:[#allocation2 + $0xe0] sm:$0xff] %v337
    %449 = vst.msk [vmem:[#allocation2 + $0xe8] sm:$0xff] %vm420, %v339
    %450 = vst [vmem:[#allocation2 + $0xf0] sm:$0xff] %v343
    %451 = vst.msk [vmem:[#allocation2 + $0xf8] sm:$0xff] %vm420, %v345
    %452 = vst [vmem:[#allocation2 + $0x100] sm:$0xff] %v349
    %453 = vst.msk [vmem:[#allocation2 + $0x108] sm:$0xff] %vm420, %v351
    %454 = vst [vmem:[#allocation2 + $0x110] sm:$0xff] %v355
    %455 = vst.msk [vmem:[#allocation2 + $0x118] sm:$0xff] %vm420, %v357
    %456 = vst [vmem:[#allocation2 + $0x120] sm:$0xff] %v361
    %457 = vst.msk [vmem:[#allocation2 + $0x128] sm:$0xff] %vm420, %v363
    %458 = vst [vmem:[#allocation2 + $0x130] sm:$0xff] %v367
    %459 = vst.msk [vmem:[#allocation2 + $0x138] sm:$0xff] %vm420, %v369
    %460 = vst [vmem:[#allocation2 + $0x140] sm:$0xff] %v373
    %461 = vst.msk [vmem:[#allocation2 + $0x148] sm:$0xff] %vm420, %v375
    %462 = vst [vmem:[#allocation2 + $0x150] sm:$0xff] %v379
    %463 = vst.msk [vmem:[#allocation2 + $0x158] sm:$0xff] %vm420, %v381
    %464 = vst [vmem:[#allocation2 + $0x160] sm:$0xff] %v385
    %465 = vst.msk [vmem:[#allocation2 + $0x168] sm:$0xff] %vm420, %v387
    %466 = vst [vmem:[#allocation2 + $0x170] sm:$0xff] %v391
    %467 = vst.msk [vmem:[#allocation2 + $0x178] sm:$0xff] %vm420, %v393
    %468 = vst [vmem:[#allocation2 + $0x180] sm:$0xff] %v397
    %469 = vst.msk [vmem:[#allocation2 + $0x188] sm:$0xff] %vm420, %v399
    %470 = vst [vmem:[#allocation2 + $0x190] sm:$0xff] %v403
    %471 = vst.msk [vmem:[#allocation2 + $0x198] sm:$0xff] %vm420, %v405
    %472 = vst [vmem:[#allocation2 + $0x1a0] sm:$0xff] %v409
    %473 = vst.msk [vmem:[#allocation2 + $0x1a8] sm:$0xff] %vm420, %v411
    %474 = vst [vmem:[#allocation2 + $0x1b0] sm:$0xff] %v415
    %475 = vst.msk [vmem:[#allocation2 + $0x1b8] sm:$0xff] %vm420, %v417
    %v476 = vld [vmem:[#allocation2] sm:$0xff]
    %v477 = vld [vmem:[#allocation2 + $0x8] sm:$0xff]
    %v478 = vld [vmem:[#allocation2 + $0x10] sm:$0xff]
    %v479 = vld [vmem:[#allocation2 + $0x18] sm:$0xff]
    %v480 = vld [vmem:[#allocation2 + $0x20] sm:$0xff]
    %v481 = vld [vmem:[#allocation2 + $0x28] sm:$0xff]
    %v482 = vld [vmem:[#allocation2 + $0x30] sm:$0xff]
    %v483 = vld [vmem:[#allocation2 + $0x38] sm:$0xff]
    %v484 = vld [vmem:[#allocation2 + $0x40] sm:$0xff]
    %v485 = vld [vmem:[#allocation2 + $0x48] sm:$0xff]
    %v486 = vld [vmem:[#allocation2 + $0x50] sm:$0xff]
    %v487 = vld [vmem:[#allocation2 + $0x58] sm:$0xff]
    %v488 = vld [vmem:[#allocation2 + $0x60] sm:$0xff]
    %v489 = vld [vmem:[#allocation2 + $0x68] sm:$0xff]
    %v490 = vld [vmem:[#allocation2 + $0x70] sm:$0xff]
    %v491 = vld [vmem:[#allocation2 + $0x78] sm:$0xff]
    %v492 = vld [vmem:[#allocation2 + $0x80] sm:$0xff]
    %v493 = vld [vmem:[#allocation2 + $0x88] sm:$0xff]
    %v494 = vld [vmem:[#allocation2 + $0x90] sm:$0xff]
    %v495 = vld [vmem:[#allocation2 + $0x98] sm:$0xff]
    %v496 = vld [vmem:[#allocation2 + $0xa0] sm:$0xff]
    %v497 = vld [vmem:[#allocation2 + $0xa8] sm:$0xff]
    %v498 = vld [vmem:[#allocation2 + $0xb0] sm:$0xff]
    %v499 = vld [vmem:[#allocation2 + $0xb8] sm:$0xff]
    %v500 = vld [vmem:[#allocation2 + $0xc0] sm:$0xff]
    %v501 = vld [vmem:[#allocation2 + $0xc8] sm:$0xff]
    %v502 = vld [vmem:[#allocation2 + $0xd0] sm:$0xff]
    %v503 = vld [vmem:[#allocation2 + $0xd8] sm:$0xff]
    %v504 = vld [vmem:[#allocation2 + $0xe0] sm:$0xff]
    %v505 = vld [vmem:[#allocation2 + $0xe8] sm:$0xff]
    %v506 = vld [vmem:[#allocation2 + $0xf0] sm:$0xff]
    %v507 = vld [vmem:[#allocation2 + $0xf8] sm:$0xff]
    %v508 = vld [vmem:[#allocation2 + $0x100] sm:$0xff]
    %v509 = vld [vmem:[#allocation2 + $0x108] sm:$0xff]
    %v510 = vld [vmem:[#allocation2 + $0x110] sm:$0xff]
    %v511 = vld [vmem:[#allocation2 + $0x118] sm:$0xff]
    %v512 = vld [vmem:[#allocation2 + $0x120] sm:$0xff]
    %v513 = vld [vmem:[#allocation2 + $0x128] sm:$0xff]
    %v514 = vld [vmem:[#allocation2 + $0x130] sm:$0xff]
    %v515 = vld [vmem:[#allocation2 + $0x138] sm:$0xff]
    %v516 = vld [vmem:[#allocation2 + $0x140] sm:$0xff]
    %v517 = vld [vmem:[#allocation2 + $0x148] sm:$0xff]
    %v518 = vld [vmem:[#allocation2 + $0x150] sm:$0xff]
    %v519 = vld [vmem:[#allocation2 + $0x158] sm:$0xff]
    %v520 = vld [vmem:[#allocation2 + $0x160] sm:$0xff]
    %v521 = vld [vmem:[#allocation2 + $0x168] sm:$0xff]
    %v522 = vld [vmem:[#allocation2 + $0x170] sm:$0xff]
    %v523 = vld [vmem:[#allocation2 + $0x178] sm:$0xff]
    %v524 = vld [vmem:[#allocation2 + $0x180] sm:$0xff]
    %v525 = vld [vmem:[#allocation2 + $0x188] sm:$0xff]
    %v526 = vld [vmem:[#allocation2 + $0x190] sm:$0xff]
    %v527 = vld [vmem:[#allocation2 + $0x198] sm:$0xff]
    %v528 = vld [vmem:[#allocation2 + $0x1a0] sm:$0xff]
    %v529 = vld [vmem:[#allocation2 + $0x1a8] sm:$0xff]
    %v530 = vld [vmem:[#allocation2 + $0x1b0] sm:$0xff]
    %v531 = vld [vmem:[#allocation2 + $0x1b8] sm:$0xff]
    %s532 = scalar_lea.vmem %s1, 64
    %v533 = vld [vmem:[%s532] sm:$0xff]
    %v534 = vld [vmem:[%s532 + $0x8] sm:$0xff]
    %v535 = vld [vmem:[%s532 + $0x10] sm:$0xff]
    %v536 = vld [vmem:[%s532 + $0x18] sm:$0xff]
    %v537 = vld [vmem:[%s532 + $0x20] sm:$0xff]
    %v538 = vld [vmem:[%s532 + $0x28] sm:$0xff]
    %v539 = vld [vmem:[%s532 + $0x30] sm:$0x3f]
    %v540 = vld [vmem:[%s532 + $0x38] sm:$0x3f]
    %v542 = vsel %vm94, %v84, 0
    %v545 = vsel %vm179, %v539, 0
    %v548 = vsel %vm179, %v540, 0
    %550 = vmatprep.subr.mxu0 0.0
    %551 = vmatpush1.msra.mxu0 0.0
    %552 = vmatprep.subr.mxu0 0.0
    %553 = vmatpush1.msra.mxu0 0.0
    %554 = vmatprep.subr.mxu0 0.0
    %555 = vmatpush1.msra.mxu0 0.0
    %556 = vmatprep.subr.mxu0 0.0
    %557 = vmatpush1.msra.mxu0 0.0
    %558 = vmatprep.subr.mxu0 0.0
    %559 = vmatpush1.msra.mxu0 0.0
    %560 = vmatprep.subr.mxu0 0.0
    %561 = vmatpush1.msra.mxu0 0.0
    %562 = vmatprep.subr.mxu0 0.0
    %563 = vmatpush1.msra.mxu0 0.0
    %564 = vmatprep.subr.mxu0 0.0
    %565 = vmatpush1.msra.mxu0 0.0
    %566 = vmatprep.subr.mxu0 0.0
    %567 = vmatpush1.msra.mxu0 0.0
    %568 = vmatprep.subr.mxu0 0.0
    %569 = vmatpush1.msra.mxu0 0.0
    %570 = vmatprep.subr.mxu0 0.0
    %571 = vmatpush1.msra.mxu0 0.0
    %572 = vmatprep.subr.mxu0 0.0
    %573 = vmatpush1.msra.mxu0 0.0
    %574 = vmatprep.subr.mxu0 %v548
    %575 = vmatpush1.msra.mxu0 %v545
    %576 = vmatprep.subr.mxu0 %v538
    %577 = vmatpush1.msra.mxu0 %v537
    %578 = vmatprep.subr.mxu0 %v536
    %579 = vmatpush1.msra.mxu0 %v535
    %580 = vmatprep.subr.mxu0 %v534
    %581 = vmatpush1.msra.mxu0 %v533
    %582 = vmatprep.subr.mxu0 0.0
    %583 = vmatpush2.msra.mxu0 0.0
    %584 = vmatprep.subr.mxu0 0.0
    %585 = vmatpush2.msra.mxu0 0.0
    %586 = vmatprep.subr.mxu0 0.0
    %587 = vmatpush2.msra.mxu0 0.0
    %588 = vmatprep.subr.mxu0 0.0
    %589 = vmatpush2.msra.mxu0 0.0
    %590 = vmatprep.subr.mxu0 0.0
    %591 = vmatpush2.msra.mxu0 0.0
    %592 = vmatprep.subr.mxu0 0.0
    %593 = vmatpush2.msra.mxu0 0.0
    %594 = vmatprep.subr.mxu0 0.0
    %595 = vmatpush2.msra.mxu0 0.0
    %596 = vmatprep.subr.mxu0 0.0
    %597 = vmatpush2.msra.mxu0 0.0
    %598 = vmatprep.subr.mxu0 0.0
    %599 = vmatpush2.msra.mxu0 0.0
    %600 = vmatprep.subr.mxu0 0.0
    %601 = vmatpush2.msra.mxu0 0.0
    %602 = vmatprep.subr.mxu0 0.0
    %603 = vmatpush2.msra.mxu0 0.0
    %604 = vmatprep.subr.mxu0 0.0
    %605 = vmatpush2.msra.mxu0 0.0
    %606 = vmatprep.subr.mxu0 0.0
    %607 = vmatpush2.msra.mxu0 0.0
    %608 = vmatprep.subr.mxu0 0.0
    %609 = vmatpush2.msra.mxu0 0.0
    %610 = vmatprep.subr.mxu0 0.0
    %611 = vmatpush2.msra.mxu0 0.0
    %612 = vmatprep.subr.mxu0 0.0
    %613 = vmatpush2.msra.mxu0 0.0
    %614 = vmatprep.mubr.f32.mxu0 0.0
    %615 = vmatmul.mubr.f32.gmra.mxu0 %v99
    %v616 = vpop.f32.mrf.mxu0
    %v617 = vadd.f32 0.0, %v616
    %v618 = vpop.f32.mrf.mxu0
    %v619 = vadd.f32 0.0, %v618
    %620 = vmatprep.mubr.f32.mxu0 0.0
    %621 = vmatmul.mubr.f32.gmra.mxu0 %v102
    %v622 = vpop.f32.mrf.mxu0
    %v623 = vadd.f32 0.0, %v622
    %v624 = vpop.f32.mrf.mxu0
    %v625 = vadd.f32 0.0, %v624
    %626 = vmatprep.mubr.f32.mxu0 0.0
    %627 = vmatmul.mubr.f32.gmra.mxu0 %v105
    %v628 = vpop.f32.mrf.mxu0
    %v629 = vadd.f32 0.0, %v628
    %v630 = vpop.f32.mrf.mxu0
    %v631 = vadd.f32 0.0, %v630
    %632 = vmatprep.mubr.f32.mxu0 0.0
    %633 = vmatmul.mubr.f32.gmra.mxu0 %v108
    %v634 = vpop.f32.mrf.mxu0
    %v635 = vadd.f32 0.0, %v634
    %v636 = vpop.f32.mrf.mxu0
    %v637 = vadd.f32 0.0, %v636
    %638 = vmatprep.mubr.f32.mxu0 0.0
    %639 = vmatmul.mubr.f32.gmra.mxu0 %v111
    %v640 = vpop.f32.mrf.mxu0
    %v641 = vadd.f32 0.0, %v640
    %v642 = vpop.f32.mrf.mxu0
    %v643 = vadd.f32 0.0, %v642
    %644 = vmatprep.mubr.f32.mxu0 0.0
    %645 = vmatmul.mubr.f32.gmra.mxu0 %v114
    %v646 = vpop.f32.mrf.mxu0
    %v647 = vadd.f32 0.0, %v646
    %v648 = vpop.f32.mrf.mxu0
    %v649 = vadd.f32 0.0, %v648
    %650 = vmatprep.mubr.f32.mxu0 0.0
    %651 = vmatmul.mubr.f32.gmra.mxu0 %v117
    %v652 = vpop.f32.mrf.mxu0
    %v653 = vadd.f32 0.0, %v652
    %v654 = vpop.f32.mrf.mxu0
    %v655 = vadd.f32 0.0, %v654
    %656 = vmatprep.mubr.f32.mxu0 0.0
    %657 = vmatmul.mubr.f32.gmra.mxu0 %v120
    %v658 = vpop.f32.mrf.mxu0
    %v659 = vadd.f32 0.0, %v658
    %v660 = vpop.f32.mrf.mxu0
    %v661 = vadd.f32 0.0, %v660
    %662 = vmatprep.mubr.f32.mxu0 0.0
    %663 = vmatmul.mubr.f32.gmra.mxu0 %v123
    %v664 = vpop.f32.mrf.mxu0
    %v665 = vadd.f32 0.0, %v664
    %v666 = vpop.f32.mrf.mxu0
    %v667 = vadd.f32 0.0, %v666
    %668 = vmatprep.mubr.f32.mxu0 0.0
    %669 = vmatmul.mubr.f32.gmra.mxu0 %v126
    %v670 = vpop.f32.mrf.mxu0
    %v671 = vadd.f32 0.0, %v670
    %v672 = vpop.f32.mrf.mxu0
    %v673 = vadd.f32 0.0, %v672
    %674 = vmatprep.mubr.f32.mxu0 0.0
    %675 = vmatmul.mubr.f32.gmra.mxu0 %v129
    %v676 = vpop.f32.mrf.mxu0
    %v677 = vadd.f32 0.0, %v676
    %v678 = vpop.f32.mrf.mxu0
    %v679 = vadd.f32 0.0, %v678
    %680 = vmatprep.mubr.f32.mxu0 0.0
    %681 = vmatmul.mubr.f32.gmra.mxu0 %v132
    %v682 = vpop.f32.mrf.mxu0
    %v683 = vadd.f32 0.0, %v682
    %v684 = vpop.f32.mrf.mxu0
    %v685 = vadd.f32 0.0, %v684
    %686 = vmatprep.mubr.f32.mxu0 0.0
    %687 = vmatmul.mubr.f32.gmra.mxu0 %v135
    %v688 = vpop.f32.mrf.mxu0
    %v689 = vadd.f32 0.0, %v688
    %v690 = vpop.f32.mrf.mxu0
    %v691 = vadd.f32 0.0, %v690
    %692 = vmatprep.mubr.f32.mxu0 0.0
    %693 = vmatmul.mubr.f32.gmra.mxu0 %v138
    %v694 = vpop.f32.mrf.mxu0
    %v695 = vadd.f32 0.0, %v694
    %v696 = vpop.f32.mrf.mxu0
    %v697 = vadd.f32 0.0, %v696
    %698 = vmatprep.mubr.f32.mxu0 0.0
    %699 = vmatmul.mubr.f32.gmra.mxu0 %v141
    %v700 = vpop.f32.mrf.mxu0
    %v701 = vadd.f32 0.0, %v700
    %v702 = vpop.f32.mrf.mxu0
    %v703 = vadd.f32 0.0, %v702
    %704 = vmatprep.mubr.f32.mxu0 0.0
    %705 = vmatmul.mubr.f32.gmra.mxu0 %v144
    %v706 = vpop.f32.mrf.mxu0
    %v707 = vadd.f32 0.0, %v706
    %v708 = vpop.f32.mrf.mxu0
    %v709 = vadd.f32 0.0, %v708
    %710 = vmatprep.mubr.f32.mxu0 0.0
    %711 = vmatmul.mubr.f32.gmra.mxu0 %v147
    %v712 = vpop.f32.mrf.mxu0
    %v713 = vadd.f32 0.0, %v712
    %v714 = vpop.f32.mrf.mxu0
    %v715 = vadd.f32 0.0, %v714
    %716 = vmatprep.mubr.f32.mxu0 0.0
    %717 = vmatmul.mubr.f32.gmra.mxu0 %v150
    %v718 = vpop.f32.mrf.mxu0
    %v719 = vadd.f32 0.0, %v718
    %v720 = vpop.f32.mrf.mxu0
    %v721 = vadd.f32 0.0, %v720
    %722 = vmatprep.mubr.f32.mxu0 0.0
    %723 = vmatmul.mubr.f32.gmra.mxu0 %v153
    %v724 = vpop.f32.mrf.mxu0
    %v725 = vadd.f32 0.0, %v724
    %v726 = vpop.f32.mrf.mxu0
    %v727 = vadd.f32 0.0, %v726
    %728 = vmatprep.mubr.f32.mxu0 0.0
    %729 = vmatmul.mubr.f32.gmra.mxu0 %v156
    %v730 = vpop.f32.mrf.mxu0
    %v731 = vadd.f32 0.0, %v730
    %v732 = vpop.f32.mrf.mxu0
    %v733 = vadd.f32 0.0, %v732
    %734 = vmatprep.mubr.f32.mxu0 0.0
    %735 = vmatmul.mubr.f32.gmra.mxu0 %v159
    %v736 = vpop.f32.mrf.mxu0
    %v737 = vadd.f32 0.0, %v736
    %v738 = vpop.f32.mrf.mxu0
    %v739 = vadd.f32 0.0, %v738
    %740 = vmatprep.mubr.f32.mxu0 0.0
    %741 = vmatmul.mubr.f32.gmra.mxu0 %v162
    %v742 = vpop.f32.mrf.mxu0
    %v743 = vadd.f32 0.0, %v742
    %v744 = vpop.f32.mrf.mxu0
    %v745 = vadd.f32 0.0, %v744
    %746 = vmatprep.mubr.f32.mxu0 0.0
    %747 = vmatmul.mubr.f32.gmra.mxu0 %v165
    %v748 = vpop.f32.mrf.mxu0
    %v749 = vadd.f32 0.0, %v748
    %v750 = vpop.f32.mrf.mxu0
    %v751 = vadd.f32 0.0, %v750
    %752 = vmatprep.mubr.f32.mxu0 0.0
    %753 = vmatmul.mubr.f32.gmra.mxu0 %v168
    %v754 = vpop.f32.mrf.mxu0
    %v755 = vadd.f32 0.0, %v754
    %v756 = vpop.f32.mrf.mxu0
    %v757 = vadd.f32 0.0, %v756
    %758 = vmatprep.mubr.f32.mxu0 0.0
    %759 = vmatmul.mubr.f32.gmra.mxu0 %v171
    %v760 = vpop.f32.mrf.mxu0
    %v761 = vadd.f32 0.0, %v760
    %v762 = vpop.f32.mrf.mxu0
    %v763 = vadd.f32 0.0, %v762
    %764 = vmatprep.mubr.f32.mxu0 0.0
    %765 = vmatmul.mubr.f32.gmra.mxu0 %v174
    %v766 = vpop.f32.mrf.mxu0
    %v767 = vadd.f32 0.0, %v766
    %v768 = vpop.f32.mrf.mxu0
    %v769 = vadd.f32 0.0, %v768
    %770 = vmatprep.mubr.f32.mxu0 0.0
    %771 = vmatmul.mubr.f32.gmra.mxu0 %v177
    %v772 = vpop.f32.mrf.mxu0
    %v773 = vadd.f32 0.0, %v772
    %v774 = vpop.f32.mrf.mxu0
    %v775 = vadd.f32 0.0, %v774
    %776 = vmatprep.mubr.f32.mxu0 0.0
    %777 = vmatmul.mubr.f32.gmra.mxu0 %v542
    %v778 = vpop.f32.mrf.mxu0
    %v779 = vadd.f32 0.0, %v778
    %v780 = vpop.f32.mrf.mxu0
    %v781 = vadd.f32 0.0, %v780
    %782 = vdwg.mxu0
    %v783 = vadd.f32 %v476, %v617
    %v784 = vadd.f32 %v477, %v619
    %v785 = vadd.f32 %v478, %v623
    %v786 = vadd.f32 %v479, %v625
    %v787 = vadd.f32 %v480, %v629
    %v788 = vadd.f32 %v481, %v631
    %v789 = vadd.f32 %v482, %v635
    %v790 = vadd.f32 %v483, %v637
    %v791 = vadd.f32 %v484, %v641
    %v792 = vadd.f32 %v485, %v643
    %v793 = vadd.f32 %v486, %v647
    %v794 = vadd.f32 %v487, %v649
    %v795 = vadd.f32 %v488, %v653
    %v796 = vadd.f32 %v489, %v655
    %v797 = vadd.f32 %v490, %v659
    %v798 = vadd.f32 %v491, %v661
    %v799 = vadd.f32 %v492, %v665
    %v800 = vadd.f32 %v493, %v667
    %v801 = vadd.f32 %v494, %v671
    %v802 = vadd.f32 %v495, %v673
    %v803 = vadd.f32 %v496, %v677
    %v804 = vadd.f32 %v497, %v679
    %v805 = vadd.f32 %v498, %v683
    %v806 = vadd.f32 %v499, %v685
    %v807 = vadd.f32 %v500, %v689
    %v808 = vadd.f32 %v501, %v691
    %v809 = vadd.f32 %v502, %v695
    %v810 = vadd.f32 %v503, %v697
    %v811 = vadd.f32 %v504, %v701
    %v812 = vadd.f32 %v505, %v703
    %v813 = vadd.f32 %v506, %v707
    %v814 = vadd.f32 %v507, %v709
    %v815 = vadd.f32 %v508, %v713
    %v816 = vadd.f32 %v509, %v715
    %v817 = vadd.f32 %v510, %v719
    %v818 = vadd.f32 %v511, %v721
    %v819 = vadd.f32 %v512, %v725
    %v820 = vadd.f32 %v513, %v727
    %v821 = vadd.f32 %v514, %v731
    %v822 = vadd.f32 %v515, %v733
    %v823 = vadd.f32 %v516, %v737
    %v824 = vadd.f32 %v517, %v739
    %v825 = vadd.f32 %v518, %v743
    %v826 = vadd.f32 %v519, %v745
    %v827 = vadd.f32 %v520, %v749
    %v828 = vadd.f32 %v521, %v751
    %v829 = vadd.f32 %v522, %v755
    %v830 = vadd.f32 %v523, %v757
    %v831 = vadd.f32 %v524, %v761
    %v832 = vadd.f32 %v525, %v763
    %v833 = vadd.f32 %v526, %v767
    %v834 = vadd.f32 %v527, %v769
    %v835 = vadd.f32 %v528, %v773
    %v836 = vadd.f32 %v529, %v775
    %v837 = vadd.f32 %v530, %v779
    %v838 = vadd.f32 %v531, %v781
    %839 = vst [vmem:[#allocation2] sm:$0xff] %v783
    %840 = vst.msk [vmem:[#allocation2 + $0x8] sm:$0xff] %vm420, %v784
    %841 = vst [vmem:[#allocation2 + $0x10] sm:$0xff] %v785
    %842 = vst.msk [vmem:[#allocation2 + $0x18] sm:$0xff] %vm420, %v786
    %843 = vst [vmem:[#allocation2 + $0x20] sm:$0xff] %v787
    %844 = vst.msk [vmem:[#allocation2 + $0x28] sm:$0xff] %vm420, %v788
    %845 = vst [vmem:[#allocation2 + $0x30] sm:$0xff] %v789
    %846 = vst.msk [vmem:[#allocation2 + $0x38] sm:$0xff] %vm420, %v790
    %847 = vst [vmem:[#allocation2 + $0x40] sm:$0xff] %v791
    %848 = vst.msk [vmem:[#allocation2 + $0x48] sm:$0xff] %vm420, %v792
    %849 = vst [vmem:[#allocation2 + $0x50] sm:$0xff] %v793
    %850 = vst.msk [vmem:[#allocation2 + $0x58] sm:$0xff] %vm420, %v794
    %851 = vst [vmem:[#allocation2 + $0x60] sm:$0xff] %v795
    %852 = vst.msk [vmem:[#allocation2 + $0x68] sm:$0xff] %vm420, %v796
    %853 = vst [vmem:[#allocation2 + $0x70] sm:$0xff] %v797
    %854 = vst.msk [vmem:[#allocation2 + $0x78] sm:$0xff] %vm420, %v798
    %855 = vst [vmem:[#allocation2 + $0x80] sm:$0xff] %v799
    %856 = vst.msk [vmem:[#allocation2 + $0x88] sm:$0xff] %vm420, %v800
    %857 = vst [vmem:[#allocation2 + $0x90] sm:$0xff] %v801
    %858 = vst.msk [vmem:[#allocation2 + $0x98] sm:$0xff] %vm420, %v802
    %859 = vst [vmem:[#allocation2 + $0xa0] sm:$0xff] %v803
    %860 = vst.msk [vmem:[#allocation2 + $0xa8] sm:$0xff] %vm420, %v804
    %861 = vst [vmem:[#allocation2 + $0xb0] sm:$0xff] %v805
    %862 = vst.msk [vmem:[#allocation2 + $0xb8] sm:$0xff] %vm420, %v806
    %863 = vst [vmem:[#allocation2 + $0xc0] sm:$0xff] %v807
    %864 = vst.msk [vmem:[#allocation2 + $0xc8] sm:$0xff] %vm420, %v808
    %865 = vst [vmem:[#allocation2 + $0xd0] sm:$0xff] %v809
    %866 = vst.msk [vmem:[#allocation2 + $0xd8] sm:$0xff] %vm420, %v810
    %867 = vst [vmem:[#allocation2 + $0xe0] sm:$0xff] %v811
    %868 = vst.msk [vmem:[#allocation2 + $0xe8] sm:$0xff] %vm420, %v812
    %869 = vst [vmem:[#allocation2 + $0xf0] sm:$0xff] %v813
    %870 = vst.msk [vmem:[#allocation2 + $0xf8] sm:$0xff] %vm420, %v814
    %871 = vst [vmem:[#allocation2 + $0x100] sm:$0xff] %v815
    %872 = vst.msk [vmem:[#allocation2 + $0x108] sm:$0xff] %vm420, %v816
    %873 = vst [vmem:[#allocation2 + $0x110] sm:$0xff] %v817
    %874 = vst.msk [vmem:[#allocation2 + $0x118] sm:$0xff] %vm420, %v818
    %875 = vst [vmem:[#allocation2 + $0x120] sm:$0xff] %v819
    %876 = vst.msk [vmem:[#allocation2 + $0x128] sm:$0xff] %vm420, %v820
    %877 = vst [vmem:[#allocation2 + $0x130] sm:$0xff] %v821
    %878 = vst.msk [vmem:[#allocation2 + $0x138] sm:$0xff] %vm420, %v822
    %879 = vst [vmem:[#allocation2 + $0x140] sm:$0xff] %v823
    %880 = vst.msk [vmem:[#allocation2 + $0x148] sm:$0xff] %vm420, %v824
    %881 = vst [vmem:[#allocation2 + $0x150] sm:$0xff] %v825
    %882 = vst.msk [vmem:[#allocation2 + $0x158] sm:$0xff] %vm420, %v826
    %883 = vst [vmem:[#allocation2 + $0x160] sm:$0xff] %v827
    %884 = vst.msk [vmem:[#allocation2 + $0x168] sm:$0xff] %vm420, %v828
    %885 = vst [vmem:[#allocation2 + $0x170] sm:$0xff] %v829
    %886 = vst.msk [vmem:[#allocation2 + $0x178] sm:$0xff] %vm420, %v830
    %887 = vst [vmem:[#allocation2 + $0x180] sm:$0xff] %v831
    %888 = vst.msk [vmem:[#allocation2 + $0x188] sm:$0xff] %vm420, %v832
    %889 = vst [vmem:[#allocation2 + $0x190] sm:$0xff] %v833
    %890 = vst.msk [vmem:[#allocation2 + $0x198] sm:$0xff] %vm420, %v834
    %891 = vst [vmem:[#allocation2 + $0x1a0] sm:$0xff] %v835
    %892 = vst.msk [vmem:[#allocation2 + $0x1a8] sm:$0xff] %vm420, %v836
    %893 = vst [vmem:[#allocation2 + $0x1b0] sm:$0xff] %v837
    %894 = vst.msk [vmem:[#allocation2 + $0x1b8] sm:$0xff] %vm420, %v838
    %v895 = vld [vmem:[#allocation2] sm:$0xff]
    %v896 = vld [vmem:[#allocation2 + $0x8] sm:$0xff]
    %v897 = vld [vmem:[#allocation2 + $0x10] sm:$0xff]
    %v898 = vld [vmem:[#allocation2 + $0x18] sm:$0xff]
    %v899 = vld [vmem:[#allocation2 + $0x20] sm:$0xff]
    %v900 = vld [vmem:[#allocation2 + $0x28] sm:$0xff]
    %v901 = vld [vmem:[#allocation2 + $0x30] sm:$0xff]
    %v902 = vld [vmem:[#allocation2 + $0x38] sm:$0xff]
    %v903 = vld [vmem:[#allocation2 + $0x40] sm:$0xff]
    %v904 = vld [vmem:[#allocation2 + $0x48] sm:$0xff]
    %v905 = vld [vmem:[#allocation2 + $0x50] sm:$0xff]
    %v906 = vld [vmem:[#allocation2 + $0x58] sm:$0xff]
    %v907 = vld [vmem:[#allocation2 + $0x60] sm:$0xff]
    %v908 = vld [vmem:[#allocation2 + $0x68] sm:$0xff]
    %v909 = vld [vmem:[#allocation2 + $0x70] sm:$0xff]
    %v910 = vld [vmem:[#allocation2 + $0x78] sm:$0xff]
    %v911 = vld [vmem:[#allocation2 + $0x80] sm:$0xff]
    %v912 = vld [vmem:[#allocation2 + $0x88] sm:$0xff]
    %v913 = vld [vmem:[#allocation2 + $0x90] sm:$0xff]
    %v914 = vld [vmem:[#allocation2 + $0x98] sm:$0xff]
    %v915 = vld [vmem:[#allocation2 + $0xa0] sm:$0xff]
    %v916 = vld [vmem:[#allocation2 + $0xa8] sm:$0xff]
    %v917 = vld [vmem:[#allocation2 + $0xb0] sm:$0xff]
    %v918 = vld [vmem:[#allocation2 + $0xb8] sm:$0xff]
    %v919 = vld [vmem:[#allocation2 + $0xc0] sm:$0xff]
    %v920 = vld [vmem:[#allocation2 + $0xc8] sm:$0xff]
    %v921 = vld [vmem:[#allocation2 + $0xd0] sm:$0xff]
    %v922 = vld [vmem:[#allocation2 + $0xd8] sm:$0xff]
    %v923 = vld [vmem:[#allocation2 + $0xe0] sm:$0xff]
    %v924 = vld [vmem:[#allocation2 + $0xe8] sm:$0xff]
    %v925 = vld [vmem:[#allocation2 + $0xf0] sm:$0xff]
    %v926 = vld [vmem:[#allocation2 + $0xf8] sm:$0xff]
    %v927 = vld [vmem:[#allocation2 + $0x100] sm:$0xff]
    %v928 = vld [vmem:[#allocation2 + $0x108] sm:$0xff]
    %v929 = vld [vmem:[#allocation2 + $0x110] sm:$0xff]
    %v930 = vld [vmem:[#allocation2 + $0x118] sm:$0xff]
    %v931 = vld [vmem:[#allocation2 + $0x120] sm:$0xff]
    %v932 = vld [vmem:[#allocation2 + $0x128] sm:$0xff]
    %v933 = vld [vmem:[#allocation2 + $0x130] sm:$0xff]
    %v934 = vld [vmem:[#allocation2 + $0x138] sm:$0xff]
    %v935 = vld [vmem:[#allocation2 + $0x140] sm:$0xff]
    %v936 = vld [vmem:[#allocation2 + $0x148] sm:$0xff]
    %v937 = vld [vmem:[#allocation2 + $0x150] sm:$0xff]
    %v938 = vld [vmem:[#allocation2 + $0x158] sm:$0xff]
    %v939 = vld [vmem:[#allocation2 + $0x160] sm:$0xff]
    %v940 = vld [vmem:[#allocation2 + $0x168] sm:$0xff]
    %v941 = vld [vmem:[#allocation2 + $0x170] sm:$0xff]
    %v942 = vld [vmem:[#allocation2 + $0x178] sm:$0xff]
    %v943 = vld [vmem:[#allocation2 + $0x180] sm:$0xff]
    %v944 = vld [vmem:[#allocation2 + $0x188] sm:$0xff]
    %v945 = vld [vmem:[#allocation2 + $0x190] sm:$0xff]
    %v946 = vld [vmem:[#allocation2 + $0x198] sm:$0xff]
    %v947 = vld [vmem:[#allocation2 + $0x1a0] sm:$0xff]
    %v948 = vld [vmem:[#allocation2 + $0x1a8] sm:$0xff]
    %v949 = vld [vmem:[#allocation2 + $0x1b0] sm:$0xff]
    %v950 = vld [vmem:[#allocation2 + $0x1b8] sm:$0xff]
    %s951 = scalar_lea.vmem %s1, 128
    %v952 = vld [vmem:[%s951] sm:$0xff]
    %v953 = vld [vmem:[%s951 + $0x8] sm:$0xff]
    %v954 = vld [vmem:[%s951 + $0x10] sm:$0xff]
    %v955 = vld [vmem:[%s951 + $0x18] sm:$0xff]
    %v956 = vld [vmem:[%s951 + $0x20] sm:$0xff]
    %v957 = vld [vmem:[%s951 + $0x28] sm:$0xff]
    %v958 = vld [vmem:[%s951 + $0x30] sm:$0x3f]
    %v959 = vld [vmem:[%s951 + $0x38] sm:$0x3f]
    %v961 = vsel %vm94, %v85, 0
    %v964 = vsel %vm179, %v958, 0
    %v967 = vsel %vm179, %v959, 0
    %969 = vmatprep.subr.mxu0 0.0
    %970 = vmatpush1.msra.mxu0 0.0
    %971 = vmatprep.subr.mxu0 0.0
    %972 = vmatpush1.msra.mxu0 0.0
    %973 = vmatprep.subr.mxu0 0.0
    %974 = vmatpush1.msra.mxu0 0.0
    %975 = vmatprep.subr.mxu0 0.0
    %976 = vmatpush1.msra.mxu0 0.0
    %977 = vmatprep.subr.mxu0 0.0
    %978 = vmatpush1.msra.mxu0 0.0
    %979 = vmatprep.subr.mxu0 0.0
    %980 = vmatpush1.msra.mxu0 0.0
    %981 = vmatprep.subr.mxu0 0.0
    %982 = vmatpush1.msra.mxu0 0.0
    %983 = vmatprep.subr.mxu0 0.0
    %984 = vmatpush1.msra.mxu0 0.0
    %985 = vmatprep.subr.mxu0 0.0
    %986 = vmatpush1.msra.mxu0 0.0
    %987 = vmatprep.subr.mxu0 0.0
    %988 = vmatpush1.msra.mxu0 0.0
    %989 = vmatprep.subr.mxu0 0.0
    %990 = vmatpush1.msra.mxu0 0.0
    %991 = vmatprep.subr.mxu0 0.0
    %992 = vmatpush1.msra.mxu0 0.0
    %993 = vmatprep.subr.mxu0 %v967
    %994 = vmatpush1.msra.mxu0 %v964
    %995 = vmatprep.subr.mxu0 %v957
    %996 = vmatpush1.msra.mxu0 %v956
    %997 = vmatprep.subr.mxu0 %v955
    %998 = vmatpush1.msra.mxu0 %v954
    %999 = vmatprep.subr.mxu0 %v953
    %1000 = vmatpush1.msra.mxu0 %v952
    %1001 = vmatprep.subr.mxu0 0.0
    %1002 = vmatpush2.msra.mxu0 0.0
    %1003 = vmatprep.subr.mxu0 0.0
    %1004 = vmatpush2.msra.mxu0 0.0
    %1005 = vmatprep.subr.mxu0 0.0
    %1006 = vmatpush2.msra.mxu0 0.0
    %1007 = vmatprep.subr.mxu0 0.0
    %1008 = vmatpush2.msra.mxu0 0.0
    %1009 = vmatprep.subr.mxu0 0.0
    %1010 = vmatpush2.msra.mxu0 0.0
    %1011 = vmatprep.subr.mxu0 0.0
    %1012 = vmatpush2.msra.mxu0 0.0
    %1013 = vmatprep.subr.mxu0 0.0
    %1014 = vmatpush2.msra.mxu0 0.0
    %1015 = vmatprep.subr.mxu0 0.0
    %1016 = vmatpush2.msra.mxu0 0.0
    %1017 = vmatprep.subr.mxu0 0.0
    %1018 = vmatpush2.msra.mxu0 0.0
    %1019 = vmatprep.subr.mxu0 0.0
    %1020 = vmatpush2.msra.mxu0 0.0
    %1021 = vmatprep.subr.mxu0 0.0
    %1022 = vmatpush2.msra.mxu0 0.0
    %1023 = vmatprep.subr.mxu0 0.0
    %1024 = vmatpush2.msra.mxu0 0.0
    %1025 = vmatprep.subr.mxu0 0.0
    %1026 = vmatpush2.msra.mxu0 0.0
    %1027 = vmatprep.subr.mxu0 0.0
    %1028 = vmatpush2.msra.mxu0 0.0
    %1029 = vmatprep.subr.mxu0 0.0
    %1030 = vmatpush2.msra.mxu0 0.0
    %1031 = vmatprep.subr.mxu0 0.0
    %1032 = vmatpush2.msra.mxu0 0.0
    %1033 = vmatprep.mubr.f32.mxu0 0.0
    %1034 = vmatmul.mubr.f32.gmra.mxu0 %v102
    %v1035 = vpop.f32.mrf.mxu0
    %v1036 = vadd.f32 0.0, %v1035
    %v1037 = vpop.f32.mrf.mxu0
    %v1038 = vadd.f32 0.0, %v1037
    %1039 = vmatprep.mubr.f32.mxu0 0.0
    %1040 = vmatmul.mubr.f32.gmra.mxu0 %v105
    %v1041 = vpop.f32.mrf.mxu0
    %v1042 = vadd.f32 0.0, %v1041
    %v1043 = vpop.f32.mrf.mxu0
    %v1044 = vadd.f32 0.0, %v1043
    %1045 = vmatprep.mubr.f32.mxu0 0.0
    %1046 = vmatmul.mubr.f32.gmra.mxu0 %v108
    %v1047 = vpop.f32.mrf.mxu0
    %v1048 = vadd.f32 0.0, %v1047
    %v1049 = vpop.f32.mrf.mxu0
    %v1050 = vadd.f32 0.0, %v1049
    %1051 = vmatprep.mubr.f32.mxu0 0.0
    %1052 = vmatmul.mubr.f32.gmra.mxu0 %v111
    %v1053 = vpop.f32.mrf.mxu0
    %v1054 = vadd.f32 0.0, %v1053
    %v1055 = vpop.f32.mrf.mxu0
    %v1056 = vadd.f32 0.0, %v1055
    %1057 = vmatprep.mubr.f32.mxu0 0.0
    %1058 = vmatmul.mubr.f32.gmra.mxu0 %v114
    %v1059 = vpop.f32.mrf.mxu0
    %v1060 = vadd.f32 0.0, %v1059
    %v1061 = vpop.f32.mrf.mxu0
    %v1062 = vadd.f32 0.0, %v1061
    %1063 = vmatprep.mubr.f32.mxu0 0.0
    %1064 = vmatmul.mubr.f32.gmra.mxu0 %v117
    %v1065 = vpop.f32.mrf.mxu0
    %v1066 = vadd.f32 0.0, %v1065
    %v1067 = vpop.f32.mrf.mxu0
    %v1068 = vadd.f32 0.0, %v1067
    %1069 = vmatprep.mubr.f32.mxu0 0.0
    %1070 = vmatmul.mubr.f32.gmra.mxu0 %v120
    %v1071 = vpop.f32.mrf.mxu0
    %v1072 = vadd.f32 0.0, %v1071
    %v1073 = vpop.f32.mrf.mxu0
    %v1074 = vadd.f32 0.0, %v1073
    %1075 = vmatprep.mubr.f32.mxu0 0.0
    %1076 = vmatmul.mubr.f32.gmra.mxu0 %v123
    %v1077 = vpop.f32.mrf.mxu0
    %v1078 = vadd.f32 0.0, %v1077
    %v1079 = vpop.f32.mrf.mxu0
    %v1080 = vadd.f32 0.0, %v1079
    %1081 = vmatprep.mubr.f32.mxu0 0.0
    %1082 = vmatmul.mubr.f32.gmra.mxu0 %v126
    %v1083 = vpop.f32.mrf.mxu0
    %v1084 = vadd.f32 0.0, %v1083
    %v1085 = vpop.f32.mrf.mxu0
    %v1086 = vadd.f32 0.0, %v1085
    %1087 = vmatprep.mubr.f32.mxu0 0.0
    %1088 = vmatmul.mubr.f32.gmra.mxu0 %v129
    %v1089 = vpop.f32.mrf.mxu0
    %v1090 = vadd.f32 0.0, %v1089
    %v1091 = vpop.f32.mrf.mxu0
    %v1092 = vadd.f32 0.0, %v1091
    %1093 = vmatprep.mubr.f32.mxu0 0.0
    %1094 = vmatmul.mubr.f32.gmra.mxu0 %v132
    %v1095 = vpop.f32.mrf.mxu0
    %v1096 = vadd.f32 0.0, %v1095
    %v1097 = vpop.f32.mrf.mxu0
    %v1098 = vadd.f32 0.0, %v1097
    %1099 = vmatprep.mubr.f32.mxu0 0.0
    %1100 = vmatmul.mubr.f32.gmra.mxu0 %v135
    %v1101 = vpop.f32.mrf.mxu0
    %v1102 = vadd.f32 0.0, %v1101
    %v1103 = vpop.f32.mrf.mxu0
    %v1104 = vadd.f32 0.0, %v1103
    %1105 = vmatprep.mubr.f32.mxu0 0.0
    %1106 = vmatmul.mubr.f32.gmra.mxu0 %v138
    %v1107 = vpop.f32.mrf.mxu0
    %v1108 = vadd.f32 0.0, %v1107
    %v1109 = vpop.f32.mrf.mxu0
    %v1110 = vadd.f32 0.0, %v1109
    %1111 = vmatprep.mubr.f32.mxu0 0.0
    %1112 = vmatmul.mubr.f32.gmra.mxu0 %v141
    %v1113 = vpop.f32.mrf.mxu0
    %v1114 = vadd.f32 0.0, %v1113
    %v1115 = vpop.f32.mrf.mxu0
    %v1116 = vadd.f32 0.0, %v1115
    %1117 = vmatprep.mubr.f32.mxu0 0.0
    %1118 = vmatmul.mubr.f32.gmra.mxu0 %v144
    %v1119 = vpop.f32.mrf.mxu0
    %v1120 = vadd.f32 0.0, %v1119
    %v1121 = vpop.f32.mrf.mxu0
    %v1122 = vadd.f32 0.0, %v1121
    %1123 = vmatprep.mubr.f32.mxu0 0.0
    %1124 = vmatmul.mubr.f32.gmra.mxu0 %v147
    %v1125 = vpop.f32.mrf.mxu0
    %v1126 = vadd.f32 0.0, %v1125
    %v1127 = vpop.f32.mrf.mxu0
    %v1128 = vadd.f32 0.0, %v1127
    %1129 = vmatprep.mubr.f32.mxu0 0.0
    %1130 = vmatmul.mubr.f32.gmra.mxu0 %v150
    %v1131 = vpop.f32.mrf.mxu0
    %v1132 = vadd.f32 0.0, %v1131
    %v1133 = vpop.f32.mrf.mxu0
    %v1134 = vadd.f32 0.0, %v1133
    %1135 = vmatprep.mubr.f32.mxu0 0.0
    %1136 = vmatmul.mubr.f32.gmra.mxu0 %v153
    %v1137 = vpop.f32.mrf.mxu0
    %v1138 = vadd.f32 0.0, %v1137
    %v1139 = vpop.f32.mrf.mxu0
    %v1140 = vadd.f32 0.0, %v1139
    %1141 = vmatprep.mubr.f32.mxu0 0.0
    %1142 = vmatmul.mubr.f32.gmra.mxu0 %v156
    %v1143 = vpop.f32.mrf.mxu0
    %v1144 = vadd.f32 0.0, %v1143
    %v1145 = vpop.f32.mrf.mxu0
    %v1146 = vadd.f32 0.0, %v1145
    %1147 = vmatprep.mubr.f32.mxu0 0.0
    %1148 = vmatmul.mubr.f32.gmra.mxu0 %v159
    %v1149 = vpop.f32.mrf.mxu0
    %v1150 = vadd.f32 0.0, %v1149
    %v1151 = vpop.f32.mrf.mxu0
    %v1152 = vadd.f32 0.0, %v1151
    %1153 = vmatprep.mubr.f32.mxu0 0.0
    %1154 = vmatmul.mubr.f32.gmra.mxu0 %v162
    %v1155 = vpop.f32.mrf.mxu0
    %v1156 = vadd.f32 0.0, %v1155
    %v1157 = vpop.f32.mrf.mxu0
    %v1158 = vadd.f32 0.0, %v1157
    %1159 = vmatprep.mubr.f32.mxu0 0.0
    %1160 = vmatmul.mubr.f32.gmra.mxu0 %v165
    %v1161 = vpop.f32.mrf.mxu0
    %v1162 = vadd.f32 0.0, %v1161
    %v1163 = vpop.f32.mrf.mxu0
    %v1164 = vadd.f32 0.0, %v1163
    %1165 = vmatprep.mubr.f32.mxu0 0.0
    %1166 = vmatmul.mubr.f32.gmra.mxu0 %v168
    %v1167 = vpop.f32.mrf.mxu0
    %v1168 = vadd.f32 0.0, %v1167
    %v1169 = vpop.f32.mrf.mxu0
    %v1170 = vadd.f32 0.0, %v1169
    %1171 = vmatprep.mubr.f32.mxu0 0.0
    %1172 = vmatmul.mubr.f32.gmra.mxu0 %v171
    %v1173 = vpop.f32.mrf.mxu0
    %v1174 = vadd.f32 0.0, %v1173
    %v1175 = vpop.f32.mrf.mxu0
    %v1176 = vadd.f32 0.0, %v1175
    %1177 = vmatprep.mubr.f32.mxu0 0.0
    %1178 = vmatmul.mubr.f32.gmra.mxu0 %v174
    %v1179 = vpop.f32.mrf.mxu0
    %v1180 = vadd.f32 0.0, %v1179
    %v1181 = vpop.f32.mrf.mxu0
    %v1182 = vadd.f32 0.0, %v1181
    %1183 = vmatprep.mubr.f32.mxu0 0.0
    %1184 = vmatmul.mubr.f32.gmra.mxu0 %v177
    %v1185 = vpop.f32.mrf.mxu0
    %v1186 = vadd.f32 0.0, %v1185
    %v1187 = vpop.f32.mrf.mxu0
    %v1188 = vadd.f32 0.0, %v1187
    %1189 = vmatprep.mubr.f32.mxu0 0.0
    %1190 = vmatmul.mubr.f32.gmra.mxu0 %v542
    %v1191 = vpop.f32.mrf.mxu0
    %v1192 = vadd.f32 0.0, %v1191
    %v1193 = vpop.f32.mrf.mxu0
    %v1194 = vadd.f32 0.0, %v1193
    %1195 = vmatprep.mubr.f32.mxu0 0.0
    %1196 = vmatmul.mubr.f32.gmra.mxu0 %v961
    %v1197 = vpop.f32.mrf.mxu0
    %v1198 = vadd.f32 0.0, %v1197
    %v1199 = vpop.f32.mrf.mxu0
    %v1200 = vadd.f32 0.0, %v1199
    %1201 = vdwg.mxu0
    %v1202 = vadd.f32 %v895, %v1036
    %v1203 = vadd.f32 %v896, %v1038
    %v1204 = vadd.f32 %v897, %v1042
    %v1205 = vadd.f32 %v898, %v1044
    %v1206 = vadd.f32 %v899, %v1048
    %v1207 = vadd.f32 %v900, %v1050
    %v1208 = vadd.f32 %v901, %v1054
    %v1209 = vadd.f32 %v902, %v1056
    %v1210 = vadd.f32 %v903, %v1060
    %v1211 = vadd.f32 %v904, %v1062
    %v1212 = vadd.f32 %v905, %v1066
    %v1213 = vadd.f32 %v906, %v1068
    %v1214 = vadd.f32 %v907, %v1072
    %v1215 = vadd.f32 %v908, %v1074
    %v1216 = vadd.f32 %v909, %v1078
    %v1217 = vadd.f32 %v910, %v1080
    %v1218 = vadd.f32 %v911, %v1084
    %v1219 = vadd.f32 %v912, %v1086
    %v1220 = vadd.f32 %v913, %v1090
    %v1221 = vadd.f32 %v914, %v1092
    %v1222 = vadd.f32 %v915, %v1096
    %v1223 = vadd.f32 %v916, %v1098
    %v1224 = vadd.f32 %v917, %v1102
    %v1225 = vadd.f32 %v918, %v1104
    %v1226 = vadd.f32 %v919, %v1108
    %v1227 = vadd.f32 %v920, %v1110
    %v1228 = vadd.f32 %v921, %v1114
    %v1229 = vadd.f32 %v922, %v1116
    %v1230 = vadd.f32 %v923, %v1120
    %v1231 = vadd.f32 %v924, %v1122
    %v1232 = vadd.f32 %v925, %v1126
    %v1233 = vadd.f32 %v926, %v1128
    %v1234 = vadd.f32 %v927, %v1132
    %v1235 = vadd.f32 %v928, %v1134
    %v1236 = vadd.f32 %v929, %v1138
    %v1237 = vadd.f32 %v930, %v1140
    %v1238 = vadd.f32 %v931, %v1144
    %v1239 = vadd.f32 %v932, %v1146
    %v1240 = vadd.f32 %v933, %v1150
    %v1241 = vadd.f32 %v934, %v1152
    %v1242 = vadd.f32 %v935, %v1156
    %v1243 = vadd.f32 %v936, %v1158
    %v1244 = vadd.f32 %v937, %v1162
    %v1245 = vadd.f32 %v938, %v1164
    %v1246 = vadd.f32 %v939, %v1168
    %v1247 = vadd.f32 %v940, %v1170
    %v1248 = vadd.f32 %v941, %v1174
    %v1249 = vadd.f32 %v942, %v1176
    %v1250 = vadd.f32 %v943, %v1180
    %v1251 = vadd.f32 %v944, %v1182
    %v1252 = vadd.f32 %v945, %v1186
    %v1253 = vadd.f32 %v946, %v1188
    %v1254 = vadd.f32 %v947, %v1192
    %v1255 = vadd.f32 %v948, %v1194
    %v1256 = vadd.f32 %v949, %v1198
    %v1257 = vadd.f32 %v950, %v1200
    %1258 = vst [vmem:[#allocation2] sm:$0xff] %v1202
    %1259 = vst.msk [vmem:[#allocation2 + $0x8] sm:$0xff] %vm420, %v1203
    %1260 = vst [vmem:[#allocation2 + $0x10] sm:$0xff] %v1204
    %1261 = vst.msk [vmem:[#allocation2 + $0x18] sm:$0xff] %vm420, %v1205
    %1262 = vst [vmem:[#allocation2 + $0x20] sm:$0xff] %v1206
    %1263 = vst.msk [vmem:[#allocation2 + $0x28] sm:$0xff] %vm420, %v1207
    %1264 = vst [vmem:[#allocation2 + $0x30] sm:$0xff] %v1208
    %1265 = vst.msk [vmem:[#allocation2 + $0x38] sm:$0xff] %vm420, %v1209
    %1266 = vst [vmem:[#allocation2 + $0x40] sm:$0xff] %v1210
    %1267 = vst.msk [vmem:[#allocation2 + $0x48] sm:$0xff] %vm420, %v1211
    %1268 = vst [vmem:[#allocation2 + $0x50] sm:$0xff] %v1212
    %1269 = vst.msk [vmem:[#allocation2 + $0x58] sm:$0xff] %vm420, %v1213
    %1270 = vst [vmem:[#allocation2 + $0x60] sm:$0xff] %v1214
    %1271 = vst.msk [vmem:[#allocation2 + $0x68] sm:$0xff] %vm420, %v1215
    %1272 = vst [vmem:[#allocation2 + $0x70] sm:$0xff] %v1216
    %1273 = vst.msk [vmem:[#allocation2 + $0x78] sm:$0xff] %vm420, %v1217
    %1274 = vst [vmem:[#allocation2 + $0x80] sm:$0xff] %v1218
    %1275 = vst.msk [vmem:[#allocation2 + $0x88] sm:$0xff] %vm420, %v1219
    %1276 = vst [vmem:[#allocation2 + $0x90] sm:$0xff] %v1220
    %1277 = vst.msk [vmem:[#allocation2 + $0x98] sm:$0xff] %vm420, %v1221
    %1278 = vst [vmem:[#allocation2 + $0xa0] sm:$0xff] %v1222
    %1279 = vst.msk [vmem:[#allocation2 + $0xa8] sm:$0xff] %vm420, %v1223
    %1280 = vst [vmem:[#allocation2 + $0xb0] sm:$0xff] %v1224
    %1281 = vst.msk [vmem:[#allocation2 + $0xb8] sm:$0xff] %vm420, %v1225
    %1282 = vst [vmem:[#allocation2 + $0xc0] sm:$0xff] %v1226
    %1283 = vst.msk [vmem:[#allocation2 + $0xc8] sm:$0xff] %vm420, %v1227
    %1284 = vst [vmem:[#allocation2 + $0xd0] sm:$0xff] %v1228
    %1285 = vst.msk [vmem:[#allocation2 + $0xd8] sm:$0xff] %vm420, %v1229
    %1286 = vst [vmem:[#allocation2 + $0xe0] sm:$0xff] %v1230
    %1287 = vst.msk [vmem:[#allocation2 + $0xe8] sm:$0xff] %vm420, %v1231
    %1288 = vst [vmem:[#allocation2 + $0xf0] sm:$0xff] %v1232
    %1289 = vst.msk [vmem:[#allocation2 + $0xf8] sm:$0xff] %vm420, %v1233
    %1290 = vst [vmem:[#allocation2 + $0x100] sm:$0xff] %v1234
    %1291 = vst.msk [vmem:[#allocation2 + $0x108] sm:$0xff] %vm420, %v1235
    %1292 = vst [vmem:[#allocation2 + $0x110] sm:$0xff] %v1236
    %1293 = vst.msk [vmem:[#allocation2 + $0x118] sm:$0xff] %vm420, %v1237
    %1294 = vst [vmem:[#allocation2 + $0x120] sm:$0xff] %v1238
    %1295 = vst.msk [vmem:[#allocation2 + $0x128] sm:$0xff] %vm420, %v1239
    %1296 = vst [vmem:[#allocation2 + $0x130] sm:$0xff] %v1240
    %1297 = vst.msk [vmem:[#allocation2 + $0x138] sm:$0xff] %vm420, %v1241
    %1298 = vst [vmem:[#allocation2 + $0x140] sm:$0xff] %v1242
    %1299 = vst.msk [vmem:[#allocation2 + $0x148] sm:$0xff] %vm420, %v1243
    %1300 = vst [vmem:[#allocation2 + $0x150] sm:$0xff] %v1244
    %1301 = vst.msk [vmem:[#allocation2 + $0x158] sm:$0xff] %vm420, %v1245
    %1302 = vst [vmem:[#allocation2 + $0x160] sm:$0xff] %v1246
    %1303 = vst.msk [vmem:[#allocation2 + $0x168] sm:$0xff] %vm420, %v1247
    %1304 = vst [vmem:[#allocation2 + $0x170] sm:$0xff] %v1248
    %1305 = vst.msk [vmem:[#allocation2 + $0x178] sm:$0xff] %vm420, %v1249
    %1306 = vst [vmem:[#allocation2 + $0x180] sm:$0xff] %v1250
    %1307 = vst.msk [vmem:[#allocation2 + $0x188] sm:$0xff] %vm420, %v1251
    %1308 = vst [vmem:[#allocation2 + $0x190] sm:$0xff] %v1252
    %1309 = vst.msk [vmem:[#allocation2 + $0x198] sm:$0xff] %vm420, %v1253
    %1310 = vst [vmem:[#allocation2 + $0x1a0] sm:$0xff] %v1254
    %1311 = vst.msk [vmem:[#allocation2 + $0x1a8] sm:$0xff] %vm420, %v1255
    %1312 = vst [vmem:[#allocation2 + $0x1b0] sm:$0xff] %v1256
    %1313 = vst.msk [vmem:[#allocation2 + $0x1b8] sm:$0xff] %vm420, %v1257
    %v1314 = vld [vmem:[#allocation2] sm:$0xff]
    %v1315 = vld [vmem:[#allocation2 + $0x8] sm:$0xff]
    %v1316 = vld [vmem:[#allocation2 + $0x10] sm:$0xff]
    %v1317 = vld [vmem:[#allocation2 + $0x18] sm:$0xff]
    %v1318 = vld [vmem:[#allocation2 + $0x20] sm:$0xff]
    %v1319 = vld [vmem:[#allocation2 + $0x28] sm:$0xff]
    %v1320 = vld [vmem:[#allocation2 + $0x30] sm:$0xff]
    %v1321 = vld [vmem:[#allocation2 + $0x38] sm:$0xff]
    %v1322 = vld [vmem:[#allocation2 + $0x40] sm:$0xff]
    %v1323 = vld [vmem:[#allocation2 + $0x48] sm:$0xff]
    %v1324 = vld [vmem:[#allocation2 + $0x50] sm:$0xff]
    %v1325 = vld [vmem:[#allocation2 + $0x58] sm:$0xff]
    %v1326 = vld [vmem:[#allocation2 + $0x60] sm:$0xff]
    %v1327 = vld [vmem:[#allocation2 + $0x68] sm:$0xff]
    %v1328 = vld [vmem:[#allocation2 + $0x70] sm:$0xff]
    %v1329 = vld [vmem:[#allocation2 + $0x78] sm:$0xff]
    %v1330 = vld [vmem:[#allocation2 + $0x80] sm:$0xff]
    %v1331 = vld [vmem:[#allocation2 + $0x88] sm:$0xff]
    %v1332 = vld [vmem:[#allocation2 + $0x90] sm:$0xff]
    %v1333 = vld [vmem:[#allocation2 + $0x98] sm:$0xff]
    %v1334 = vld [vmem:[#allocation2 + $0xa0] sm:$0xff]
    %v1335 = vld [vmem:[#allocation2 + $0xa8] sm:$0xff]
    %v1336 = vld [vmem:[#allocation2 + $0xb0] sm:$0xff]
    %v1337 = vld [vmem:[#allocation2 + $0xb8] sm:$0xff]
    %v1338 = vld [vmem:[#allocation2 + $0xc0] sm:$0xff]
    %v1339 = vld [vmem:[#allocation2 + $0xc8] sm:$0xff]
    %v1340 = vld [vmem:[#allocation2 + $0xd0] sm:$0xff]
    %v1341 = vld [vmem:[#allocation2 + $0xd8] sm:$0xff]
    %v1342 = vld [vmem:[#allocation2 + $0xe0] sm:$0xff]
    %v1343 = vld [vmem:[#allocation2 + $0xe8] sm:$0xff]
    %v1344 = vld [vmem:[#allocation2 + $0xf0] sm:$0xff]
    %v1345 = vld [vmem:[#allocation2 + $0xf8] sm:$0xff]
    %v1346 = vld [vmem:[#allocation2 + $0x100] sm:$0xff]
    %v1347 = vld [vmem:[#allocation2 + $0x108] sm:$0xff]
    %v1348 = vld [vmem:[#allocation2 + $0x110] sm:$0xff]
    %v1349 = vld [vmem:[#allocation2 + $0x118] sm:$0xff]
    %v1350 = vld [vmem:[#allocation2 + $0x120] sm:$0xff]
    %v1351 = vld [vmem:[#allocation2 + $0x128] sm:$0xff]
    %v1352 = vld [vmem:[#allocation2 + $0x130] sm:$0xff]
    %v1353 = vld [vmem:[#allocation2 + $0x138] sm:$0xff]
    %v1354 = vld [vmem:[#allocation2 + $0x140] sm:$0xff]
    %v1355 = vld [vmem:[#allocation2 + $0x148] sm:$0xff]
    %v1356 = vld [vmem:[#allocation2 + $0x150] sm:$0xff]
    %v1357 = vld [vmem:[#allocation2 + $0x158] sm:$0xff]
    %v1358 = vld [vmem:[#allocation2 + $0x160] sm:$0xff]
    %v1359 = vld [vmem:[#allocation2 + $0x168] sm:$0xff]
    %v1360 = vld [vmem:[#allocation2 + $0x170] sm:$0xff]
    %v1361 = vld [vmem:[#allocation2 + $0x178] sm:$0xff]
    %v1362 = vld [vmem:[#allocation2 + $0x180] sm:$0xff]
    %v1363 = vld [vmem:[#allocation2 + $0x188] sm:$0xff]
    %v1364 = vld [vmem:[#allocation2 + $0x190] sm:$0xff]
    %v1365 = vld [vmem:[#allocation2 + $0x198] sm:$0xff]
    %v1366 = vld [vmem:[#allocation2 + $0x1a0] sm:$0xff]
    %v1367 = vld [vmem:[#allocation2 + $0x1a8] sm:$0xff]
    %v1368 = vld [vmem:[#allocation2 + $0x1b0] sm:$0xff]
    %v1369 = vld [vmem:[#allocation2 + $0x1b8] sm:$0xff]
    %v1370 = vld [vmem:[%s2] sm:$0x3]
    %v1372 = vlaneseq
    %v1373 = vshrl.u32 %v1372, 7
    %v1374 = vsub.s32 0, %v1373
    %v1375 = vrot.slane %v1370, %v1374
    %v1376 = vlaneseq
    %v1377 = vshrl.u32 %v1376, 7
    %v1378 = vsub.s32 1, %v1377
    %v1379 = vrot.slane %v1370, %v1378
    %v1382 = vadd.f32 %v1314, %v1375
    %v1383 = vadd.f32 %v1315, %v1379
    %v1384 = vadd.f32 %v1316, %v1375
    %v1385 = vadd.f32 %v1317, %v1379
    %v1386 = vadd.f32 %v1318, %v1375
    %v1387 = vadd.f32 %v1319, %v1379
    %v1388 = vadd.f32 %v1320, %v1375
    %v1389 = vadd.f32 %v1321, %v1379
    %v1390 = vadd.f32 %v1322, %v1375
    %v1391 = vadd.f32 %v1323, %v1379
    %v1392 = vadd.f32 %v1324, %v1375
    %v1393 = vadd.f32 %v1325, %v1379
    %v1394 = vadd.f32 %v1326, %v1375
    %v1395 = vadd.f32 %v1327, %v1379
    %v1396 = vadd.f32 %v1328, %v1375
    %v1397 = vadd.f32 %v1329, %v1379
    %v1398 = vadd.f32 %v1330, %v1375
    %v1399 = vadd.f32 %v1331, %v1379
    %v1400 = vadd.f32 %v1332, %v1375
    %v1401 = vadd.f32 %v1333, %v1379
    %v1402 = vadd.f32 %v1334, %v1375
    %v1403 = vadd.f32 %v1335, %v1379
    %v1404 = vadd.f32 %v1336, %v1375
    %v1405 = vadd.f32 %v1337, %v1379
    %v1406 = vadd.f32 %v1338, %v1375
    %v1407 = vadd.f32 %v1339, %v1379
    %v1408 = vadd.f32 %v1340, %v1375
    %v1409 = vadd.f32 %v1341, %v1379
    %v1410 = vadd.f32 %v1342, %v1375
    %v1411 = vadd.f32 %v1343, %v1379
    %v1412 = vadd.f32 %v1344, %v1375
    %v1413 = vadd.f32 %v1345, %v1379
    %v1414 = vadd.f32 %v1346, %v1375
    %v1415 = vadd.f32 %v1347, %v1379
    %v1416 = vadd.f32 %v1348, %v1375
    %v1417 = vadd.f32 %v1349, %v1379
    %v1418 = vadd.f32 %v1350, %v1375
    %v1419 = vadd.f32 %v1351, %v1379
    %v1420 = vadd.f32 %v1352, %v1375
    %v1421 = vadd.f32 %v1353, %v1379
    %v1422 = vadd.f32 %v1354, %v1375
    %v1423 = vadd.f32 %v1355, %v1379
    %v1424 = vadd.f32 %v1356, %v1375
    %v1425 = vadd.f32 %v1357, %v1379
    %v1426 = vadd.f32 %v1358, %v1375
    %v1427 = vadd.f32 %v1359, %v1379
    %v1428 = vadd.f32 %v1360, %v1375
    %v1429 = vadd.f32 %v1361, %v1379
    %v1430 = vadd.f32 %v1362, %v1375
    %v1431 = vadd.f32 %v1363, %v1379
    %v1432 = vadd.f32 %v1364, %v1375
    %v1433 = vadd.f32 %v1365, %v1379
    %v1434 = vadd.f32 %v1366, %v1375
    %v1435 = vadd.f32 %v1367, %v1379
    %v1436 = vadd.f32 %v1368, %v1375
    %v1437 = vadd.f32 %v1369, %v1379
    %v1438 = vmax.f32 %v1382, 0.0
    %v1439 = vmax.f32 %v1383, 0.0
    %v1440 = vmax.f32 %v1384, 0.0
    %v1441 = vmax.f32 %v1385, 0.0
    %v1442 = vmax.f32 %v1386, 0.0
    %v1443 = vmax.f32 %v1387, 0.0
    %v1444 = vmax.f32 %v1388, 0.0
    %v1445 = vmax.f32 %v1389, 0.0
    %v1446 = vmax.f32 %v1390, 0.0
    %v1447 = vmax.f32 %v1391, 0.0
    %v1448 = vmax.f32 %v1392, 0.0
    %v1449 = vmax.f32 %v1393, 0.0
    %v1450 = vmax.f32 %v1394, 0.0
    %v1451 = vmax.f32 %v1395, 0.0
    %v1452 = vmax.f32 %v1396, 0.0
    %v1453 = vmax.f32 %v1397, 0.0
    %v1454 = vmax.f32 %v1398, 0.0
    %v1455 = vmax.f32 %v1399, 0.0
    %v1456 = vmax.f32 %v1400, 0.0
    %v1457 = vmax.f32 %v1401, 0.0
    %v1458 = vmax.f32 %v1402, 0.0
    %v1459 = vmax.f32 %v1403, 0.0
    %v1460 = vmax.f32 %v1404, 0.0
    %v1461 = vmax.f32 %v1405, 0.0
    %v1462 = vmax.f32 %v1406, 0.0
    %v1463 = vmax.f32 %v1407, 0.0
    %v1464 = vmax.f32 %v1408, 0.0
    %v1465 = vmax.f32 %v1409, 0.0
    %v1466 = vmax.f32 %v1410, 0.0
    %v1467 = vmax.f32 %v1411, 0.0
    %v1468 = vmax.f32 %v1412, 0.0
    %v1469 = vmax.f32 %v1413, 0.0
    %v1470 = vmax.f32 %v1414, 0.0
    %v1471 = vmax.f32 %v1415, 0.0
    %v1472 = vmax.f32 %v1416, 0.0
    %v1473 = vmax.f32 %v1417, 0.0
    %v1474 = vmax.f32 %v1418, 0.0
    %v1475 = vmax.f32 %v1419, 0.0
    %v1476 = vmax.f32 %v1420, 0.0
    %v1477 = vmax.f32 %v1421, 0.0
    %v1478 = vmax.f32 %v1422, 0.0
    %v1479 = vmax.f32 %v1423, 0.0
    %v1480 = vmax.f32 %v1424, 0.0
    %v1481 = vmax.f32 %v1425, 0.0
    %v1482 = vmax.f32 %v1426, 0.0
    %v1483 = vmax.f32 %v1427, 0.0
    %v1484 = vmax.f32 %v1428, 0.0
    %v1485 = vmax.f32 %v1429, 0.0
    %v1486 = vmax.f32 %v1430, 0.0
    %v1487 = vmax.f32 %v1431, 0.0
    %v1488 = vmax.f32 %v1432, 0.0
    %v1489 = vmax.f32 %v1433, 0.0
    %v1490 = vmax.f32 %v1434, 0.0
    %v1491 = vmax.f32 %v1435, 0.0
    %v1492 = vmax.f32 %v1436, 0.0
    %v1493 = vmax.f32 %v1437, 0.0
    %1494 = vst [vmem:[#allocation2] sm:$0xff] %v1438
    %1495 = vst.msk [vmem:[#allocation2 + $0x8] sm:$0xff] %vm420, %v1439
    %1496 = vst [vmem:[#allocation2 + $0x10] sm:$0xff] %v1440
    %1497 = vst.msk [vmem:[#allocation2 + $0x18] sm:$0xff] %vm420, %v1441
    %1498 = vst [vmem:[#allocation2 + $0x20] sm:$0xff] %v1442
    %1499 = vst.msk [vmem:[#allocation2 + $0x28] sm:$0xff] %vm420, %v1443
    %1500 = vst [vmem:[#allocation2 + $0x30] sm:$0xff] %v1444
    %1501 = vst.msk [vmem:[#allocation2 + $0x38] sm:$0xff] %vm420, %v1445
    %1502 = vst [vmem:[#allocation2 + $0x40] sm:$0xff] %v1446
    %1503 = vst.msk [vmem:[#allocation2 + $0x48] sm:$0xff] %vm420, %v1447
    %1504 = vst [vmem:[#allocation2 + $0x50] sm:$0xff] %v1448
    %1505 = vst.msk [vmem:[#allocation2 + $0x58] sm:$0xff] %vm420, %v1449
    %1506 = vst [vmem:[#allocation2 + $0x60] sm:$0xff] %v1450
    %1507 = vst.msk [vmem:[#allocation2 + $0x68] sm:$0xff] %vm420, %v1451
    %1508 = vst [vmem:[#allocation2 + $0x70] sm:$0xff] %v1452
    %1509 = vst.msk [vmem:[#allocation2 + $0x78] sm:$0xff] %vm420, %v1453
    %1510 = vst [vmem:[#allocation2 + $0x80] sm:$0xff] %v1454
    %1511 = vst.msk [vmem:[#allocation2 + $0x88] sm:$0xff] %vm420, %v1455
    %1512 = vst [vmem:[#allocation2 + $0x90] sm:$0xff] %v1456
    %1513 = vst.msk [vmem:[#allocation2 + $0x98] sm:$0xff] %vm420, %v1457
    %1514 = vst [vmem:[#allocation2 + $0xa0] sm:$0xff] %v1458
    %1515 = vst.msk [vmem:[#allocation2 + $0xa8] sm:$0xff] %vm420, %v1459
    %1516 = vst [vmem:[#allocation2 + $0xb0] sm:$0xff] %v1460
    %1517 = vst.msk [vmem:[#allocation2 + $0xb8] sm:$0xff] %vm420, %v1461
    %1518 = vst [vmem:[#allocation2 + $0xc0] sm:$0xff] %v1462
    %1519 = vst.msk [vmem:[#allocation2 + $0xc8] sm:$0xff] %vm420, %v1463
    %1520 = vst [vmem:[#allocation2 + $0xd0] sm:$0xff] %v1464
    %1521 = vst.msk [vmem:[#allocation2 + $0xd8] sm:$0xff] %vm420, %v1465
    %1522 = vst [vmem:[#allocation2 + $0xe0] sm:$0xff] %v1466
    %1523 = vst.msk [vmem:[#allocation2 + $0xe8] sm:$0xff] %vm420, %v1467
    %1524 = vst [vmem:[#allocation2 + $0xf0] sm:$0xff] %v1468
    %1525 = vst.msk [vmem:[#allocation2 + $0xf8] sm:$0xff] %vm420, %v1469
    %1526 = vst [vmem:[#allocation2 + $0x100] sm:$0xff] %v1470
    %1527 = vst.msk [vmem:[#allocation2 + $0x108] sm:$0xff] %vm420, %v1471
    %1528 = vst [vmem:[#allocation2 + $0x110] sm:$0xff] %v1472
    %1529 = vst.msk [vmem:[#allocation2 + $0x118] sm:$0xff] %vm420, %v1473
    %1530 = vst [vmem:[#allocation2 + $0x120] sm:$0xff] %v1474
    %1531 = vst.msk [vmem:[#allocation2 + $0x128] sm:$0xff] %vm420, %v1475
    %1532 = vst [vmem:[#allocation2 + $0x130] sm:$0xff] %v1476
    %1533 = vst.msk [vmem:[#allocation2 + $0x138] sm:$0xff] %vm420, %v1477
    %1534 = vst [vmem:[#allocation2 + $0x140] sm:$0xff] %v1478
    %1535 = vst.msk [vmem:[#allocation2 + $0x148] sm:$0xff] %vm420, %v1479
    %1536 = vst [vmem:[#allocation2 + $0x150] sm:$0xff] %v1480
    %1537 = vst.msk [vmem:[#allocation2 + $0x158] sm:$0xff] %vm420, %v1481
    %1538 = vst [vmem:[#allocation2 + $0x160] sm:$0xff] %v1482
    %1539 = vst.msk [vmem:[#allocation2 + $0x168] sm:$0xff] %vm420, %v1483
    %1540 = vst [vmem:[#allocation2 + $0x170] sm:$0xff] %v1484
    %1541 = vst.msk [vmem:[#allocation2 + $0x178] sm:$0xff] %vm420, %v1485
    %1542 = vst [vmem:[#allocation2 + $0x180] sm:$0xff] %v1486
    %1543 = vst.msk [vmem:[#allocation2 + $0x188] sm:$0xff] %vm420, %v1487
    %1544 = vst [vmem:[#allocation2 + $0x190] sm:$0xff] %v1488
    %1545 = vst.msk [vmem:[#allocation2 + $0x198] sm:$0xff] %vm420, %v1489
    %1546 = vst [vmem:[#allocation2 + $0x1a0] sm:$0xff] %v1490
    %1547 = vst.msk [vmem:[#allocation2 + $0x1a8] sm:$0xff] %vm420, %v1491
    %1548 = vst [vmem:[#allocation2 + $0x1b0] sm:$0xff] %v1492
    %1549 = vst.msk [vmem:[#allocation2 + $0x1b8] sm:$0xff] %vm420, %v1493
    %1550 = vst [vmem:[#allocation3] sm:$0xff] 0.0
    %1551 = vst.msk [vmem:[#allocation3 + $0x8] sm:$0xff] %vm420, 0.0
    %1552 = vst [vmem:[#allocation3 + $0xf0] sm:$0xff] 0.0
    %1553 = vst.msk [vmem:[#allocation3 + $0xf8] sm:$0xff] %vm420, 0.0
    %v1554 = vld [vmem:[#allocation2] sm:$0xff]
    %v1555 = vld [vmem:[#allocation2 + $0x8] sm:$0xff]
    %v1556 = vld [vmem:[#allocation2 + $0x10] sm:$0xff]
    %v1557 = vld [vmem:[#allocation2 + $0x18] sm:$0xff]
    %v1558 = vmax.f32 %v1554, %v1556
    %v1559 = vmax.f32 %v1555, %v1557
    %1562 = vrot.lane.b32.xlu0 %v1558, 120
    %v1563 = vpop.permute.xlu0 %1562
    %1564 = vrot.lane.b32.xlu0 %v1559, 120
    %v1565 = vpop.permute.xlu0 %1564
    %vm1566 = vcmask 982016
    %v1567 = vsel %vm1566, %v1563, %v1565
    %1570 = vrot.lane.b32.xlu0 %v1558, 88
    %v1571 = vpop.permute.xlu0 %1570
    %vm1573 = vcmask 719872
    %v1574 = vsel %vm1573, %v1565, %v1571
    %v1575 = vmax.f32 %v1558, %v1567
    %v1576 = vmax.f32 %v1559, %v1574
    %1577 = vst [vmem:[#allocation3 + $0x10] sm:$0xff] %v1575
    %1578 = vst.msk [vmem:[#allocation3 + $0x18] sm:$0xff] %vm420, %v1576
    %v1579 = vld [vmem:[#allocation2 + $0x20] sm:$0xff]
    %v1580 = vld [vmem:[#allocation2 + $0x28] sm:$0xff]
    %v1581 = vld [vmem:[#allocation2 + $0x30] sm:$0xff]
    %v1582 = vld [vmem:[#allocation2 + $0x38] sm:$0xff]
    %v1583 = vmax.f32 %v1579, %v1581
    %v1584 = vmax.f32 %v1580, %v1582
    %1587 = vrot.lane.b32.xlu0 %v1583, 120
    %v1588 = vpop.permute.xlu0 %1587
    %1589 = vrot.lane.b32.xlu0 %v1584, 120
    %v1590 = vpop.permute.xlu0 %1589
    %v1591 = vsel %vm1566, %v1588, %v1590
    %1594 = vrot.lane.b32.xlu0 %v1583, 88
    %v1595 = vpop.permute.xlu0 %1594
    %v1597 = vsel %vm1573, %v1590, %v1595
    %v1598 = vmax.f32 %v1583, %v1591
    %v1599 = vmax.f32 %v1584, %v1597
    %1600 = vst [vmem:[#allocation3 + $0x20] sm:$0xff] %v1598
    %1601 = vst.msk [vmem:[#allocation3 + $0x28] sm:$0xff] %vm420, %v1599
    %v1602 = vld [vmem:[#allocation2 + $0x40] sm:$0xff]
    %v1603 = vld [vmem:[#allocation2 + $0x48] sm:$0xff]
    %v1604 = vld [vmem:[#allocation2 + $0x50] sm:$0xff]
    %v1605 = vld [vmem:[#allocation2 + $0x58] sm:$0xff]
    %v1606 = vmax.f32 %v1602, %v1604
    %v1607 = vmax.f32 %v1603, %v1605
    %1610 = vrot.lane.b32.xlu0 %v1606, 120
    %v1611 = vpop.permute.xlu0 %1610
    %1612 = vrot.lane.b32.xlu0 %v1607, 120
    %v1613 = vpop.permute.xlu0 %1612
    %v1614 = vsel %vm1566, %v1611, %v1613
    %1617 = vrot.lane.b32.xlu0 %v1606, 88
    %v1618 = vpop.permute.xlu0 %1617
    %v1620 = vsel %vm1573, %v1613, %v1618
    %v1621 = vmax.f32 %v1606, %v1614
    %v1622 = vmax.f32 %v1607, %v1620
    %1623 = vst [vmem:[#allocation3 + $0x30] sm:$0xff] %v1621
    %1624 = vst.msk [vmem:[#allocation3 + $0x38] sm:$0xff] %vm420, %v1622
    %v1625 = vld [vmem:[#allocation2 + $0x60] sm:$0xff]
    %v1626 = vld [vmem:[#allocation2 + $0x68] sm:$0xff]
    %v1627 = vld [vmem:[#allocation2 + $0x70] sm:$0xff]
    %v1628 = vld [vmem:[#allocation2 + $0x78] sm:$0xff]
    %v1629 = vmax.f32 %v1625, %v1627
    %v1630 = vmax.f32 %v1626, %v1628
    %1633 = vrot.lane.b32.xlu0 %v1629, 120
    %v1634 = vpop.permute.xlu0 %1633
    %1635 = vrot.lane.b32.xlu0 %v1630, 120
    %v1636 = vpop.permute.xlu0 %1635
    %v1637 = vsel %vm1566, %v1634, %v1636
    %1640 = vrot.lane.b32.xlu0 %v1629, 88
    %v1641 = vpop.permute.xlu0 %1640
    %v1643 = vsel %vm1573, %v1636, %v1641
    %v1644 = vmax.f32 %v1629, %v1637
    %v1645 = vmax.f32 %v1630, %v1643
    %1646 = vst [vmem:[#allocation3 + $0x40] sm:$0xff] %v1644
    %1647 = vst.msk [vmem:[#allocation3 + $0x48] sm:$0xff] %vm420, %v1645
    %v1648 = vld [vmem:[#allocation2 + $0x80] sm:$0xff]
    %v1649 = vld [vmem:[#allocation2 + $0x88] sm:$0xff]
    %v1650 = vld [vmem:[#allocation2 + $0x90] sm:$0xff]
    %v1651 = vld [vmem:[#allocation2 + $0x98] sm:$0xff]
    %v1652 = vmax.f32 %v1648, %v1650
    %v1653 = vmax.f32 %v1649, %v1651
    %1656 = vrot.lane.b32.xlu0 %v1652, 120
    %v1657 = vpop.permute.xlu0 %1656
    %1658 = vrot.lane.b32.xlu0 %v1653, 120
    %v1659 = vpop.permute.xlu0 %1658
    %v1660 = vsel %vm1566, %v1657, %v1659
    %1663 = vrot.lane.b32.xlu0 %v1652, 88
    %v1664 = vpop.permute.xlu0 %1663
    %v1666 = vsel %vm1573, %v1659, %v1664
    %v1667 = vmax.f32 %v1652, %v1660
    %v1668 = vmax.f32 %v1653, %v1666
    %1669 = vst [vmem:[#allocation3 + $0x50] sm:$0xff] %v1667
    %1670 = vst.msk [vmem:[#allocation3 + $0x58] sm:$0xff] %vm420, %v1668
    %v1671 = vld [vmem:[#allocation2 + $0xa0] sm:$0xff]
    %v1672 = vld [vmem:[#allocation2 + $0xa8] sm:$0xff]
    %v1673 = vld [vmem:[#allocation2 + $0xb0] sm:$0xff]
    %v1674 = vld [vmem:[#allocation2 + $0xb8] sm:$0xff]
    %v1675 = vmax.f32 %v1671, %v1673
    %v1676 = vmax.f32 %v1672, %v1674
    %1679 = vrot.lane.b32.xlu0 %v1675, 120
    %v1680 = vpop.permute.xlu0 %1679
    %1681 = vrot.lane.b32.xlu0 %v1676, 120
    %v1682 = vpop.permute.xlu0 %1681
    %v1683 = vsel %vm1566, %v1680, %v1682
    %1686 = vrot.lane.b32.xlu0 %v1675, 88
    %v1687 = vpop.permute.xlu0 %1686
    %v1689 = vsel %vm1573, %v1682, %v1687
    %v1690 = vmax.f32 %v1675, %v1683
    %v1691 = vmax.f32 %v1676, %v1689
    %1692 = vst [vmem:[#allocation3 + $0x60] sm:$0xff] %v1690
    %1693 = vst.msk [vmem:[#allocation3 + $0x68] sm:$0xff] %vm420, %v1691
    %v1694 = vld [vmem:[#allocation2 + $0xc0] sm:$0xff]
    %v1695 = vld [vmem:[#allocation2 + $0xc8] sm:$0xff]
    %v1696 = vld [vmem:[#allocation2 + $0xd0] sm:$0xff]
    %v1697 = vld [vmem:[#allocation2 + $0xd8] sm:$0xff]
    %v1698 = vmax.f32 %v1694, %v1696
    %v1699 = vmax.f32 %v1695, %v1697
    %1702 = vrot.lane.b32.xlu0 %v1698, 120
    %v1703 = vpop.permute.xlu0 %1702
    %1704 = vrot.lane.b32.xlu0 %v1699, 120
    %v1705 = vpop.permute.xlu0 %1704
    %v1706 = vsel %vm1566, %v1703, %v1705
    %1709 = vrot.lane.b32.xlu0 %v1698, 88
    %v1710 = vpop.permute.xlu0 %1709
    %v1712 = vsel %vm1573, %v1705, %v1710
    %v1713 = vmax.f32 %v1698, %v1706
    %v1714 = vmax.f32 %v1699, %v1712
    %1715 = vst [vmem:[#allocation3 + $0x70] sm:$0xff] %v1713
    %1716 = vst.msk [vmem:[#allocation3 + $0x78] sm:$0xff] %vm420, %v1714
    %v1717 = vld [vmem:[#allocation2 + $0xe0] sm:$0xff]
    %v1718 = vld [vmem:[#allocation2 + $0xe8] sm:$0xff]
    %v1719 = vld [vmem:[#allocation2 + $0xf0] sm:$0xff]
    %v1720 = vld [vmem:[#allocation2 + $0xf8] sm:$0xff]
    %v1721 = vmax.f32 %v1717, %v1719
    %v1722 = vmax.f32 %v1718, %v1720
    %1725 = vrot.lane.b32.xlu0 %v1721, 120
    %v1726 = vpop.permute.xlu0 %1725
    %1727 = vrot.lane.b32.xlu0 %v1722, 120
    %v1728 = vpop.permute.xlu0 %1727
    %v1729 = vsel %vm1566, %v1726, %v1728
    %1732 = vrot.lane.b32.xlu0 %v1721, 88
    %v1733 = vpop.permute.xlu0 %1732
    %v1735 = vsel %vm1573, %v1728, %v1733
    %v1736 = vmax.f32 %v1721, %v1729
    %v1737 = vmax.f32 %v1722, %v1735
    %1738 = vst [vmem:[#allocation3 + $0x80] sm:$0xff] %v1736
    %1739 = vst.msk [vmem:[#allocation3 + $0x88] sm:$0xff] %vm420, %v1737
    %v1740 = vld [vmem:[#allocation2 + $0x100] sm:$0xff]
    %v1741 = vld [vmem:[#allocation2 + $0x108] sm:$0xff]
    %v1742 = vld [vmem:[#allocation2 + $0x110] sm:$0xff]
    %v1743 = vld [vmem:[#allocation2 + $0x118] sm:$0xff]
    %v1744 = vmax.f32 %v1740, %v1742
    %v1745 = vmax.f32 %v1741, %v1743
    %1748 = vrot.lane.b32.xlu0 %v1744, 120
    %v1749 = vpop.permute.xlu0 %1748
    %1750 = vrot.lane.b32.xlu0 %v1745, 120
    %v1751 = vpop.permute.xlu0 %1750
    %v1752 = vsel %vm1566, %v1749, %v1751
    %1755 = vrot.lane.b32.xlu0 %v1744, 88
    %v1756 = vpop.permute.xlu0 %1755
    %v1758 = vsel %vm1573, %v1751, %v1756
    %v1759 = vmax.f32 %v1744, %v1752
    %v1760 = vmax.f32 %v1745, %v1758
    %1761 = vst [vmem:[#allocation3 + $0x90] sm:$0xff] %v1759
    %1762 = vst.msk [vmem:[#allocation3 + $0x98] sm:$0xff] %vm420, %v1760
    %v1763 = vld [vmem:[#allocation2 + $0x120] sm:$0xff]
    %v1764 = vld [vmem:[#allocation2 + $0x128] sm:$0xff]
    %v1765 = vld [vmem:[#allocation2 + $0x130] sm:$0xff]
    %v1766 = vld [vmem:[#allocation2 + $0x138] sm:$0xff]
    %v1767 = vmax.f32 %v1763, %v1765
    %v1768 = vmax.f32 %v1764, %v1766
    %1771 = vrot.lane.b32.xlu0 %v1767, 120
    %v1772 = vpop.permute.xlu0 %1771
    %1773 = vrot.lane.b32.xlu0 %v1768, 120
    %v1774 = vpop.permute.xlu0 %1773
    %v1775 = vsel %vm1566, %v1772, %v1774
    %1778 = vrot.lane.b32.xlu0 %v1767, 88
    %v1779 = vpop.permute.xlu0 %1778
    %v1781 = vsel %vm1573, %v1774, %v1779
    %v1782 = vmax.f32 %v1767, %v1775
    %v1783 = vmax.f32 %v1768, %v1781
    %1784 = vst [vmem:[#allocation3 + $0xa0] sm:$0xff] %v1782
    %1785 = vst.msk [vmem:[#allocation3 + $0xa8] sm:$0xff] %vm420, %v1783
    %v1786 = vld [vmem:[#allocation2 + $0x140] sm:$0xff]
    %v1787 = vld [vmem:[#allocation2 + $0x148] sm:$0xff]
    %v1788 = vld [vmem:[#allocation2 + $0x150] sm:$0xff]
    %v1789 = vld [vmem:[#allocation2 + $0x158] sm:$0xff]
    %v1790 = vmax.f32 %v1786, %v1788
    %v1791 = vmax.f32 %v1787, %v1789
    %1794 = vrot.lane.b32.xlu0 %v1790, 120
    %v1795 = vpop.permute.xlu0 %1794
    %1796 = vrot.lane.b32.xlu0 %v1791, 120
    %v1797 = vpop.permute.xlu0 %1796
    %v1798 = vsel %vm1566, %v1795, %v1797
    %1801 = vrot.lane.b32.xlu0 %v1790, 88
    %v1802 = vpop.permute.xlu0 %1801
    %v1804 = vsel %vm1573, %v1797, %v1802
    %v1805 = vmax.f32 %v1790, %v1798
    %v1806 = vmax.f32 %v1791, %v1804
    %1807 = vst [vmem:[#allocation3 + $0xb0] sm:$0xff] %v1805
    %1808 = vst.msk [vmem:[#allocation3 + $0xb8] sm:$0xff] %vm420, %v1806
    %v1809 = vld [vmem:[#allocation2 + $0x160] sm:$0xff]
    %v1810 = vld [vmem:[#allocation2 + $0x168] sm:$0xff]
    %v1811 = vld [vmem:[#allocation2 + $0x170] sm:$0xff]
    %v1812 = vld [vmem:[#allocation2 + $0x178] sm:$0xff]
    %v1813 = vmax.f32 %v1809, %v1811
    %v1814 = vmax.f32 %v1810, %v1812
    %1817 = vrot.lane.b32.xlu0 %v1813, 120
    %v1818 = vpop.permute.xlu0 %1817
    %1819 = vrot.lane.b32.xlu0 %v1814, 120
    %v1820 = vpop.permute.xlu0 %1819
    %v1821 = vsel %vm1566, %v1818, %v1820
    %1824 = vrot.lane.b32.xlu0 %v1813, 88
    %v1825 = vpop.permute.xlu0 %1824
    %v1827 = vsel %vm1573, %v1820, %v1825
    %v1828 = vmax.f32 %v1813, %v1821
    %v1829 = vmax.f32 %v1814, %v1827
    %1830 = vst [vmem:[#allocation3 + $0xc0] sm:$0xff] %v1828
    %1831 = vst.msk [vmem:[#allocation3 + $0xc8] sm:$0xff] %vm420, %v1829
    %v1832 = vld [vmem:[#allocation2 + $0x180] sm:$0xff]
    %v1833 = vld [vmem:[#allocation2 + $0x188] sm:$0xff]
    %v1834 = vld [vmem:[#allocation2 + $0x190] sm:$0xff]
    %v1835 = vld [vmem:[#allocation2 + $0x198] sm:$0xff]
    %v1836 = vmax.f32 %v1832, %v1834
    %v1837 = vmax.f32 %v1833, %v1835
    %1840 = vrot.lane.b32.xlu0 %v1836, 120
    %v1841 = vpop.permute.xlu0 %1840
    %1842 = vrot.lane.b32.xlu0 %v1837, 120
    %v1843 = vpop.permute.xlu0 %1842
    %v1844 = vsel %vm1566, %v1841, %v1843
    %1847 = vrot.lane.b32.xlu0 %v1836, 88
    %v1848 = vpop.permute.xlu0 %1847
    %v1850 = vsel %vm1573, %v1843, %v1848
    %v1851 = vmax.f32 %v1836, %v1844
    %v1852 = vmax.f32 %v1837, %v1850
    %1853 = vst [vmem:[#allocation3 + $0xd0] sm:$0xff] %v1851
    %1854 = vst.msk [vmem:[#allocation3 + $0xd8] sm:$0xff] %vm420, %v1852
    %v1855 = vld [vmem:[#allocation2 + $0x1a0] sm:$0xff]
    %v1856 = vld [vmem:[#allocation2 + $0x1a8] sm:$0xff]
    %v1857 = vld [vmem:[#allocation2 + $0x1b0] sm:$0xff]
    %v1858 = vld [vmem:[#allocation2 + $0x1b8] sm:$0xff]
    %v1859 = vmax.f32 %v1855, %v1857
    %v1860 = vmax.f32 %v1856, %v1858
    %1863 = vrot.lane.b32.xlu0 %v1859, 120
    %v1864 = vpop.permute.xlu0 %1863
    %1865 = vrot.lane.b32.xlu0 %v1860, 120
    %v1866 = vpop.permute.xlu0 %1865
    %v1867 = vsel %vm1566, %v1864, %v1866
    %1870 = vrot.lane.b32.xlu0 %v1859, 88
    %v1871 = vpop.permute.xlu0 %1870
    %v1873 = vsel %vm1573, %v1866, %v1871
    %v1874 = vmax.f32 %v1859, %v1867
    %v1875 = vmax.f32 %v1860, %v1873
    %1876 = vst [vmem:[#allocation3 + $0xe0] sm:$0xff] %v1874
    %1877 = vst.msk [vmem:[#allocation3 + $0xe8] sm:$0xff] %vm420, %v1875
    %v1878 = vld [vmem:[#allocation3] sm:$0xff]
    %v1879 = vld [vmem:[#allocation3 + $0x8] sm:$0xff]
    %v1880 = vld [vmem:[#allocation3 + $0x10] sm:$0xff]
    %v1881 = vld [vmem:[#allocation3 + $0x18] sm:$0xff]
    %v1882 = vld [vmem:[#allocation3 + $0x20] sm:$0xff]
    %v1883 = vld [vmem:[#allocation3 + $0x28] sm:$0xff]
    %v1884 = vld [vmem:[#allocation3 + $0x30] sm:$0xff]
    %v1885 = vld [vmem:[#allocation3 + $0x38] sm:$0xff]
    %v1886 = vld [vmem:[#allocation3 + $0x40] sm:$0xff]
    %v1887 = vld [vmem:[#allocation3 + $0x48] sm:$0xff]
    %v1888 = vld [vmem:[#allocation3 + $0x50] sm:$0xff]
    %v1889 = vld [vmem:[#allocation3 + $0x58] sm:$0xff]
    %v1890 = vld [vmem:[#allocation3 + $0x60] sm:$0xff]
    %v1891 = vld [vmem:[#allocation3 + $0x68] sm:$0xff]
    %v1892 = vld [vmem:[#allocation3 + $0x70] sm:$0xff]
    %v1893 = vld [vmem:[#allocation3 + $0x78] sm:$0xff]
    %v1894 = vld [vmem:[#allocation3 + $0x80] sm:$0xff]
    %v1895 = vld [vmem:[#allocation3 + $0x88] sm:$0xff]
    %v1896 = vld [vmem:[#allocation3 + $0x90] sm:$0xff]
    %v1897 = vld [vmem:[#allocation3 + $0x98] sm:$0xff]
    %v1898 = vld [vmem:[#allocation3 + $0xa0] sm:$0xff]
    %v1899 = vld [vmem:[#allocation3 + $0xa8] sm:$0xff]
    %v1900 = vld [vmem:[#allocation3 + $0xb0] sm:$0xff]
    %v1901 = vld [vmem:[#allocation3 + $0xb8] sm:$0xff]
    %v1902 = vld [vmem:[#allocation3 + $0xc0] sm:$0xff]
    %v1903 = vld [vmem:[#allocation3 + $0xc8] sm:$0xff]
    %v1904 = vld [vmem:[#allocation3 + $0xd0] sm:$0xff]
    %v1905 = vld [vmem:[#allocation3 + $0xd8] sm:$0xff]
    %v1906 = vld [vmem:[#allocation5] sm:$0xff]
    %v1907 = vld [vmem:[#allocation5 + $0x8] sm:$0xff]
    %v1908 = vld [vmem:[#allocation5 + $0x10] sm:$0xff]
    %v1909 = vld [vmem:[#allocation5 + $0x18] sm:$0xff]
    %v1910 = vld [vmem:[#allocation5 + $0x20] sm:$0xff]
    %v1911 = vld [vmem:[#allocation5 + $0x28] sm:$0xff]
    %v1912 = vld [vmem:[#allocation5 + $0x30] sm:$0xff]
    %v1913 = vld [vmem:[#allocation5 + $0x38] sm:$0xff]
    %v1914 = vld [vmem:[#allocation5 + $0x40] sm:$0xff]
    %v1915 = vld [vmem:[#allocation5 + $0x48] sm:$0xff]
    %v1916 = vld [vmem:[#allocation5 + $0x50] sm:$0xff]
    %v1917 = vld [vmem:[#allocation5 + $0x58] sm:$0xff]
    %v1918 = vld [vmem:[#allocation5 + $0x60] sm:$0xff]
    %v1919 = vld [vmem:[#allocation5 + $0x68] sm:$0xff]
    %v1920 = vld [vmem:[#allocation5 + $0x70] sm:$0xff]
    %v1921 = vld [vmem:[#allocation5 + $0x78] sm:$0xff]
    %v1922 = vld [vmem:[#allocation5 + $0x80] sm:$0xff]
    %v1923 = vld [vmem:[#allocation5 + $0x88] sm:$0xff]
    %v1924 = vld [vmem:[#allocation5 + $0x90] sm:$0xff]
    %v1925 = vld [vmem:[#allocation5 + $0x98] sm:$0xff]
    %v1926 = vld [vmem:[#allocation5 + $0xa0] sm:$0xff]
    %v1927 = vld [vmem:[#allocation5 + $0xa8] sm:$0xff]
    %v1928 = vld [vmem:[#allocation5 + $0xb0] sm:$0xff]
    %v1929 = vld [vmem:[#allocation5 + $0xb8] sm:$0xff]
    %v1930 = vld [vmem:[#allocation5 + $0xc0] sm:$0xff]
    %v1931 = vld [vmem:[#allocation5 + $0xc8] sm:$0xff]
    %v1932 = vld [vmem:[#allocation5 + $0xd0] sm:$0xff]
    %v1933 = vld [vmem:[#allocation5 + $0xd8] sm:$0xff]
    %v1934 = vld [vmem:[#allocation5 + $0xe0] sm:$0xff]
    %v1935 = vld [vmem:[#allocation5 + $0xe8] sm:$0xff]
    %v1936 = vld [vmem:[#allocation5 + $0xf0] sm:$0xff]
    %v1937 = vld [vmem:[#allocation5 + $0xf8] sm:$0xff]
    %v1938 = vld [vmem:[#allocation5 + $0x100] sm:$0xff]
    %v1939 = vld [vmem:[#allocation5 + $0x108] sm:$0xff]
    %v1940 = vld [vmem:[#allocation5 + $0x110] sm:$0xff]
    %v1941 = vld [vmem:[#allocation5 + $0x118] sm:$0xff]
    %v1942 = vld [vmem:[#allocation5 + $0x120] sm:$0xff]
    %v1943 = vld [vmem:[#allocation5 + $0x128] sm:$0xff]
    %v1944 = vld [vmem:[#allocation5 + $0x130] sm:$0xff]
    %v1945 = vld [vmem:[#allocation5 + $0x138] sm:$0xff]
    %v1946 = vld [vmem:[#allocation5 + $0x140] sm:$0xff]
    %v1947 = vld [vmem:[#allocation5 + $0x148] sm:$0xff]
    %v1948 = vld [vmem:[#allocation5 + $0x150] sm:$0xff]
    %v1949 = vld [vmem:[#allocation5 + $0x158] sm:$0xff]
    %v1950 = vld [vmem:[#allocation5 + $0x160] sm:$0xff]
    %v1951 = vld [vmem:[#allocation5 + $0x168] sm:$0xff]
    %v1952 = vld [vmem:[#allocation5 + $0x170] sm:$0xff]
    %v1953 = vld [vmem:[#allocation5 + $0x178] sm:$0xff]
    %v1954 = vld [vmem:[#allocation5 + $0x180] sm:$0xff]
    %v1955 = vld [vmem:[#allocation5 + $0x188] sm:$0xff]
    %v1956 = vld [vmem:[#allocation5 + $0x190] sm:$0xff]
    %v1957 = vld [vmem:[#allocation5 + $0x198] sm:$0xff]
    %v1958 = vld [vmem:[#allocation5 + $0x1a0] sm:$0xff]
    %v1959 = vld [vmem:[#allocation5 + $0x1a8] sm:$0xff]
    %v1960 = vld [vmem:[#allocation5 + $0x1b0] sm:$0xff]
    %v1961 = vld [vmem:[#allocation5 + $0x1b8] sm:$0xff]
    %v1963 = vsel %vm420, %v1879, 0
    %v1966 = vsel %vm420, %v1881, 0
    %v1969 = vsel %vm420, %v1883, 0
    %v1972 = vsel %vm420, %v1885, 0
    %v1975 = vsel %vm420, %v1887, 0
    %v1978 = vsel %vm420, %v1889, 0
    %v1981 = vsel %vm420, %v1891, 0
    %v1984 = vsel %vm420, %v1893, 0
    %v1987 = vsel %vm420, %v1895, 0
    %v1990 = vsel %vm420, %v1897, 0
    %v1993 = vsel %vm420, %v1899, 0
    %v1996 = vsel %vm420, %v1901, 0
    %v1999 = vsel %vm420, %v1903, 0
    %v2002 = vsel %vm420, %v1905, 0
    %2004 = vmatprep.subr.mxu0 %v1937
    %2005 = vmatpush1.msra.mxu0 %v1936
    %2006 = vmatprep.subr.mxu0 %v1935
    %2007 = vmatpush1.msra.mxu0 %v1934
    %2008 = vmatprep.subr.mxu0 %v1933
    %2009 = vmatpush1.msra.mxu0 %v1932
    %2010 = vmatprep.subr.mxu0 %v1931
    %2011 = vmatpush1.msra.mxu0 %v1930
    %2012 = vmatprep.subr.mxu0 %v1929
    %2013 = vmatpush1.msra.mxu0 %v1928
    %2014 = vmatprep.subr.mxu0 %v1927
    %2015 = vmatpush1.msra.mxu0 %v1926
    %2016 = vmatprep.subr.mxu0 %v1925
    %2017 = vmatpush1.msra.mxu0 %v1924
    %2018 = vmatprep.subr.mxu0 %v1923
    %2019 = vmatpush1.msra.mxu0 %v1922
    %2020 = vmatprep.subr.mxu0 %v1921
    %2021 = vmatpush1.msra.mxu0 %v1920
    %2022 = vmatprep.subr.mxu0 %v1919
    %2023 = vmatpush1.msra.mxu0 %v1918
    %2024 = vmatprep.subr.mxu0 %v1917
    %2025 = vmatpush1.msra.mxu0 %v1916
    %2026 = vmatprep.subr.mxu0 %v1915
    %2027 = vmatpush1.msra.mxu0 %v1914
    %2028 = vmatprep.subr.mxu0 %v1913
    %2029 = vmatpush1.msra.mxu0 %v1912
    %2030 = vmatprep.subr.mxu0 %v1911
    %2031 = vmatpush1.msra.mxu0 %v1910
    %2032 = vmatprep.subr.mxu0 %v1909
    %2033 = vmatpush1.msra.mxu0 %v1908
    %2034 = vmatprep.subr.mxu0 %v1907
    %2035 = vmatpush1.msra.mxu0 %v1906
    %2036 = vmatprep.subr.mxu0 0.0
    %2037 = vmatpush2.msra.mxu0 0.0
    %2038 = vmatprep.subr.mxu0 0.0
    %2039 = vmatpush2.msra.mxu0 0.0
    %2040 = vmatprep.subr.mxu0 0.0
    %2041 = vmatpush2.msra.mxu0 0.0
    %2042 = vmatprep.subr.mxu0 0.0
    %2043 = vmatpush2.msra.mxu0 0.0
    %2044 = vmatprep.subr.mxu0 %v1961
    %2045 = vmatpush2.msra.mxu0 %v1960
    %2046 = vmatprep.subr.mxu0 %v1959
    %2047 = vmatpush2.msra.mxu0 %v1958
    %2048 = vmatprep.subr.mxu0 %v1957
    %2049 = vmatpush2.msra.mxu0 %v1956
    %2050 = vmatprep.subr.mxu0 %v1955
    %2051 = vmatpush2.msra.mxu0 %v1954
    %2052 = vmatprep.subr.mxu0 %v1953
    %2053 = vmatpush2.msra.mxu0 %v1952
    %2054 = vmatprep.subr.mxu0 %v1951
    %2055 = vmatpush2.msra.mxu0 %v1950
    %2056 = vmatprep.subr.mxu0 %v1949
    %2057 = vmatpush2.msra.mxu0 %v1948
    %2058 = vmatprep.subr.mxu0 %v1947
    %2059 = vmatpush2.msra.mxu0 %v1946
    %2060 = vmatprep.subr.mxu0 %v1945
    %2061 = vmatpush2.msra.mxu0 %v1944
    %2062 = vmatprep.subr.mxu0 %v1943
    %2063 = vmatpush2.msra.mxu0 %v1942
    %2064 = vmatprep.subr.mxu0 %v1941
    %2065 = vmatpush2.msra.mxu0 %v1940
    %2066 = vmatprep.subr.mxu0 %v1939
    %2067 = vmatpush2.msra.mxu0 %v1938
    %2068 = vmatprep.mubr.f32.mxu0 %v1963
    %2069 = vmatmul.mubr.f32.gmra.mxu0 %v1878
    %v2070 = vpop.f32.mrf.mxu0
    %v2071 = vadd.f32 0.0, %v2070
    %v2072 = vpop.f32.mrf.mxu0
    %v2073 = vadd.f32 0.0, %v2072
    %2074 = vmatprep.mubr.f32.mxu0 %v1966
    %2075 = vmatmul.mubr.f32.gmra.mxu0 %v1880
    %v2076 = vpop.f32.mrf.mxu0
    %v2077 = vadd.f32 0.0, %v2076
    %v2078 = vpop.f32.mrf.mxu0
    %v2079 = vadd.f32 0.0, %v2078
    %2080 = vmatprep.mubr.f32.mxu0 %v1969
    %2081 = vmatmul.mubr.f32.gmra.mxu0 %v1882
    %v2082 = vpop.f32.mrf.mxu0
    %v2083 = vadd.f32 0.0, %v2082
    %v2084 = vpop.f32.mrf.mxu0
    %v2085 = vadd.f32 0.0, %v2084
    %2086 = vmatprep.mubr.f32.mxu0 %v1972
    %2087 = vmatmul.mubr.f32.gmra.mxu0 %v1884
    %v2088 = vpop.f32.mrf.mxu0
    %v2089 = vadd.f32 0.0, %v2088
    %v2090 = vpop.f32.mrf.mxu0
    %v2091 = vadd.f32 0.0, %v2090
    %2092 = vmatprep.mubr.f32.mxu0 %v1975
    %2093 = vmatmul.mubr.f32.gmra.mxu0 %v1886
    %v2094 = vpop.f32.mrf.mxu0
    %v2095 = vadd.f32 0.0, %v2094
    %v2096 = vpop.f32.mrf.mxu0
    %v2097 = vadd.f32 0.0, %v2096
    %2098 = vmatprep.mubr.f32.mxu0 %v1978
    %2099 = vmatmul.mubr.f32.gmra.mxu0 %v1888
    %v2100 = vpop.f32.mrf.mxu0
    %v2101 = vadd.f32 0.0, %v2100
    %v2102 = vpop.f32.mrf.mxu0
    %v2103 = vadd.f32 0.0, %v2102
    %2104 = vmatprep.mubr.f32.mxu0 %v1981
    %2105 = vmatmul.mubr.f32.gmra.mxu0 %v1890
    %v2106 = vpop.f32.mrf.mxu0
    %v2107 = vadd.f32 0.0, %v2106
    %v2108 = vpop.f32.mrf.mxu0
    %v2109 = vadd.f32 0.0, %v2108
    %2110 = vmatprep.mubr.f32.mxu0 %v1984
    %2111 = vmatmul.mubr.f32.gmra.mxu0 %v1892
    %v2112 = vpop.f32.mrf.mxu0
    %v2113 = vadd.f32 0.0, %v2112
    %v2114 = vpop.f32.mrf.mxu0
    %v2115 = vadd.f32 0.0, %v2114
    %2116 = vmatprep.mubr.f32.mxu0 %v1987
    %2117 = vmatmul.mubr.f32.gmra.mxu0 %v1894
    %v2118 = vpop.f32.mrf.mxu0
    %v2119 = vadd.f32 0.0, %v2118
    %v2120 = vpop.f32.mrf.mxu0
    %v2121 = vadd.f32 0.0, %v2120
    %2122 = vmatprep.mubr.f32.mxu0 %v1990
    %2123 = vmatmul.mubr.f32.gmra.mxu0 %v1896
    %v2124 = vpop.f32.mrf.mxu0
    %v2125 = vadd.f32 0.0, %v2124
    %v2126 = vpop.f32.mrf.mxu0
    %v2127 = vadd.f32 0.0, %v2126
    %2128 = vmatprep.mubr.f32.mxu0 %v1993
    %2129 = vmatmul.mubr.f32.gmra.mxu0 %v1898
    %v2130 = vpop.f32.mrf.mxu0
    %v2131 = vadd.f32 0.0, %v2130
    %v2132 = vpop.f32.mrf.mxu0
    %v2133 = vadd.f32 0.0, %v2132
    %2134 = vmatprep.mubr.f32.mxu0 %v1996
    %2135 = vmatmul.mubr.f32.gmra.mxu0 %v1900
    %v2136 = vpop.f32.mrf.mxu0
    %v2137 = vadd.f32 0.0, %v2136
    %v2138 = vpop.f32.mrf.mxu0
    %v2139 = vadd.f32 0.0, %v2138
    %2140 = vmatprep.mubr.f32.mxu0 %v1999
    %2141 = vmatmul.mubr.f32.gmra.mxu0 %v1902
    %v2142 = vpop.f32.mrf.mxu0
    %v2143 = vadd.f32 0.0, %v2142
    %v2144 = vpop.f32.mrf.mxu0
    %v2145 = vadd.f32 0.0, %v2144
    %2146 = vmatprep.mubr.f32.mxu0 %v2002
    %2147 = vmatmul.mubr.f32.gmra.mxu0 %v1904
    %v2148 = vpop.f32.mrf.mxu0
    %v2149 = vadd.f32 0.0, %v2148
    %v2150 = vpop.f32.mrf.mxu0
    %v2151 = vadd.f32 0.0, %v2150
    %2152 = vdwg.mxu0
    %2153 = vst [vmem:[#allocation4] sm:$0xff] %v2071
    %2154 = vst.msk [vmem:[#allocation4 + $0x8] sm:$0xff] %vm420, %v2073
    %2155 = vst [vmem:[#allocation4 + $0x10] sm:$0xff] %v2077
    %2156 = vst.msk [vmem:[#allocation4 + $0x18] sm:$0xff] %vm420, %v2079
    %2157 = vst [vmem:[#allocation4 + $0x20] sm:$0xff] %v2083
    %2158 = vst.msk [vmem:[#allocation4 + $0x28] sm:$0xff] %vm420, %v2085
    %2159 = vst [vmem:[#allocation4 + $0x30] sm:$0xff] %v2089
    %2160 = vst.msk [vmem:[#allocation4 + $0x38] sm:$0xff] %vm420, %v2091
    %2161 = vst [vmem:[#allocation4 + $0x40] sm:$0xff] %v2095
    %2162 = vst.msk [vmem:[#allocation4 + $0x48] sm:$0xff] %vm420, %v2097
    %2163 = vst [vmem:[#allocation4 + $0x50] sm:$0xff] %v2101
    %2164 = vst.msk [vmem:[#allocation4 + $0x58] sm:$0xff] %vm420, %v2103
    %2165 = vst [vmem:[#allocation4 + $0x60] sm:$0xff] %v2107
    %2166 = vst.msk [vmem:[#allocation4 + $0x68] sm:$0xff] %vm420, %v2109
    %2167 = vst [vmem:[#allocation4 + $0x70] sm:$0xff] %v2113
    %2168 = vst.msk [vmem:[#allocation4 + $0x78] sm:$0xff] %vm420, %v2115
    %2169 = vst [vmem:[#allocation4 + $0x80] sm:$0xff] %v2119
    %2170 = vst.msk [vmem:[#allocation4 + $0x88] sm:$0xff] %vm420, %v2121
    %2171 = vst [vmem:[#allocation4 + $0x90] sm:$0xff] %v2125
    %2172 = vst.msk [vmem:[#allocation4 + $0x98] sm:$0xff] %vm420, %v2127
    %2173 = vst [vmem:[#allocation4 + $0xa0] sm:$0xff] %v2131
    %2174 = vst.msk [vmem:[#allocation4 + $0xa8] sm:$0xff] %vm420, %v2133
    %2175 = vst [vmem:[#allocation4 + $0xb0] sm:$0xff] %v2137
    %2176 = vst.msk [vmem:[#allocation4 + $0xb8] sm:$0xff] %vm420, %v2139
    %2177 = vst [vmem:[#allocation4 + $0xc0] sm:$0xff] %v2143
    %2178 = vst.msk [vmem:[#allocation4 + $0xc8] sm:$0xff] %vm420, %v2145
    %2179 = vst [vmem:[#allocation4 + $0xd0] sm:$0xff] %v2149
    %2180 = vst.msk [vmem:[#allocation4 + $0xd8] sm:$0xff] %vm420, %v2151
    %v2181 = vld [vmem:[#allocation4] sm:$0xff]
    %v2182 = vld [vmem:[#allocation4 + $0x8] sm:$0xff]
    %v2183 = vld [vmem:[#allocation4 + $0x10] sm:$0xff]
    %v2184 = vld [vmem:[#allocation4 + $0x18] sm:$0xff]
    %v2185 = vld [vmem:[#allocation4 + $0x20] sm:$0xff]
    %v2186 = vld [vmem:[#allocation4 + $0x28] sm:$0xff]
    %v2187 = vld [vmem:[#allocation4 + $0x30] sm:$0xff]
    %v2188 = vld [vmem:[#allocation4 + $0x38] sm:$0xff]
    %v2189 = vld [vmem:[#allocation4 + $0x40] sm:$0xff]
    %v2190 = vld [vmem:[#allocation4 + $0x48] sm:$0xff]
    %v2191 = vld [vmem:[#allocation4 + $0x50] sm:$0xff]
    %v2192 = vld [vmem:[#allocation4 + $0x58] sm:$0xff]
    %v2193 = vld [vmem:[#allocation4 + $0x60] sm:$0xff]
    %v2194 = vld [vmem:[#allocation4 + $0x68] sm:$0xff]
    %v2195 = vld [vmem:[#allocation4 + $0x70] sm:$0xff]
    %v2196 = vld [vmem:[#allocation4 + $0x78] sm:$0xff]
    %v2197 = vld [vmem:[#allocation4 + $0x80] sm:$0xff]
    %v2198 = vld [vmem:[#allocation4 + $0x88] sm:$0xff]
    %v2199 = vld [vmem:[#allocation4 + $0x90] sm:$0xff]
    %v2200 = vld [vmem:[#allocation4 + $0x98] sm:$0xff]
    %v2201 = vld [vmem:[#allocation4 + $0xa0] sm:$0xff]
    %v2202 = vld [vmem:[#allocation4 + $0xa8] sm:$0xff]
    %v2203 = vld [vmem:[#allocation4 + $0xb0] sm:$0xff]
    %v2204 = vld [vmem:[#allocation4 + $0xb8] sm:$0xff]
    %v2205 = vld [vmem:[#allocation4 + $0xc0] sm:$0xff]
    %v2206 = vld [vmem:[#allocation4 + $0xc8] sm:$0xff]
    %v2207 = vld [vmem:[#allocation4 + $0xd0] sm:$0xff]
    %v2208 = vld [vmem:[#allocation4 + $0xd8] sm:$0xff]
    %v2209 = vld [vmem:[#allocation3 + $0x10] sm:$0xff]
    %v2210 = vld [vmem:[#allocation3 + $0x18] sm:$0xff]
    %v2211 = vld [vmem:[#allocation3 + $0x20] sm:$0xff]
    %v2212 = vld [vmem:[#allocation3 + $0x28] sm:$0xff]
    %v2213 = vld [vmem:[#allocation3 + $0x30] sm:$0xff]
    %v2214 = vld [vmem:[#allocation3 + $0x38] sm:$0xff]
    %v2215 = vld [vmem:[#allocation3 + $0x40] sm:$0xff]
    %v2216 = vld [vmem:[#allocation3 + $0x48] sm:$0xff]
    %v2217 = vld [vmem:[#allocation3 + $0x50] sm:$0xff]
    %v2218 = vld [vmem:[#allocation3 + $0x58] sm:$0xff]
    %v2219 = vld [vmem:[#allocation3 + $0x60] sm:$0xff]
    %v2220 = vld [vmem:[#allocation3 + $0x68] sm:$0xff]
    %v2221 = vld [vmem:[#allocation3 + $0x70] sm:$0xff]
    %v2222 = vld [vmem:[#allocation3 + $0x78] sm:$0xff]
    %v2223 = vld [vmem:[#allocation3 + $0x80] sm:$0xff]
    %v2224 = vld [vmem:[#allocation3 + $0x88] sm:$0xff]
    %v2225 = vld [vmem:[#allocation3 + $0x90] sm:$0xff]
    %v2226 = vld [vmem:[#allocation3 + $0x98] sm:$0xff]
    %v2227 = vld [vmem:[#allocation3 + $0xa0] sm:$0xff]
    %v2228 = vld [vmem:[#allocation3 + $0xa8] sm:$0xff]
    %v2229 = vld [vmem:[#allocation3 + $0xb0] sm:$0xff]
    %v2230 = vld [vmem:[#allocation3 + $0xb8] sm:$0xff]
    %v2231 = vld [vmem:[#allocation3 + $0xc0] sm:$0xff]
    %v2232 = vld [vmem:[#allocation3 + $0xc8] sm:$0xff]
    %v2233 = vld [vmem:[#allocation3 + $0xd0] sm:$0xff]
    %v2234 = vld [vmem:[#allocation3 + $0xd8] sm:$0xff]
    %v2235 = vld [vmem:[#allocation3 + $0xe0] sm:$0xff]
    %v2236 = vld [vmem:[#allocation3 + $0xe8] sm:$0xff]
    %s2237 = scalar_lea.vmem [#allocation5], 448
    %v2238 = vld [vmem:[%s2237] sm:$0xff]
    %v2239 = vld [vmem:[%s2237 + $0x8] sm:$0xff]
    %v2240 = vld [vmem:[%s2237 + $0x10] sm:$0xff]
    %v2241 = vld [vmem:[%s2237 + $0x18] sm:$0xff]
    %v2242 = vld [vmem:[%s2237 + $0x20] sm:$0xff]
    %v2243 = vld [vmem:[%s2237 + $0x28] sm:$0xff]
    %v2244 = vld [vmem:[%s2237 + $0x30] sm:$0xff]
    %v2245 = vld [vmem:[%s2237 + $0x38] sm:$0xff]
    %v2246 = vld [vmem:[%s2237 + $0x40] sm:$0xff]
    %v2247 = vld [vmem:[%s2237 + $0x48] sm:$0xff]
    %v2248 = vld [vmem:[%s2237 + $0x50] sm:$0xff]
    %v2249 = vld [vmem:[%s2237 + $0x58] sm:$0xff]
    %v2250 = vld [vmem:[%s2237 + $0x60] sm:$0xff]
    %v2251 = vld [vmem:[%s2237 + $0x68] sm:$0xff]
    %v2252 = vld [vmem:[%s2237 + $0x70] sm:$0xff]
    %v2253 = vld [vmem:[%s2237 + $0x78] sm:$0xff]
    %v2254 = vld [vmem:[%s2237 + $0x80] sm:$0xff]
    %v2255 = vld [vmem:[%s2237 + $0x88] sm:$0xff]
    %v2256 = vld [vmem:[%s2237 + $0x90] sm:$0xff]
    %v2257 = vld [vmem:[%s2237 + $0x98] sm:$0xff]
    %v2258 = vld [vmem:[%s2237 + $0xa0] sm:$0xff]
    %v2259 = vld [vmem:[%s2237 + $0xa8] sm:$0xff]
    %v2260 = vld [vmem:[%s2237 + $0xb0] sm:$0xff]
    %v2261 = vld [vmem:[%s2237 + $0xb8] sm:$0xff]
    %v2262 = vld [vmem:[%s2237 + $0xc0] sm:$0xff]
    %v2263 = vld [vmem:[%s2237 + $0xc8] sm:$0xff]
    %v2264 = vld [vmem:[%s2237 + $0xd0] sm:$0xff]
    %v2265 = vld [vmem:[%s2237 + $0xd8] sm:$0xff]
    %v2266 = vld [vmem:[%s2237 + $0xe0] sm:$0xff]
    %v2267 = vld [vmem:[%s2237 + $0xe8] sm:$0xff]
    %v2268 = vld [vmem:[%s2237 + $0xf0] sm:$0xff]
    %v2269 = vld [vmem:[%s2237 + $0xf8] sm:$0xff]
    %v2270 = vld [vmem:[%s2237 + $0x100] sm:$0xff]
    %v2271 = vld [vmem:[%s2237 + $0x108] sm:$0xff]
    %v2272 = vld [vmem:[%s2237 + $0x110] sm:$0xff]
    %v2273 = vld [vmem:[%s2237 + $0x118] sm:$0xff]
    %v2274 = vld [vmem:[%s2237 + $0x120] sm:$0xff]
    %v2275 = vld [vmem:[%s2237 + $0x128] sm:$0xff]
    %v2276 = vld [vmem:[%s2237 + $0x130] sm:$0xff]
    %v2277 = vld [vmem:[%s2237 + $0x138] sm:$0xff]
    %v2278 = vld [vmem:[%s2237 + $0x140] sm:$0xff]
    %v2279 = vld [vmem:[%s2237 + $0x148] sm:$0xff]
    %v2280 = vld [vmem:[%s2237 + $0x150] sm:$0xff]
    %v2281 = vld [vmem:[%s2237 + $0x158] sm:$0xff]
    %v2282 = vld [vmem:[%s2237 + $0x160] sm:$0xff]
    %v2283 = vld [vmem:[%s2237 + $0x168] sm:$0xff]
    %v2284 = vld [vmem:[%s2237 + $0x170] sm:$0xff]
    %v2285 = vld [vmem:[%s2237 + $0x178] sm:$0xff]
    %v2286 = vld [vmem:[%s2237 + $0x180] sm:$0xff]
    %v2287 = vld [vmem:[%s2237 + $0x188] sm:$0xff]
    %v2288 = vld [vmem:[%s2237 + $0x190] sm:$0xff]
    %v2289 = vld [vmem:[%s2237 + $0x198] sm:$0xff]
    %v2290 = vld [vmem:[%s2237 + $0x1a0] sm:$0xff]
    %v2291 = vld [vmem:[%s2237 + $0x1a8] sm:$0xff]
    %v2292 = vld [vmem:[%s2237 + $0x1b0] sm:$0xff]
    %v2293 = vld [vmem:[%s2237 + $0x1b8] sm:$0xff]
    %v2295 = vsel %vm420, %v2210, 0
    %v2298 = vsel %vm420, %v2212, 0
    %v2301 = vsel %vm420, %v2214, 0
    %v2304 = vsel %vm420, %v2216, 0
    %v2307 = vsel %vm420, %v2218, 0
    %v2310 = vsel %vm420, %v2220, 0
    %v2313 = vsel %vm420, %v2222, 0
    %v2316 = vsel %vm420, %v2224, 0
    %v2319 = vsel %vm420, %v2226, 0
    %v2322 = vsel %vm420, %v2228, 0
    %v2325 = vsel %vm420, %v2230, 0
    %v2328 = vsel %vm420, %v2232, 0
    %v2331 = vsel %vm420, %v2234, 0
    %v2334 = vsel %vm420, %v2236, 0
    %2336 = vmatprep.subr.mxu0 %v2269
    %2337 = vmatpush1.msra.mxu0 %v2268
    %2338 = vmatprep.subr.mxu0 %v2267
    %2339 = vmatpush1.msra.mxu0 %v2266
    %2340 = vmatprep.subr.mxu0 %v2265
    %2341 = vmatpush1.msra.mxu0 %v2264
    %2342 = vmatprep.subr.mxu0 %v2263
    %2343 = vmatpush1.msra.mxu0 %v2262
    %2344 = vmatprep.subr.mxu0 %v2261
    %2345 = vmatpush1.msra.mxu0 %v2260
    %2346 = vmatprep.subr.mxu0 %v2259
    %2347 = vmatpush1.msra.mxu0 %v2258
    %2348 = vmatprep.subr.mxu0 %v2257
    %2349 = vmatpush1.msra.mxu0 %v2256
    %2350 = vmatprep.subr.mxu0 %v2255
    %2351 = vmatpush1.msra.mxu0 %v2254
    %2352 = vmatprep.subr.mxu0 %v2253
    %2353 = vmatpush1.msra.mxu0 %v2252
    %2354 = vmatprep.subr.mxu0 %v2251
    %2355 = vmatpush1.msra.mxu0 %v2250
    %2356 = vmatprep.subr.mxu0 %v2249
    %2357 = vmatpush1.msra.mxu0 %v2248
    %2358 = vmatprep.subr.mxu0 %v2247
    %2359 = vmatpush1.msra.mxu0 %v2246
    %2360 = vmatprep.subr.mxu0 %v2245
    %2361 = vmatpush1.msra.mxu0 %v2244
    %2362 = vmatprep.subr.mxu0 %v2243
    %2363 = vmatpush1.msra.mxu0 %v2242
    %2364 = vmatprep.subr.mxu0 %v2241
    %2365 = vmatpush1.msra.mxu0 %v2240
    %2366 = vmatprep.subr.mxu0 %v2239
    %2367 = vmatpush1.msra.mxu0 %v2238
    %2368 = vmatprep.subr.mxu0 0.0
    %2369 = vmatpush2.msra.mxu0 0.0
    %2370 = vmatprep.subr.mxu0 0.0
    %2371 = vmatpush2.msra.mxu0 0.0
    %2372 = vmatprep.subr.mxu0 0.0
    %2373 = vmatpush2.msra.mxu0 0.0
    %2374 = vmatprep.subr.mxu0 0.0
    %2375 = vmatpush2.msra.mxu0 0.0
    %2376 = vmatprep.subr.mxu0 %v2293
    %2377 = vmatpush2.msra.mxu0 %v2292
    %2378 = vmatprep.subr.mxu0 %v2291
    %2379 = vmatpush2.msra.mxu0 %v2290
    %2380 = vmatprep.subr.mxu0 %v2289
    %2381 = vmatpush2.msra.mxu0 %v2288
    %2382 = vmatprep.subr.mxu0 %v2287
    %2383 = vmatpush2.msra.mxu0 %v2286
    %2384 = vmatprep.subr.mxu0 %v2285
    %2385 = vmatpush2.msra.mxu0 %v2284
    %2386 = vmatprep.subr.mxu0 %v2283
    %2387 = vmatpush2.msra.mxu0 %v2282
    %2388 = vmatprep.subr.mxu0 %v2281
    %2389 = vmatpush2.msra.mxu0 %v2280
    %2390 = vmatprep.subr.mxu0 %v2279
    %2391 = vmatpush2.msra.mxu0 %v2278
    %2392 = vmatprep.subr.mxu0 %v2277
    %2393 = vmatpush2.msra.mxu0 %v2276
    %2394 = vmatprep.subr.mxu0 %v2275
    %2395 = vmatpush2.msra.mxu0 %v2274
    %2396 = vmatprep.subr.mxu0 %v2273
    %2397 = vmatpush2.msra.mxu0 %v2272
    %2398 = vmatprep.subr.mxu0 %v2271
    %2399 = vmatpush2.msra.mxu0 %v2270
    %2400 = vmatprep.mubr.f32.mxu0 %v2295
    %2401 = vmatmul.mubr.f32.gmra.mxu0 %v2209
    %v2402 = vpop.f32.mrf.mxu0
    %v2403 = vadd.f32 0.0, %v2402
    %v2404 = vpop.f32.mrf.mxu0
    %v2405 = vadd.f32 0.0, %v2404
    %2406 = vmatprep.mubr.f32.mxu0 %v2298
    %2407 = vmatmul.mubr.f32.gmra.mxu0 %v2211
    %v2408 = vpop.f32.mrf.mxu0
    %v2409 = vadd.f32 0.0, %v2408
    %v2410 = vpop.f32.mrf.mxu0
    %v2411 = vadd.f32 0.0, %v2410
    %2412 = vmatprep.mubr.f32.mxu0 %v2301
    %2413 = vmatmul.mubr.f32.gmra.mxu0 %v2213
    %v2414 = vpop.f32.mrf.mxu0
    %v2415 = vadd.f32 0.0, %v2414
    %v2416 = vpop.f32.mrf.mxu0
    %v2417 = vadd.f32 0.0, %v2416
    %2418 = vmatprep.mubr.f32.mxu0 %v2304
    %2419 = vmatmul.mubr.f32.gmra.mxu0 %v2215
    %v2420 = vpop.f32.mrf.mxu0
    %v2421 = vadd.f32 0.0, %v2420
    %v2422 = vpop.f32.mrf.mxu0
    %v2423 = vadd.f32 0.0, %v2422
    %2424 = vmatprep.mubr.f32.mxu0 %v2307
    %2425 = vmatmul.mubr.f32.gmra.mxu0 %v2217
    %v2426 = vpop.f32.mrf.mxu0
    %v2427 = vadd.f32 0.0, %v2426
    %v2428 = vpop.f32.mrf.mxu0
    %v2429 = vadd.f32 0.0, %v2428
    %2430 = vmatprep.mubr.f32.mxu0 %v2310
    %2431 = vmatmul.mubr.f32.gmra.mxu0 %v2219
    %v2432 = vpop.f32.mrf.mxu0
    %v2433 = vadd.f32 0.0, %v2432
    %v2434 = vpop.f32.mrf.mxu0
    %v2435 = vadd.f32 0.0, %v2434
    %2436 = vmatprep.mubr.f32.mxu0 %v2313
    %2437 = vmatmul.mubr.f32.gmra.mxu0 %v2221
    %v2438 = vpop.f32.mrf.mxu0
    %v2439 = vadd.f32 0.0, %v2438
    %v2440 = vpop.f32.mrf.mxu0
    %v2441 = vadd.f32 0.0, %v2440
    %2442 = vmatprep.mubr.f32.mxu0 %v2316
    %2443 = vmatmul.mubr.f32.gmra.mxu0 %v2223
    %v2444 = vpop.f32.mrf.mxu0
    %v2445 = vadd.f32 0.0, %v2444
    %v2446 = vpop.f32.mrf.mxu0
    %v2447 = vadd.f32 0.0, %v2446
    %2448 = vmatprep.mubr.f32.mxu0 %v2319
    %2449 = vmatmul.mubr.f32.gmra.mxu0 %v2225
    %v2450 = vpop.f32.mrf.mxu0
    %v2451 = vadd.f32 0.0, %v2450
    %v2452 = vpop.f32.mrf.mxu0
    %v2453 = vadd.f32 0.0, %v2452
    %2454 = vmatprep.mubr.f32.mxu0 %v2322
    %2455 = vmatmul.mubr.f32.gmra.mxu0 %v2227
    %v2456 = vpop.f32.mrf.mxu0
    %v2457 = vadd.f32 0.0, %v2456
    %v2458 = vpop.f32.mrf.mxu0
    %v2459 = vadd.f32 0.0, %v2458
    %2460 = vmatprep.mubr.f32.mxu0 %v2325
    %2461 = vmatmul.mubr.f32.gmra.mxu0 %v2229
    %v2462 = vpop.f32.mrf.mxu0
    %v2463 = vadd.f32 0.0, %v2462
    %v2464 = vpop.f32.mrf.mxu0
    %v2465 = vadd.f32 0.0, %v2464
    %2466 = vmatprep.mubr.f32.mxu0 %v2328
    %2467 = vmatmul.mubr.f32.gmra.mxu0 %v2231
    %v2468 = vpop.f32.mrf.mxu0
    %v2469 = vadd.f32 0.0, %v2468
    %v2470 = vpop.f32.mrf.mxu0
    %v2471 = vadd.f32 0.0, %v2470
    %2472 = vmatprep.mubr.f32.mxu0 %v2331
    %2473 = vmatmul.mubr.f32.gmra.mxu0 %v2233
    %v2474 = vpop.f32.mrf.mxu0
    %v2475 = vadd.f32 0.0, %v2474
    %v2476 = vpop.f32.mrf.mxu0
    %v2477 = vadd.f32 0.0, %v2476
    %2478 = vmatprep.mubr.f32.mxu0 %v2334
    %2479 = vmatmul.mubr.f32.gmra.mxu0 %v2235
    %v2480 = vpop.f32.mrf.mxu0
    %v2481 = vadd.f32 0.0, %v2480
    %v2482 = vpop.f32.mrf.mxu0
    %v2483 = vadd.f32 0.0, %v2482
    %2484 = vdwg.mxu0
    %v2485 = vadd.f32 %v2181, %v2403
    %v2486 = vadd.f32 %v2182, %v2405
    %v2487 = vadd.f32 %v2183, %v2409
    %v2488 = vadd.f32 %v2184, %v2411
    %v2489 = vadd.f32 %v2185, %v2415
    %v2490 = vadd.f32 %v2186, %v2417
    %v2491 = vadd.f32 %v2187, %v2421
    %v2492 = vadd.f32 %v2188, %v2423
    %v2493 = vadd.f32 %v2189, %v2427
    %v2494 = vadd.f32 %v2190, %v2429
    %v2495 = vadd.f32 %v2191, %v2433
    %v2496 = vadd.f32 %v2192, %v2435
    %v2497 = vadd.f32 %v2193, %v2439
    %v2498 = vadd.f32 %v2194, %v2441
    %v2499 = vadd.f32 %v2195, %v2445
    %v2500 = vadd.f32 %v2196, %v2447
    %v2501 = vadd.f32 %v2197, %v2451
    %v2502 = vadd.f32 %v2198, %v2453
    %v2503 = vadd.f32 %v2199, %v2457
    %v2504 = vadd.f32 %v2200, %v2459
    %v2505 = vadd.f32 %v2201, %v2463
    %v2506 = vadd.f32 %v2202, %v2465
    %v2507 = vadd.f32 %v2203, %v2469
    %v2508 = vadd.f32 %v2204, %v2471
    %v2509 = vadd.f32 %v2205, %v2475
    %v2510 = vadd.f32 %v2206, %v2477
    %v2511 = vadd.f32 %v2207, %v2481
    %v2512 = vadd.f32 %v2208, %v2483
    %2513 = vst [vmem:[#allocation4] sm:$0xff] %v2485
    %2514 = vst.msk [vmem:[#allocation4 + $0x8] sm:$0xff] %vm420, %v2486
    %2515 = vst [vmem:[#allocation4 + $0x10] sm:$0xff] %v2487
    %2516 = vst.msk [vmem:[#allocation4 + $0x18] sm:$0xff] %vm420, %v2488
    %2517 = vst [vmem:[#allocation4 + $0x20] sm:$0xff] %v2489
    %2518 = vst.msk [vmem:[#allocation4 + $0x28] sm:$0xff] %vm420, %v2490
    %2519 = vst [vmem:[#allocation4 + $0x30] sm:$0xff] %v2491
    %2520 = vst.msk [vmem:[#allocation4 + $0x38] sm:$0xff] %vm420, %v2492
    %2521 = vst [vmem:[#allocation4 + $0x40] sm:$0xff] %v2493
    %2522 = vst.msk [vmem:[#allocation4 + $0x48] sm:$0xff] %vm420, %v2494
    %2523 = vst [vmem:[#allocation4 + $0x50] sm:$0xff] %v2495
    %2524 = vst.msk [vmem:[#allocation4 + $0x58] sm:$0xff] %vm420, %v2496
    %2525 = vst [vmem:[#allocation4 + $0x60] sm:$0xff] %v2497
    %2526 = vst.msk [vmem:[#allocation4 + $0x68] sm:$0xff] %vm420, %v2498
    %2527 = vst [vmem:[#allocation4 + $0x70] sm:$0xff] %v2499
    %2528 = vst.msk [vmem:[#allocation4 + $0x78] sm:$0xff] %vm420, %v2500
    %2529 = vst [vmem:[#allocation4 + $0x80] sm:$0xff] %v2501
    %2530 = vst.msk [vmem:[#allocation4 + $0x88] sm:$0xff] %vm420, %v2502
    %2531 = vst [vmem:[#allocation4 + $0x90] sm:$0xff] %v2503
    %2532 = vst.msk [vmem:[#allocation4 + $0x98] sm:$0xff] %vm420, %v2504
    %2533 = vst [vmem:[#allocation4 + $0xa0] sm:$0xff] %v2505
    %2534 = vst.msk [vmem:[#allocation4 + $0xa8] sm:$0xff] %vm420, %v2506
    %2535 = vst [vmem:[#allocation4 + $0xb0] sm:$0xff] %v2507
    %2536 = vst.msk [vmem:[#allocation4 + $0xb8] sm:$0xff] %vm420, %v2508
    %2537 = vst [vmem:[#allocation4 + $0xc0] sm:$0xff] %v2509
    %2538 = vst.msk [vmem:[#allocation4 + $0xc8] sm:$0xff] %vm420, %v2510
    %2539 = vst [vmem:[#allocation4 + $0xd0] sm:$0xff] %v2511
    %2540 = vst.msk [vmem:[#allocation4 + $0xd8] sm:$0xff] %vm420, %v2512
    %v2541 = vld [vmem:[#allocation4] sm:$0xff]
    %v2542 = vld [vmem:[#allocation4 + $0x8] sm:$0xff]
    %v2543 = vld [vmem:[#allocation4 + $0x10] sm:$0xff]
    %v2544 = vld [vmem:[#allocation4 + $0x18] sm:$0xff]
    %v2545 = vld [vmem:[#allocation4 + $0x20] sm:$0xff]
    %v2546 = vld [vmem:[#allocation4 + $0x28] sm:$0xff]
    %v2547 = vld [vmem:[#allocation4 + $0x30] sm:$0xff]
    %v2548 = vld [vmem:[#allocation4 + $0x38] sm:$0xff]
    %v2549 = vld [vmem:[#allocation4 + $0x40] sm:$0xff]
    %v2550 = vld [vmem:[#allocation4 + $0x48] sm:$0xff]
    %v2551 = vld [vmem:[#allocation4 + $0x50] sm:$0xff]
    %v2552 = vld [vmem:[#allocation4 + $0x58] sm:$0xff]
    %v2553 = vld [vmem:[#allocation4 + $0x60] sm:$0xff]
    %v2554 = vld [vmem:[#allocation4 + $0x68] sm:$0xff]
    %v2555 = vld [vmem:[#allocation4 + $0x70] sm:$0xff]
    %v2556 = vld [vmem:[#allocation4 + $0x78] sm:$0xff]
    %v2557 = vld [vmem:[#allocation4 + $0x80] sm:$0xff]
    %v2558 = vld [vmem:[#allocation4 + $0x88] sm:$0xff]
    %v2559 = vld [vmem:[#allocation4 + $0x90] sm:$0xff]
    %v2560 = vld [vmem:[#allocation4 + $0x98] sm:$0xff]
    %v2561 = vld [vmem:[#allocation4 + $0xa0] sm:$0xff]
    %v2562 = vld [vmem:[#allocation4 + $0xa8] sm:$0xff]
    %v2563 = vld [vmem:[#allocation4 + $0xb0] sm:$0xff]
    %v2564 = vld [vmem:[#allocation4 + $0xb8] sm:$0xff]
    %v2565 = vld [vmem:[#allocation4 + $0xc0] sm:$0xff]
    %v2566 = vld [vmem:[#allocation4 + $0xc8] sm:$0xff]
    %v2567 = vld [vmem:[#allocation4 + $0xd0] sm:$0xff]
    %v2568 = vld [vmem:[#allocation4 + $0xd8] sm:$0xff]
    %v2569 = vld [vmem:[#allocation3 + $0x20] sm:$0xff]
    %v2570 = vld [vmem:[#allocation3 + $0x28] sm:$0xff]
    %v2571 = vld [vmem:[#allocation3 + $0x30] sm:$0xff]
    %v2572 = vld [vmem:[#allocation3 + $0x38] sm:$0xff]
    %v2573 = vld [vmem:[#allocation3 + $0x40] sm:$0xff]
    %v2574 = vld [vmem:[#allocation3 + $0x48] sm:$0xff]
    %v2575 = vld [vmem:[#allocation3 + $0x50] sm:$0xff]
    %v2576 = vld [vmem:[#allocation3 + $0x58] sm:$0xff]
    %v2577 = vld [vmem:[#allocation3 + $0x60] sm:$0xff]
    %v2578 = vld [vmem:[#allocation3 + $0x68] sm:$0xff]
    %v2579 = vld [vmem:[#allocation3 + $0x70] sm:$0xff]
    %v2580 = vld [vmem:[#allocation3 + $0x78] sm:$0xff]
    %v2581 = vld [vmem:[#allocation3 + $0x80] sm:$0xff]
    %v2582 = vld [vmem:[#allocation3 + $0x88] sm:$0xff]
    %v2583 = vld [vmem:[#allocation3 + $0x90] sm:$0xff]
    %v2584 = vld [vmem:[#allocation3 + $0x98] sm:$0xff]
    %v2585 = vld [vmem:[#allocation3 + $0xa0] sm:$0xff]
    %v2586 = vld [vmem:[#allocation3 + $0xa8] sm:$0xff]
    %v2587 = vld [vmem:[#allocation3 + $0xb0] sm:$0xff]
    %v2588 = vld [vmem:[#allocation3 + $0xb8] sm:$0xff]
    %v2589 = vld [vmem:[#allocation3 + $0xc0] sm:$0xff]
    %v2590 = vld [vmem:[#allocation3 + $0xc8] sm:$0xff]
    %v2591 = vld [vmem:[#allocation3 + $0xd0] sm:$0xff]
    %v2592 = vld [vmem:[#allocation3 + $0xd8] sm:$0xff]
    %v2593 = vld [vmem:[#allocation3 + $0xe0] sm:$0xff]
    %v2594 = vld [vmem:[#allocation3 + $0xe8] sm:$0xff]
    %v2595 = vld [vmem:[#allocation3 + $0xf0] sm:$0xff]
    %v2596 = vld [vmem:[#allocation3 + $0xf8] sm:$0xff]
    %s2597 = scalar_lea.vmem [#allocation5], 896
    %v2598 = vld [vmem:[%s2597] sm:$0xff]
    %v2599 = vld [vmem:[%s2597 + $0x8] sm:$0xff]
    %v2600 = vld [vmem:[%s2597 + $0x10] sm:$0xff]
    %v2601 = vld [vmem:[%s2597 + $0x18] sm:$0xff]
    %v2602 = vld [vmem:[%s2597 + $0x20] sm:$0xff]
    %v2603 = vld [vmem:[%s2597 + $0x28] sm:$0xff]
    %v2604 = vld [vmem:[%s2597 + $0x30] sm:$0xff]
    %v2605 = vld [vmem:[%s2597 + $0x38] sm:$0xff]
    %v2606 = vld [vmem:[%s2597 + $0x40] sm:$0xff]
    %v2607 = vld [vmem:[%s2597 + $0x48] sm:$0xff]
    %v2608 = vld [vmem:[%s2597 + $0x50] sm:$0xff]
    %v2609 = vld [vmem:[%s2597 + $0x58] sm:$0xff]
    %v2610 = vld [vmem:[%s2597 + $0x60] sm:$0xff]
    %v2611 = vld [vmem:[%s2597 + $0x68] sm:$0xff]
    %v2612 = vld [vmem:[%s2597 + $0x70] sm:$0xff]
    %v2613 = vld [vmem:[%s2597 + $0x78] sm:$0xff]
    %v2614 = vld [vmem:[%s2597 + $0x80] sm:$0xff]
    %v2615 = vld [vmem:[%s2597 + $0x88] sm:$0xff]
    %v2616 = vld [vmem:[%s2597 + $0x90] sm:$0xff]
    %v2617 = vld [vmem:[%s2597 + $0x98] sm:$0xff]
    %v2618 = vld [vmem:[%s2597 + $0xa0] sm:$0xff]
    %v2619 = vld [vmem:[%s2597 + $0xa8] sm:$0xff]
    %v2620 = vld [vmem:[%s2597 + $0xb0] sm:$0xff]
    %v2621 = vld [vmem:[%s2597 + $0xb8] sm:$0xff]
    %v2622 = vld [vmem:[%s2597 + $0xc0] sm:$0xff]
    %v2623 = vld [vmem:[%s2597 + $0xc8] sm:$0xff]
    %v2624 = vld [vmem:[%s2597 + $0xd0] sm:$0xff]
    %v2625 = vld [vmem:[%s2597 + $0xd8] sm:$0xff]
    %v2626 = vld [vmem:[%s2597 + $0xe0] sm:$0xff]
    %v2627 = vld [vmem:[%s2597 + $0xe8] sm:$0xff]
    %v2628 = vld [vmem:[%s2597 + $0xf0] sm:$0xff]
    %v2629 = vld [vmem:[%s2597 + $0xf8] sm:$0xff]
    %v2630 = vld [vmem:[%s2597 + $0x100] sm:$0xff]
    %v2631 = vld [vmem:[%s2597 + $0x108] sm:$0xff]
    %v2632 = vld [vmem:[%s2597 + $0x110] sm:$0xff]
    %v2633 = vld [vmem:[%s2597 + $0x118] sm:$0xff]
    %v2634 = vld [vmem:[%s2597 + $0x120] sm:$0xff]
    %v2635 = vld [vmem:[%s2597 + $0x128] sm:$0xff]
    %v2636 = vld [vmem:[%s2597 + $0x130] sm:$0xff]
    %v2637 = vld [vmem:[%s2597 + $0x138] sm:$0xff]
    %v2638 = vld [vmem:[%s2597 + $0x140] sm:$0xff]
    %v2639 = vld [vmem:[%s2597 + $0x148] sm:$0xff]
    %v2640 = vld [vmem:[%s2597 + $0x150] sm:$0xff]
    %v2641 = vld [vmem:[%s2597 + $0x158] sm:$0xff]
    %v2642 = vld [vmem:[%s2597 + $0x160] sm:$0xff]
    %v2643 = vld [vmem:[%s2597 + $0x168] sm:$0xff]
    %v2644 = vld [vmem:[%s2597 + $0x170] sm:$0xff]
    %v2645 = vld [vmem:[%s2597 + $0x178] sm:$0xff]
    %v2646 = vld [vmem:[%s2597 + $0x180] sm:$0xff]
    %v2647 = vld [vmem:[%s2597 + $0x188] sm:$0xff]
    %v2648 = vld [vmem:[%s2597 + $0x190] sm:$0xff]
    %v2649 = vld [vmem:[%s2597 + $0x198] sm:$0xff]
    %v2650 = vld [vmem:[%s2597 + $0x1a0] sm:$0xff]
    %v2651 = vld [vmem:[%s2597 + $0x1a8] sm:$0xff]
    %v2652 = vld [vmem:[%s2597 + $0x1b0] sm:$0xff]
    %v2653 = vld [vmem:[%s2597 + $0x1b8] sm:$0xff]
    %v2655 = vsel %vm420, %v2570, 0
    %v2658 = vsel %vm420, %v2572, 0
    %v2661 = vsel %vm420, %v2574, 0
    %v2664 = vsel %vm420, %v2576, 0
    %v2667 = vsel %vm420, %v2578, 0
    %v2670 = vsel %vm420, %v2580, 0
    %v2673 = vsel %vm420, %v2582, 0
    %v2676 = vsel %vm420, %v2584, 0
    %v2679 = vsel %vm420, %v2586, 0
    %v2682 = vsel %vm420, %v2588, 0
    %v2685 = vsel %vm420, %v2590, 0
    %v2688 = vsel %vm420, %v2592, 0
    %v2691 = vsel %vm420, %v2594, 0
    %v2694 = vsel %vm420, %v2596, 0
    %2696 = vmatprep.subr.mxu0 %v2629
    %2697 = vmatpush1.msra.mxu0 %v2628
    %2698 = vmatprep.subr.mxu0 %v2627
    %2699 = vmatpush1.msra.mxu0 %v2626
    %2700 = vmatprep.subr.mxu0 %v2625
    %2701 = vmatpush1.msra.mxu0 %v2624
    %2702 = vmatprep.subr.mxu0 %v2623
    %2703 = vmatpush1.msra.mxu0 %v2622
    %2704 = vmatprep.subr.mxu0 %v2621
    %2705 = vmatpush1.msra.mxu0 %v2620
    %2706 = vmatprep.subr.mxu0 %v2619
    %2707 = vmatpush1.msra.mxu0 %v2618
    %2708 = vmatprep.subr.mxu0 %v2617
    %2709 = vmatpush1.msra.mxu0 %v2616
    %2710 = vmatprep.subr.mxu0 %v2615
    %2711 = vmatpush1.msra.mxu0 %v2614
    %2712 = vmatprep.subr.mxu0 %v2613
    %2713 = vmatpush1.msra.mxu0 %v2612
    %2714 = vmatprep.subr.mxu0 %v2611
    %2715 = vmatpush1.msra.mxu0 %v2610
    %2716 = vmatprep.subr.mxu0 %v2609
    %2717 = vmatpush1.msra.mxu0 %v2608
    %2718 = vmatprep.subr.mxu0 %v2607
    %2719 = vmatpush1.msra.mxu0 %v2606
    %2720 = vmatprep.subr.mxu0 %v2605
    %2721 = vmatpush1.msra.mxu0 %v2604
    %2722 = vmatprep.subr.mxu0 %v2603
    %2723 = vmatpush1.msra.mxu0 %v2602
    %2724 = vmatprep.subr.mxu0 %v2601
    %2725 = vmatpush1.msra.mxu0 %v2600
    %2726 = vmatprep.subr.mxu0 %v2599
    %2727 = vmatpush1.msra.mxu0 %v2598
    %2728 = vmatprep.subr.mxu0 0.0
    %2729 = vmatpush2.msra.mxu0 0.0
    %2730 = vmatprep.subr.mxu0 0.0
    %2731 = vmatpush2.msra.mxu0 0.0
    %2732 = vmatprep.subr.mxu0 0.0
    %2733 = vmatpush2.msra.mxu0 0.0
    %2734 = vmatprep.subr.mxu0 0.0
    %2735 = vmatpush2.msra.mxu0 0.0
    %2736 = vmatprep.subr.mxu0 %v2653
    %2737 = vmatpush2.msra.mxu0 %v2652
    %2738 = vmatprep.subr.mxu0 %v2651
    %2739 = vmatpush2.msra.mxu0 %v2650
    %2740 = vmatprep.subr.mxu0 %v2649
    %2741 = vmatpush2.msra.mxu0 %v2648
    %2742 = vmatprep.subr.mxu0 %v2647
    %2743 = vmatpush2.msra.mxu0 %v2646
    %2744 = vmatprep.subr.mxu0 %v2645
    %2745 = vmatpush2.msra.mxu0 %v2644
    %2746 = vmatprep.subr.mxu0 %v2643
    %2747 = vmatpush2.msra.mxu0 %v2642
    %2748 = vmatprep.subr.mxu0 %v2641
    %2749 = vmatpush2.msra.mxu0 %v2640
    %2750 = vmatprep.subr.mxu0 %v2639
    %2751 = vmatpush2.msra.mxu0 %v2638
    %2752 = vmatprep.subr.mxu0 %v2637
    %2753 = vmatpush2.msra.mxu0 %v2636
    %2754 = vmatprep.subr.mxu0 %v2635
    %2755 = vmatpush2.msra.mxu0 %v2634
    %2756 = vmatprep.subr.mxu0 %v2633
    %2757 = vmatpush2.msra.mxu0 %v2632
    %2758 = vmatprep.subr.mxu0 %v2631
    %2759 = vmatpush2.msra.mxu0 %v2630
    %2760 = vmatprep.mubr.f32.mxu0 %v2655
    %2761 = vmatmul.mubr.f32.gmra.mxu0 %v2569
    %v2762 = vpop.f32.mrf.mxu0
    %v2763 = vadd.f32 0.0, %v2762
    %v2764 = vpop.f32.mrf.mxu0
    %v2765 = vadd.f32 0.0, %v2764
    %2766 = vmatprep.mubr.f32.mxu0 %v2658
    %2767 = vmatmul.mubr.f32.gmra.mxu0 %v2571
    %v2768 = vpop.f32.mrf.mxu0
    %v2769 = vadd.f32 0.0, %v2768
    %v2770 = vpop.f32.mrf.mxu0
    %v2771 = vadd.f32 0.0, %v2770
    %2772 = vmatprep.mubr.f32.mxu0 %v2661
    %2773 = vmatmul.mubr.f32.gmra.mxu0 %v2573
    %v2774 = vpop.f32.mrf.mxu0
    %v2775 = vadd.f32 0.0, %v2774
    %v2776 = vpop.f32.mrf.mxu0
    %v2777 = vadd.f32 0.0, %v2776
    %2778 = vmatprep.mubr.f32.mxu0 %v2664
    %2779 = vmatmul.mubr.f32.gmra.mxu0 %v2575
    %v2780 = vpop.f32.mrf.mxu0
    %v2781 = vadd.f32 0.0, %v2780
    %v2782 = vpop.f32.mrf.mxu0
    %v2783 = vadd.f32 0.0, %v2782
    %2784 = vmatprep.mubr.f32.mxu0 %v2667
    %2785 = vmatmul.mubr.f32.gmra.mxu0 %v2577
    %v2786 = vpop.f32.mrf.mxu0
    %v2787 = vadd.f32 0.0, %v2786
    %v2788 = vpop.f32.mrf.mxu0
    %v2789 = vadd.f32 0.0, %v2788
    %2790 = vmatprep.mubr.f32.mxu0 %v2670
    %2791 = vmatmul.mubr.f32.gmra.mxu0 %v2579
    %v2792 = vpop.f32.mrf.mxu0
    %v2793 = vadd.f32 0.0, %v2792
    %v2794 = vpop.f32.mrf.mxu0
    %v2795 = vadd.f32 0.0, %v2794
    %2796 = vmatprep.mubr.f32.mxu0 %v2673
    %2797 = vmatmul.mubr.f32.gmra.mxu0 %v2581
    %v2798 = vpop.f32.mrf.mxu0
    %v2799 = vadd.f32 0.0, %v2798
    %v2800 = vpop.f32.mrf.mxu0
    %v2801 = vadd.f32 0.0, %v2800
    %2802 = vmatprep.mubr.f32.mxu0 %v2676
    %2803 = vmatmul.mubr.f32.gmra.mxu0 %v2583
    %v2804 = vpop.f32.mrf.mxu0
    %v2805 = vadd.f32 0.0, %v2804
    %v2806 = vpop.f32.mrf.mxu0
    %v2807 = vadd.f32 0.0, %v2806
    %2808 = vmatprep.mubr.f32.mxu0 %v2679
    %2809 = vmatmul.mubr.f32.gmra.mxu0 %v2585
    %v2810 = vpop.f32.mrf.mxu0
    %v2811 = vadd.f32 0.0, %v2810
    %v2812 = vpop.f32.mrf.mxu0
    %v2813 = vadd.f32 0.0, %v2812
    %2814 = vmatprep.mubr.f32.mxu0 %v2682
    %2815 = vmatmul.mubr.f32.gmra.mxu0 %v2587
    %v2816 = vpop.f32.mrf.mxu0
    %v2817 = vadd.f32 0.0, %v2816
    %v2818 = vpop.f32.mrf.mxu0
    %v2819 = vadd.f32 0.0, %v2818
    %2820 = vmatprep.mubr.f32.mxu0 %v2685
    %2821 = vmatmul.mubr.f32.gmra.mxu0 %v2589
    %v2822 = vpop.f32.mrf.mxu0
    %v2823 = vadd.f32 0.0, %v2822
    %v2824 = vpop.f32.mrf.mxu0
    %v2825 = vadd.f32 0.0, %v2824
    %2826 = vmatprep.mubr.f32.mxu0 %v2688
    %2827 = vmatmul.mubr.f32.gmra.mxu0 %v2591
    %v2828 = vpop.f32.mrf.mxu0
    %v2829 = vadd.f32 0.0, %v2828
    %v2830 = vpop.f32.mrf.mxu0
    %v2831 = vadd.f32 0.0, %v2830
    %2832 = vmatprep.mubr.f32.mxu0 %v2691
    %2833 = vmatmul.mubr.f32.gmra.mxu0 %v2593
    %v2834 = vpop.f32.mrf.mxu0
    %v2835 = vadd.f32 0.0, %v2834
    %v2836 = vpop.f32.mrf.mxu0
    %v2837 = vadd.f32 0.0, %v2836
    %2838 = vmatprep.mubr.f32.mxu0 %v2694
    %2839 = vmatmul.mubr.f32.gmra.mxu0 %v2595
    %v2840 = vpop.f32.mrf.mxu0
    %v2841 = vadd.f32 0.0, %v2840
    %v2842 = vpop.f32.mrf.mxu0
    %v2843 = vadd.f32 0.0, %v2842
    %2844 = vdwg.mxu0
    %v2845 = vadd.f32 %v2541, %v2763
    %v2846 = vadd.f32 %v2542, %v2765
    %v2847 = vadd.f32 %v2543, %v2769
    %v2848 = vadd.f32 %v2544, %v2771
    %v2849 = vadd.f32 %v2545, %v2775
    %v2850 = vadd.f32 %v2546, %v2777
    %v2851 = vadd.f32 %v2547, %v2781
    %v2852 = vadd.f32 %v2548, %v2783
    %v2853 = vadd.f32 %v2549, %v2787
    %v2854 = vadd.f32 %v2550, %v2789
    %v2855 = vadd.f32 %v2551, %v2793
    %v2856 = vadd.f32 %v2552, %v2795
    %v2857 = vadd.f32 %v2553, %v2799
    %v2858 = vadd.f32 %v2554, %v2801
    %v2859 = vadd.f32 %v2555, %v2805
    %v2860 = vadd.f32 %v2556, %v2807
    %v2861 = vadd.f32 %v2557, %v2811
    %v2862 = vadd.f32 %v2558, %v2813
    %v2863 = vadd.f32 %v2559, %v2817
    %v2864 = vadd.f32 %v2560, %v2819
    %v2865 = vadd.f32 %v2561, %v2823
    %v2866 = vadd.f32 %v2562, %v2825
    %v2867 = vadd.f32 %v2563, %v2829
    %v2868 = vadd.f32 %v2564, %v2831
    %v2869 = vadd.f32 %v2565, %v2835
    %v2870 = vadd.f32 %v2566, %v2837
    %v2871 = vadd.f32 %v2567, %v2841
    %v2872 = vadd.f32 %v2568, %v2843
    %2873 = vst [vmem:[#allocation4] sm:$0xff] %v2845
    %2874 = vst.msk [vmem:[#allocation4 + $0x8] sm:$0xff] %vm420, %v2846
    %2875 = vst [vmem:[#allocation4 + $0x10] sm:$0xff] %v2847
    %2876 = vst.msk [vmem:[#allocation4 + $0x18] sm:$0xff] %vm420, %v2848
    %2877 = vst [vmem:[#allocation4 + $0x20] sm:$0xff] %v2849
    %2878 = vst.msk [vmem:[#allocation4 + $0x28] sm:$0xff] %vm420, %v2850
    %2879 = vst [vmem:[#allocation4 + $0x30] sm:$0xff] %v2851
    %2880 = vst.msk [vmem:[#allocation4 + $0x38] sm:$0xff] %vm420, %v2852
    %2881 = vst [vmem:[#allocation4 + $0x40] sm:$0xff] %v2853
    %2882 = vst.msk [vmem:[#allocation4 + $0x48] sm:$0xff] %vm420, %v2854
    %2883 = vst [vmem:[#allocation4 + $0x50] sm:$0xff] %v2855
    %2884 = vst.msk [vmem:[#allocation4 + $0x58] sm:$0xff] %vm420, %v2856
    %2885 = vst [vmem:[#allocation4 + $0x60] sm:$0xff] %v2857
    %2886 = vst.msk [vmem:[#allocation4 + $0x68] sm:$0xff] %vm420, %v2858
    %2887 = vst [vmem:[#allocation4 + $0x70] sm:$0xff] %v2859
    %2888 = vst.msk [vmem:[#allocation4 + $0x78] sm:$0xff] %vm420, %v2860
    %2889 = vst [vmem:[#allocation4 + $0x80] sm:$0xff] %v2861
    %2890 = vst.msk [vmem:[#allocation4 + $0x88] sm:$0xff] %vm420, %v2862
    %2891 = vst [vmem:[#allocation4 + $0x90] sm:$0xff] %v2863
    %2892 = vst.msk [vmem:[#allocation4 + $0x98] sm:$0xff] %vm420, %v2864
    %2893 = vst [vmem:[#allocation4 + $0xa0] sm:$0xff] %v2865
    %2894 = vst.msk [vmem:[#allocation4 + $0xa8] sm:$0xff] %vm420, %v2866
    %2895 = vst [vmem:[#allocation4 + $0xb0] sm:$0xff] %v2867
    %2896 = vst.msk [vmem:[#allocation4 + $0xb8] sm:$0xff] %vm420, %v2868
    %2897 = vst [vmem:[#allocation4 + $0xc0] sm:$0xff] %v2869
    %2898 = vst.msk [vmem:[#allocation4 + $0xc8] sm:$0xff] %vm420, %v2870
    %2899 = vst [vmem:[#allocation4 + $0xd0] sm:$0xff] %v2871
    %2900 = vst.msk [vmem:[#allocation4 + $0xd8] sm:$0xff] %vm420, %v2872
    %v2901 = vld [vmem:[#allocation4] sm:$0xff]
    %v2902 = vld [vmem:[#allocation4 + $0x8] sm:$0xff]
    %v2903 = vld [vmem:[#allocation4 + $0x10] sm:$0xff]
    %v2904 = vld [vmem:[#allocation4 + $0x18] sm:$0xff]
    %v2905 = vld [vmem:[#allocation4 + $0x20] sm:$0xff]
    %v2906 = vld [vmem:[#allocation4 + $0x28] sm:$0xff]
    %v2907 = vld [vmem:[#allocation4 + $0x30] sm:$0xff]
    %v2908 = vld [vmem:[#allocation4 + $0x38] sm:$0xff]
    %v2909 = vld [vmem:[#allocation4 + $0x40] sm:$0xff]
    %v2910 = vld [vmem:[#allocation4 + $0x48] sm:$0xff]
    %v2911 = vld [vmem:[#allocation4 + $0x50] sm:$0xff]
    %v2912 = vld [vmem:[#allocation4 + $0x58] sm:$0xff]
    %v2913 = vld [vmem:[#allocation4 + $0x60] sm:$0xff]
    %v2914 = vld [vmem:[#allocation4 + $0x68] sm:$0xff]
    %v2915 = vld [vmem:[#allocation4 + $0x70] sm:$0xff]
    %v2916 = vld [vmem:[#allocation4 + $0x78] sm:$0xff]
    %v2917 = vld [vmem:[#allocation4 + $0x80] sm:$0xff]
    %v2918 = vld [vmem:[#allocation4 + $0x88] sm:$0xff]
    %v2919 = vld [vmem:[#allocation4 + $0x90] sm:$0xff]
    %v2920 = vld [vmem:[#allocation4 + $0x98] sm:$0xff]
    %v2921 = vld [vmem:[#allocation4 + $0xa0] sm:$0xff]
    %v2922 = vld [vmem:[#allocation4 + $0xa8] sm:$0xff]
    %v2923 = vld [vmem:[#allocation4 + $0xb0] sm:$0xff]
    %v2924 = vld [vmem:[#allocation4 + $0xb8] sm:$0xff]
    %v2925 = vld [vmem:[#allocation4 + $0xc0] sm:$0xff]
    %v2926 = vld [vmem:[#allocation4 + $0xc8] sm:$0xff]
    %v2927 = vld [vmem:[#allocation4 + $0xd0] sm:$0xff]
    %v2928 = vld [vmem:[#allocation4 + $0xd8] sm:$0xff]
    %v2929 = vld [vmem:[%s4] sm:$0x3]
    %v2931 = vlaneseq
    %v2932 = vshrl.u32 %v2931, 7
    %v2933 = vsub.s32 0, %v2932
    %v2934 = vrot.slane %v2929, %v2933
    %v2935 = vlaneseq
    %v2936 = vshrl.u32 %v2935, 7
    %v2937 = vsub.s32 1, %v2936
    %v2938 = vrot.slane %v2929, %v2937
    %v2941 = vadd.f32 %v2901, %v2934
    %v2942 = vadd.f32 %v2902, %v2938
    %v2943 = vadd.f32 %v2903, %v2934
    %v2944 = vadd.f32 %v2904, %v2938
    %v2945 = vadd.f32 %v2905, %v2934
    %v2946 = vadd.f32 %v2906, %v2938
    %v2947 = vadd.f32 %v2907, %v2934
    %v2948 = vadd.f32 %v2908, %v2938
    %v2949 = vadd.f32 %v2909, %v2934
    %v2950 = vadd.f32 %v2910, %v2938
    %v2951 = vadd.f32 %v2911, %v2934
    %v2952 = vadd.f32 %v2912, %v2938
    %v2953 = vadd.f32 %v2913, %v2934
    %v2954 = vadd.f32 %v2914, %v2938
    %v2955 = vadd.f32 %v2915, %v2934
    %v2956 = vadd.f32 %v2916, %v2938
    %v2957 = vadd.f32 %v2917, %v2934
    %v2958 = vadd.f32 %v2918, %v2938
    %v2959 = vadd.f32 %v2919, %v2934
    %v2960 = vadd.f32 %v2920, %v2938
    %v2961 = vadd.f32 %v2921, %v2934
    %v2962 = vadd.f32 %v2922, %v2938
    %v2963 = vadd.f32 %v2923, %v2934
    %v2964 = vadd.f32 %v2924, %v2938
    %v2965 = vadd.f32 %v2925, %v2934
    %v2966 = vadd.f32 %v2926, %v2938
    %v2967 = vadd.f32 %v2927, %v2934
    %v2968 = vadd.f32 %v2928, %v2938
    %v2969 = vmax.f32 %v2941, 0.0
    %v2970 = vmax.f32 %v2942, 0.0
    %v2971 = vmax.f32 %v2943, 0.0
    %v2972 = vmax.f32 %v2944, 0.0
    %v2973 = vmax.f32 %v2945, 0.0
    %v2974 = vmax.f32 %v2946, 0.0
    %v2975 = vmax.f32 %v2947, 0.0
    %v2976 = vmax.f32 %v2948, 0.0
    %v2977 = vmax.f32 %v2949, 0.0
    %v2978 = vmax.f32 %v2950, 0.0
    %v2979 = vmax.f32 %v2951, 0.0
    %v2980 = vmax.f32 %v2952, 0.0
    %v2981 = vmax.f32 %v2953, 0.0
    %v2982 = vmax.f32 %v2954, 0.0
    %v2983 = vmax.f32 %v2955, 0.0
    %v2984 = vmax.f32 %v2956, 0.0
    %v2985 = vmax.f32 %v2957, 0.0
    %v2986 = vmax.f32 %v2958, 0.0
    %v2987 = vmax.f32 %v2959, 0.0
    %v2988 = vmax.f32 %v2960, 0.0
    %v2989 = vmax.f32 %v2961, 0.0
    %v2990 = vmax.f32 %v2962, 0.0
    %v2991 = vmax.f32 %v2963, 0.0
    %v2992 = vmax.f32 %v2964, 0.0
    %v2993 = vmax.f32 %v2965, 0.0
    %v2994 = vmax.f32 %v2966, 0.0
    %v2995 = vmax.f32 %v2967, 0.0
    %v2996 = vmax.f32 %v2968, 0.0
    %2997 = vst [vmem:[#allocation4] sm:$0xff] %v2969
    %2998 = vst.msk [vmem:[#allocation4 + $0x8] sm:$0xff] %vm420, %v2970
    %2999 = vst [vmem:[#allocation4 + $0x10] sm:$0xff] %v2971
    %3000 = vst.msk [vmem:[#allocation4 + $0x18] sm:$0xff] %vm420, %v2972
    %3001 = vst [vmem:[#allocation4 + $0x20] sm:$0xff] %v2973
    %3002 = vst.msk [vmem:[#allocation4 + $0x28] sm:$0xff] %vm420, %v2974
    %3003 = vst [vmem:[#allocation4 + $0x30] sm:$0xff] %v2975
    %3004 = vst.msk [vmem:[#allocation4 + $0x38] sm:$0xff] %vm420, %v2976
    %3005 = vst [vmem:[#allocation4 + $0x40] sm:$0xff] %v2977
    %3006 = vst.msk [vmem:[#allocation4 + $0x48] sm:$0xff] %vm420, %v2978
    %3007 = vst [vmem:[#allocation4 + $0x50] sm:$0xff] %v2979
    %3008 = vst.msk [vmem:[#allocation4 + $0x58] sm:$0xff] %vm420, %v2980
    %3009 = vst [vmem:[#allocation4 + $0x60] sm:$0xff] %v2981
    %3010 = vst.msk [vmem:[#allocation4 + $0x68] sm:$0xff] %vm420, %v2982
    %3011 = vst [vmem:[#allocation4 + $0x70] sm:$0xff] %v2983
    %3012 = vst.msk [vmem:[#allocation4 + $0x78] sm:$0xff] %vm420, %v2984
    %3013 = vst [vmem:[#allocation4 + $0x80] sm:$0xff] %v2985
    %3014 = vst.msk [vmem:[#allocation4 + $0x88] sm:$0xff] %vm420, %v2986
    %3015 = vst [vmem:[#allocation4 + $0x90] sm:$0xff] %v2987
    %3016 = vst.msk [vmem:[#allocation4 + $0x98] sm:$0xff] %vm420, %v2988
    %3017 = vst [vmem:[#allocation4 + $0xa0] sm:$0xff] %v2989
    %3018 = vst.msk [vmem:[#allocation4 + $0xa8] sm:$0xff] %vm420, %v2990
    %3019 = vst [vmem:[#allocation4 + $0xb0] sm:$0xff] %v2991
    %3020 = vst.msk [vmem:[#allocation4 + $0xb8] sm:$0xff] %vm420, %v2992
    %3021 = vst [vmem:[#allocation4 + $0xc0] sm:$0xff] %v2993
    %3022 = vst.msk [vmem:[#allocation4 + $0xc8] sm:$0xff] %vm420, %v2994
    %3023 = vst [vmem:[#allocation4 + $0xd0] sm:$0xff] %v2995
    %3024 = vst.msk [vmem:[#allocation4 + $0xd8] sm:$0xff] %vm420, %v2996
    %v3025 = vld [vmem:[#allocation4] sm:$0xff]
    %v3026 = vld [vmem:[#allocation4 + $0x8] sm:$0xff]
    %v3027 = vld [vmem:[#allocation4 + $0x10] sm:$0xff]
    %v3028 = vld [vmem:[#allocation4 + $0x18] sm:$0xff]
    %v3029 = vmax.f32 %v3025, %v3027
    %v3030 = vmax.f32 %v3026, %v3028
    %3033 = vrot.lane.b32.xlu0 %v3029, 112
    %v3034 = vpop.permute.xlu0 %3033
    %3035 = vrot.lane.b32.xlu0 %v3030, 112
    %v3036 = vpop.permute.xlu0 %3035
    %vm3037 = vcmask 916480
    %v3038 = vsel %vm3037, %v3034, %v3036
    %3041 = vrot.lane.b32.xlu0 %v3029, 80
    %v3042 = vpop.permute.xlu0 %3041
    %vm3044 = vcmask 654336
    %v3045 = vsel %vm3044, %v3036, %v3042
    %v3046 = vmax.f32 %v3029, %v3038
    %v3047 = vmax.f32 %v3030, %v3045
    %v3048 = vld [vmem:[#allocation7] sm:$0xff]
    %v3049 = vld [vmem:[#allocation7 + $0x8] sm:$0xff]
    %v3050 = vld [vmem:[#allocation7 + $0x10] sm:$0xff]
    %v3051 = vld [vmem:[#allocation7 + $0x18] sm:$0xff]
    %v3052 = vld [vmem:[#allocation7 + $0x20] sm:$0xff]
    %v3053 = vld [vmem:[#allocation7 + $0x28] sm:$0xff]
    %v3054 = vld [vmem:[#allocation7 + $0x30] sm:$0xff]
    %v3055 = vld [vmem:[#allocation7 + $0x38] sm:$0xff]
    %v3056 = vld [vmem:[#allocation7 + $0x40] sm:$0xff]
    %v3057 = vld [vmem:[#allocation7 + $0x48] sm:$0xff]
    %v3058 = vld [vmem:[#allocation7 + $0x50] sm:$0xff]
    %v3059 = vld [vmem:[#allocation7 + $0x58] sm:$0xff]
    %v3060 = vld [vmem:[#allocation7 + $0x60] sm:$0xff]
    %v3061 = vld [vmem:[#allocation7 + $0x68] sm:$0xff]
    %v3062 = vld [vmem:[#allocation7 + $0x70] sm:$0xff]
    %v3063 = vld [vmem:[#allocation7 + $0x78] sm:$0xff]
    %v3064 = vld [vmem:[#allocation7 + $0x80] sm:$0xff]
    %v3065 = vld [vmem:[#allocation7 + $0x88] sm:$0xff]
    %v3066 = vld [vmem:[#allocation7 + $0x90] sm:$0xff]
    %v3067 = vld [vmem:[#allocation7 + $0x98] sm:$0xff]
    %v3068 = vld [vmem:[#allocation7 + $0xa0] sm:$0xff]
    %v3069 = vld [vmem:[#allocation7 + $0xa8] sm:$0xff]
    %v3070 = vld [vmem:[#allocation7 + $0xb0] sm:$0xff]
    %v3071 = vld [vmem:[#allocation7 + $0xb8] sm:$0xff]
    %v3072 = vld [vmem:[#allocation7 + $0xc0] sm:$0xff]
    %v3073 = vld [vmem:[#allocation7 + $0xc8] sm:$0xff]
    %v3074 = vld [vmem:[#allocation7 + $0xd0] sm:$0xff]
    %v3075 = vld [vmem:[#allocation7 + $0xd8] sm:$0xff]
    %v3076 = vld [vmem:[#allocation4 + $0x20] sm:$0xff]
    %v3077 = vld [vmem:[#allocation4 + $0x28] sm:$0xff]
    %v3078 = vld [vmem:[#allocation4 + $0x30] sm:$0xff]
    %v3079 = vld [vmem:[#allocation4 + $0x38] sm:$0xff]
    %v3080 = vmax.f32 %v3076, %v3078
    %v3081 = vmax.f32 %v3077, %v3079
    %3084 = vrot.lane.b32.xlu0 %v3080, 112
    %v3085 = vpop.permute.xlu0 %3084
    %3086 = vrot.lane.b32.xlu0 %v3081, 112
    %v3087 = vpop.permute.xlu0 %3086
    %v3088 = vsel %vm3037, %v3085, %v3087
    %3091 = vrot.lane.b32.xlu0 %v3080, 80
    %v3092 = vpop.permute.xlu0 %3091
    %v3094 = vsel %vm3044, %v3087, %v3092
    %v3095 = vmax.f32 %v3080, %v3088
    %v3096 = vmax.f32 %v3081, %v3094
    %s3097 = scalar_lea.vmem [#allocation7], 224
    %v3098 = vld [vmem:[%s3097] sm:$0xff]
    %v3099 = vld [vmem:[%s3097 + $0x8] sm:$0xff]
    %v3100 = vld [vmem:[%s3097 + $0x10] sm:$0xff]
    %v3101 = vld [vmem:[%s3097 + $0x18] sm:$0xff]
    %v3102 = vld [vmem:[%s3097 + $0x20] sm:$0xff]
    %v3103 = vld [vmem:[%s3097 + $0x28] sm:$0xff]
    %v3104 = vld [vmem:[%s3097 + $0x30] sm:$0xff]
    %v3105 = vld [vmem:[%s3097 + $0x38] sm:$0xff]
    %v3106 = vld [vmem:[%s3097 + $0x40] sm:$0xff]
    %v3107 = vld [vmem:[%s3097 + $0x48] sm:$0xff]
    %v3108 = vld [vmem:[%s3097 + $0x50] sm:$0xff]
    %v3109 = vld [vmem:[%s3097 + $0x58] sm:$0xff]
    %v3110 = vld [vmem:[%s3097 + $0x60] sm:$0xff]
    %v3111 = vld [vmem:[%s3097 + $0x68] sm:$0xff]
    %v3112 = vld [vmem:[%s3097 + $0x70] sm:$0xff]
    %v3113 = vld [vmem:[%s3097 + $0x78] sm:$0xff]
    %v3114 = vld [vmem:[%s3097 + $0x80] sm:$0xff]
    %v3115 = vld [vmem:[%s3097 + $0x88] sm:$0xff]
    %v3116 = vld [vmem:[%s3097 + $0x90] sm:$0xff]
    %v3117 = vld [vmem:[%s3097 + $0x98] sm:$0xff]
    %v3118 = vld [vmem:[%s3097 + $0xa0] sm:$0xff]
    %v3119 = vld [vmem:[%s3097 + $0xa8] sm:$0xff]
    %v3120 = vld [vmem:[%s3097 + $0xb0] sm:$0xff]
    %v3121 = vld [vmem:[%s3097 + $0xb8] sm:$0xff]
    %v3122 = vld [vmem:[%s3097 + $0xc0] sm:$0xff]
    %v3123 = vld [vmem:[%s3097 + $0xc8] sm:$0xff]
    %v3124 = vld [vmem:[%s3097 + $0xd0] sm:$0xff]
    %v3125 = vld [vmem:[%s3097 + $0xd8] sm:$0xff]
    %v3127 = vsel %vm420, %v3096, 0
    %3129 = vmatprep.subr.mxu0 0.0
    %3130 = vmatpush1.msra.mxu0 %v3113
    %3131 = vmatprep.subr.mxu0 0.0
    %3132 = vmatpush1.msra.mxu0 %v3112
    %3133 = vmatprep.subr.mxu0 0.0
    %3134 = vmatpush1.msra.mxu0 %v3111
    %3135 = vmatprep.subr.mxu0 0.0
    %3136 = vmatpush1.msra.mxu0 %v3110
    %3137 = vmatprep.subr.mxu0 0.0
    %3138 = vmatpush1.msra.mxu0 %v3109
    %3139 = vmatprep.subr.mxu0 0.0
    %3140 = vmatpush1.msra.mxu0 %v3108
    %3141 = vmatprep.subr.mxu0 0.0
    %3142 = vmatpush1.msra.mxu0 %v3107
    %3143 = vmatprep.subr.mxu0 0.0
    %3144 = vmatpush1.msra.mxu0 %v3106
    %3145 = vmatprep.subr.mxu0 0.0
    %3146 = vmatpush1.msra.mxu0 %v3105
    %3147 = vmatprep.subr.mxu0 0.0
    %3148 = vmatpush1.msra.mxu0 %v3104
    %3149 = vmatprep.subr.mxu0 0.0
    %3150 = vmatpush1.msra.mxu0 %v3103
    %3151 = vmatprep.subr.mxu0 0.0
    %3152 = vmatpush1.msra.mxu0 %v3102
    %3153 = vmatprep.subr.mxu0 0.0
    %3154 = vmatpush1.msra.mxu0 %v3101
    %3155 = vmatprep.subr.mxu0 0.0
    %3156 = vmatpush1.msra.mxu0 %v3100
    %3157 = vmatprep.subr.mxu0 0.0
    %3158 = vmatpush1.msra.mxu0 %v3099
    %3159 = vmatprep.subr.mxu0 0.0
    %3160 = vmatpush1.msra.mxu0 %v3098
    %3161 = vmatprep.subr.mxu0 0.0
    %3162 = vmatpush2.msra.mxu0 0.0
    %3163 = vmatprep.subr.mxu0 0.0
    %3164 = vmatpush2.msra.mxu0 0.0
    %3165 = vmatprep.subr.mxu0 0.0
    %3166 = vmatpush2.msra.mxu0 0.0
    %3167 = vmatprep.subr.mxu0 0.0
    %3168 = vmatpush2.msra.mxu0 0.0
    %3169 = vmatprep.subr.mxu0 0.0
    %3170 = vmatpush2.msra.mxu0 %v3125
    %3171 = vmatprep.subr.mxu0 0.0
    %3172 = vmatpush2.msra.mxu0 %v3124
    %3173 = vmatprep.subr.mxu0 0.0
    %3174 = vmatpush2.msra.mxu0 %v3123
    %3175 = vmatprep.subr.mxu0 0.0
    %3176 = vmatpush2.msra.mxu0 %v3122
    %3177 = vmatprep.subr.mxu0 0.0
    %3178 = vmatpush2.msra.mxu0 %v3121
    %3179 = vmatprep.subr.mxu0 0.0
    %3180 = vmatpush2.msra.mxu0 %v3120
    %3181 = vmatprep.subr.mxu0 0.0
    %3182 = vmatpush2.msra.mxu0 %v3119
    %3183 = vmatprep.subr.mxu0 0.0
    %3184 = vmatpush2.msra.mxu0 %v3118
    %3185 = vmatprep.subr.mxu0 0.0
    %3186 = vmatpush2.msra.mxu0 %v3117
    %3187 = vmatprep.subr.mxu0 0.0
    %3188 = vmatpush2.msra.mxu0 %v3116
    %3189 = vmatprep.subr.mxu0 0.0
    %3190 = vmatpush2.msra.mxu0 %v3115
    %3191 = vmatprep.subr.mxu0 0.0
    %3192 = vmatpush2.msra.mxu0 %v3114
    %3193 = vmatprep.mubr.f32.mxu0 %v3127
    %3194 = vmatmul.mubr.f32.gmra.mxu0 %v3095
    %v3195 = vpop.f32.mrf.mxu0
    %v3196 = vadd.f32 0.0, %v3195
    %v3197 = vpop.f32.mrf.mxu0
    %3198 = vdwg.mxu0
    %v3200 = vsel %vm420, %v3047, 0
    %3202 = vmatprep.subr.mxu0 0.0
    %3203 = vmatpush1.msra.mxu0 %v3063
    %3204 = vmatprep.subr.mxu0 0.0
    %3205 = vmatpush1.msra.mxu0 %v3062
    %3206 = vmatprep.subr.mxu0 0.0
    %3207 = vmatpush1.msra.mxu0 %v3061
    %3208 = vmatprep.subr.mxu0 0.0
    %3209 = vmatpush1.msra.mxu0 %v3060
    %3210 = vmatprep.subr.mxu0 0.0
    %3211 = vmatpush1.msra.mxu0 %v3059
    %3212 = vmatprep.subr.mxu0 0.0
    %3213 = vmatpush1.msra.mxu0 %v3058
    %3214 = vmatprep.subr.mxu0 0.0
    %3215 = vmatpush1.msra.mxu0 %v3057
    %3216 = vmatprep.subr.mxu0 0.0
    %3217 = vmatpush1.msra.mxu0 %v3056
    %3218 = vmatprep.subr.mxu0 0.0
    %3219 = vmatpush1.msra.mxu0 %v3055
    %3220 = vmatprep.subr.mxu0 0.0
    %3221 = vmatpush1.msra.mxu0 %v3054
    %3222 = vmatprep.subr.mxu0 0.0
    %3223 = vmatpush1.msra.mxu0 %v3053
    %3224 = vmatprep.subr.mxu0 0.0
    %3225 = vmatpush1.msra.mxu0 %v3052
    %3226 = vmatprep.subr.mxu0 0.0
    %3227 = vmatpush1.msra.mxu0 %v3051
    %3228 = vmatprep.subr.mxu0 0.0
    %3229 = vmatpush1.msra.mxu0 %v3050
    %3230 = vmatprep.subr.mxu0 0.0
    %3231 = vmatpush1.msra.mxu0 %v3049
    %3232 = vmatprep.subr.mxu0 0.0
    %3233 = vmatpush1.msra.mxu0 %v3048
    %3234 = vmatprep.subr.mxu0 0.0
    %3235 = vmatpush2.msra.mxu0 0.0
    %3236 = vmatprep.subr.mxu0 0.0
    %3237 = vmatpush2.msra.mxu0 0.0
    %3238 = vmatprep.subr.mxu0 0.0
    %3239 = vmatpush2.msra.mxu0 0.0
    %3240 = vmatprep.subr.mxu0 0.0
    %3241 = vmatpush2.msra.mxu0 0.0
    %3242 = vmatprep.subr.mxu0 0.0
    %3243 = vmatpush2.msra.mxu0 %v3075
    %3244 = vmatprep.subr.mxu0 0.0
    %3245 = vmatpush2.msra.mxu0 %v3074
    %3246 = vmatprep.subr.mxu0 0.0
    %3247 = vmatpush2.msra.mxu0 %v3073
    %3248 = vmatprep.subr.mxu0 0.0
    %3249 = vmatpush2.msra.mxu0 %v3072
    %3250 = vmatprep.subr.mxu0 0.0
    %3251 = vmatpush2.msra.mxu0 %v3071
    %3252 = vmatprep.subr.mxu0 0.0
    %3253 = vmatpush2.msra.mxu0 %v3070
    %3254 = vmatprep.subr.mxu0 0.0
    %3255 = vmatpush2.msra.mxu0 %v3069
    %3256 = vmatprep.subr.mxu0 0.0
    %3257 = vmatpush2.msra.mxu0 %v3068
    %3258 = vmatprep.subr.mxu0 0.0
    %3259 = vmatpush2.msra.mxu0 %v3067
    %3260 = vmatprep.subr.mxu0 0.0
    %3261 = vmatpush2.msra.mxu0 %v3066
    %3262 = vmatprep.subr.mxu0 0.0
    %3263 = vmatpush2.msra.mxu0 %v3065
    %3264 = vmatprep.subr.mxu0 0.0
    %3265 = vmatpush2.msra.mxu0 %v3064
    %3266 = vmatprep.mubr.f32.mxu0 %v3200
    %3267 = vmatmul.mubr.f32.gmra.mxu0 %v3046
    %v3268 = vpop.f32.mrf.mxu0
    %v3269 = vadd.f32 %v3196, %v3268
    %v3270 = vpop.f32.mrf.mxu0
    %3271 = vdwg.mxu0
    %v3272 = vld [vmem:[#allocation4 + $0x40] sm:$0xff]
    %v3273 = vld [vmem:[#allocation4 + $0x48] sm:$0xff]
    %v3274 = vld [vmem:[#allocation4 + $0x50] sm:$0xff]
    %v3275 = vld [vmem:[#allocation4 + $0x58] sm:$0xff]
    %v3276 = vmax.f32 %v3272, %v3274
    %v3277 = vmax.f32 %v3273, %v3275
    %3280 = vrot.lane.b32.xlu0 %v3276, 112
    %v3281 = vpop.permute.xlu0 %3280
    %3282 = vrot.lane.b32.xlu0 %v3277, 112
    %v3283 = vpop.permute.xlu0 %3282
    %v3284 = vsel %vm3037, %v3281, %v3283
    %3287 = vrot.lane.b32.xlu0 %v3276, 80
    %v3288 = vpop.permute.xlu0 %3287
    %v3290 = vsel %vm3044, %v3283, %v3288
    %v3291 = vmax.f32 %v3276, %v3284
    %v3292 = vmax.f32 %v3277, %v3290
    %s3293 = scalar_lea.vmem [#allocation7], 448
    %v3294 = vld [vmem:[%s3293] sm:$0xff]
    %v3295 = vld [vmem:[%s3293 + $0x8] sm:$0xff]
    %v3296 = vld [vmem:[%s3293 + $0x10] sm:$0xff]
    %v3297 = vld [vmem:[%s3293 + $0x18] sm:$0xff]
    %v3298 = vld [vmem:[%s3293 + $0x20] sm:$0xff]
    %v3299 = vld [vmem:[%s3293 + $0x28] sm:$0xff]
    %v3300 = vld [vmem:[%s3293 + $0x30] sm:$0xff]
    %v3301 = vld [vmem:[%s3293 + $0x38] sm:$0xff]
    %v3302 = vld [vmem:[%s3293 + $0x40] sm:$0xff]
    %v3303 = vld [vmem:[%s3293 + $0x48] sm:$0xff]
    %v3304 = vld [vmem:[%s3293 + $0x50] sm:$0xff]
    %v3305 = vld [vmem:[%s3293 + $0x58] sm:$0xff]
    %v3306 = vld [vmem:[%s3293 + $0x60] sm:$0xff]
    %v3307 = vld [vmem:[%s3293 + $0x68] sm:$0xff]
    %v3308 = vld [vmem:[%s3293 + $0x70] sm:$0xff]
    %v3309 = vld [vmem:[%s3293 + $0x78] sm:$0xff]
    %v3310 = vld [vmem:[%s3293 + $0x80] sm:$0xff]
    %v3311 = vld [vmem:[%s3293 + $0x88] sm:$0xff]
    %v3312 = vld [vmem:[%s3293 + $0x90] sm:$0xff]
    %v3313 = vld [vmem:[%s3293 + $0x98] sm:$0xff]
    %v3314 = vld [vmem:[%s3293 + $0xa0] sm:$0xff]
    %v3315 = vld [vmem:[%s3293 + $0xa8] sm:$0xff]
    %v3316 = vld [vmem:[%s3293 + $0xb0] sm:$0xff]
    %v3317 = vld [vmem:[%s3293 + $0xb8] sm:$0xff]
    %v3318 = vld [vmem:[%s3293 + $0xc0] sm:$0xff]
    %v3319 = vld [vmem:[%s3293 + $0xc8] sm:$0xff]
    %v3320 = vld [vmem:[%s3293 + $0xd0] sm:$0xff]
    %v3321 = vld [vmem:[%s3293 + $0xd8] sm:$0xff]
    %v3323 = vsel %vm420, %v3292, 0
    %3325 = vmatprep.subr.mxu0 0.0
    %3326 = vmatpush1.msra.mxu0 %v3309
    %3327 = vmatprep.subr.mxu0 0.0
    %3328 = vmatpush1.msra.mxu0 %v3308
    %3329 = vmatprep.subr.mxu0 0.0
    %3330 = vmatpush1.msra.mxu0 %v3307
    %3331 = vmatprep.subr.mxu0 0.0
    %3332 = vmatpush1.msra.mxu0 %v3306
    %3333 = vmatprep.subr.mxu0 0.0
    %3334 = vmatpush1.msra.mxu0 %v3305
    %3335 = vmatprep.subr.mxu0 0.0
    %3336 = vmatpush1.msra.mxu0 %v3304
    %3337 = vmatprep.subr.mxu0 0.0
    %3338 = vmatpush1.msra.mxu0 %v3303
    %3339 = vmatprep.subr.mxu0 0.0
    %3340 = vmatpush1.msra.mxu0 %v3302
    %3341 = vmatprep.subr.mxu0 0.0
    %3342 = vmatpush1.msra.mxu0 %v3301
    %3343 = vmatprep.subr.mxu0 0.0
    %3344 = vmatpush1.msra.mxu0 %v3300
    %3345 = vmatprep.subr.mxu0 0.0
    %3346 = vmatpush1.msra.mxu0 %v3299
    %3347 = vmatprep.subr.mxu0 0.0
    %3348 = vmatpush1.msra.mxu0 %v3298
    %3349 = vmatprep.subr.mxu0 0.0
    %3350 = vmatpush1.msra.mxu0 %v3297
    %3351 = vmatprep.subr.mxu0 0.0
    %3352 = vmatpush1.msra.mxu0 %v3296
    %3353 = vmatprep.subr.mxu0 0.0
    %3354 = vmatpush1.msra.mxu0 %v3295
    %3355 = vmatprep.subr.mxu0 0.0
    %3356 = vmatpush1.msra.mxu0 %v3294
    %3357 = vmatprep.subr.mxu0 0.0
    %3358 = vmatpush2.msra.mxu0 0.0
    %3359 = vmatprep.subr.mxu0 0.0
    %3360 = vmatpush2.msra.mxu0 0.0
    %3361 = vmatprep.subr.mxu0 0.0
    %3362 = vmatpush2.msra.mxu0 0.0
    %3363 = vmatprep.subr.mxu0 0.0
    %3364 = vmatpush2.msra.mxu0 0.0
    %3365 = vmatprep.subr.mxu0 0.0
    %3366 = vmatpush2.msra.mxu0 %v3321
    %3367 = vmatprep.subr.mxu0 0.0
    %3368 = vmatpush2.msra.mxu0 %v3320
    %3369 = vmatprep.subr.mxu0 0.0
    %3370 = vmatpush2.msra.mxu0 %v3319
    %3371 = vmatprep.subr.mxu0 0.0
    %3372 = vmatpush2.msra.mxu0 %v3318
    %3373 = vmatprep.subr.mxu0 0.0
    %3374 = vmatpush2.msra.mxu0 %v3317
    %3375 = vmatprep.subr.mxu0 0.0
    %3376 = vmatpush2.msra.mxu0 %v3316
    %3377 = vmatprep.subr.mxu0 0.0
    %3378 = vmatpush2.msra.mxu0 %v3315
    %3379 = vmatprep.subr.mxu0 0.0
    %3380 = vmatpush2.msra.mxu0 %v3314
    %3381 = vmatprep.subr.mxu0 0.0
    %3382 = vmatpush2.msra.mxu0 %v3313
    %3383 = vmatprep.subr.mxu0 0.0
    %3384 = vmatpush2.msra.mxu0 %v3312
    %3385 = vmatprep.subr.mxu0 0.0
    %3386 = vmatpush2.msra.mxu0 %v3311
    %3387 = vmatprep.subr.mxu0 0.0
    %3388 = vmatpush2.msra.mxu0 %v3310
    %3389 = vmatprep.mubr.f32.mxu0 %v3323
    %3390 = vmatmul.mubr.f32.gmra.mxu0 %v3291
    %v3391 = vpop.f32.mrf.mxu0
    %v3392 = vadd.f32 0.0, %v3391
    %v3393 = vpop.f32.mrf.mxu0
    %3394 = vdwg.mxu0
    %v3395 = vadd.f32 %v3269, %v3392
    %v3396 = vld [vmem:[#allocation4 + $0x60] sm:$0xff]
    %v3397 = vld [vmem:[#allocation4 + $0x68] sm:$0xff]
    %v3398 = vld [vmem:[#allocation4 + $0x70] sm:$0xff]
    %v3399 = vld [vmem:[#allocation4 + $0x78] sm:$0xff]
    %v3400 = vmax.f32 %v3396, %v3398
    %v3401 = vmax.f32 %v3397, %v3399
    %3404 = vrot.lane.b32.xlu0 %v3400, 112
    %v3405 = vpop.permute.xlu0 %3404
    %3406 = vrot.lane.b32.xlu0 %v3401, 112
    %v3407 = vpop.permute.xlu0 %3406
    %v3408 = vsel %vm3037, %v3405, %v3407
    %3411 = vrot.lane.b32.xlu0 %v3400, 80
    %v3412 = vpop.permute.xlu0 %3411
    %v3414 = vsel %vm3044, %v3407, %v3412
    %v3415 = vmax.f32 %v3400, %v3408
    %v3416 = vmax.f32 %v3401, %v3414
    %s3417 = scalar_lea.vmem [#allocation7], 672
    %v3418 = vld [vmem:[%s3417] sm:$0xff]
    %v3419 = vld [vmem:[%s3417 + $0x8] sm:$0xff]
    %v3420 = vld [vmem:[%s3417 + $0x10] sm:$0xff]
    %v3421 = vld [vmem:[%s3417 + $0x18] sm:$0xff]
    %v3422 = vld [vmem:[%s3417 + $0x20] sm:$0xff]
    %v3423 = vld [vmem:[%s3417 + $0x28] sm:$0xff]
    %v3424 = vld [vmem:[%s3417 + $0x30] sm:$0xff]
    %v3425 = vld [vmem:[%s3417 + $0x38] sm:$0xff]
    %v3426 = vld [vmem:[%s3417 + $0x40] sm:$0xff]
    %v3427 = vld [vmem:[%s3417 + $0x48] sm:$0xff]
    %v3428 = vld [vmem:[%s3417 + $0x50] sm:$0xff]
    %v3429 = vld [vmem:[%s3417 + $0x58] sm:$0xff]
    %v3430 = vld [vmem:[%s3417 + $0x60] sm:$0xff]
    %v3431 = vld [vmem:[%s3417 + $0x68] sm:$0xff]
    %v3432 = vld [vmem:[%s3417 + $0x70] sm:$0xff]
    %v3433 = vld [vmem:[%s3417 + $0x78] sm:$0xff]
    %v3434 = vld [vmem:[%s3417 + $0x80] sm:$0xff]
    %v3435 = vld [vmem:[%s3417 + $0x88] sm:$0xff]
    %v3436 = vld [vmem:[%s3417 + $0x90] sm:$0xff]
    %v3437 = vld [vmem:[%s3417 + $0x98] sm:$0xff]
    %v3438 = vld [vmem:[%s3417 + $0xa0] sm:$0xff]
    %v3439 = vld [vmem:[%s3417 + $0xa8] sm:$0xff]
    %v3440 = vld [vmem:[%s3417 + $0xb0] sm:$0xff]
    %v3441 = vld [vmem:[%s3417 + $0xb8] sm:$0xff]
    %v3442 = vld [vmem:[%s3417 + $0xc0] sm:$0xff]
    %v3443 = vld [vmem:[%s3417 + $0xc8] sm:$0xff]
    %v3444 = vld [vmem:[%s3417 + $0xd0] sm:$0xff]
    %v3445 = vld [vmem:[%s3417 + $0xd8] sm:$0xff]
    %v3447 = vsel %vm420, %v3416, 0
    %3449 = vmatprep.subr.mxu0 0.0
    %3450 = vmatpush1.msra.mxu0 %v3433
    %3451 = vmatprep.subr.mxu0 0.0
    %3452 = vmatpush1.msra.mxu0 %v3432
    %3453 = vmatprep.subr.mxu0 0.0
    %3454 = vmatpush1.msra.mxu0 %v3431
    %3455 = vmatprep.subr.mxu0 0.0
    %3456 = vmatpush1.msra.mxu0 %v3430
    %3457 = vmatprep.subr.mxu0 0.0
    %3458 = vmatpush1.msra.mxu0 %v3429
    %3459 = vmatprep.subr.mxu0 0.0
    %3460 = vmatpush1.msra.mxu0 %v3428
    %3461 = vmatprep.subr.mxu0 0.0
    %3462 = vmatpush1.msra.mxu0 %v3427
    %3463 = vmatprep.subr.mxu0 0.0
    %3464 = vmatpush1.msra.mxu0 %v3426
    %3465 = vmatprep.subr.mxu0 0.0
    %3466 = vmatpush1.msra.mxu0 %v3425
    %3467 = vmatprep.subr.mxu0 0.0
    %3468 = vmatpush1.msra.mxu0 %v3424
    %3469 = vmatprep.subr.mxu0 0.0
    %3470 = vmatpush1.msra.mxu0 %v3423
    %3471 = vmatprep.subr.mxu0 0.0
    %3472 = vmatpush1.msra.mxu0 %v3422
    %3473 = vmatprep.subr.mxu0 0.0
    %3474 = vmatpush1.msra.mxu0 %v3421
    %3475 = vmatprep.subr.mxu0 0.0
    %3476 = vmatpush1.msra.mxu0 %v3420
    %3477 = vmatprep.subr.mxu0 0.0
    %3478 = vmatpush1.msra.mxu0 %v3419
    %3479 = vmatprep.subr.mxu0 0.0
    %3480 = vmatpush1.msra.mxu0 %v3418
    %3481 = vmatprep.subr.mxu0 0.0
    %3482 = vmatpush2.msra.mxu0 0.0
    %3483 = vmatprep.subr.mxu0 0.0
    %3484 = vmatpush2.msra.mxu0 0.0
    %3485 = vmatprep.subr.mxu0 0.0
    %3486 = vmatpush2.msra.mxu0 0.0
    %3487 = vmatprep.subr.mxu0 0.0
    %3488 = vmatpush2.msra.mxu0 0.0
    %3489 = vmatprep.subr.mxu0 0.0
    %3490 = vmatpush2.msra.mxu0 %v3445
    %3491 = vmatprep.subr.mxu0 0.0
    %3492 = vmatpush2.msra.mxu0 %v3444
    %3493 = vmatprep.subr.mxu0 0.0
    %3494 = vmatpush2.msra.mxu0 %v3443
    %3495 = vmatprep.subr.mxu0 0.0
    %3496 = vmatpush2.msra.mxu0 %v3442
    %3497 = vmatprep.subr.mxu0 0.0
    %3498 = vmatpush2.msra.mxu0 %v3441
    %3499 = vmatprep.subr.mxu0 0.0
    %3500 = vmatpush2.msra.mxu0 %v3440
    %3501 = vmatprep.subr.mxu0 0.0
    %3502 = vmatpush2.msra.mxu0 %v3439
    %3503 = vmatprep.subr.mxu0 0.0
    %3504 = vmatpush2.msra.mxu0 %v3438
    %3505 = vmatprep.subr.mxu0 0.0
    %3506 = vmatpush2.msra.mxu0 %v3437
    %3507 = vmatprep.subr.mxu0 0.0
    %3508 = vmatpush2.msra.mxu0 %v3436
    %3509 = vmatprep.subr.mxu0 0.0
    %3510 = vmatpush2.msra.mxu0 %v3435
    %3511 = vmatprep.subr.mxu0 0.0
    %3512 = vmatpush2.msra.mxu0 %v3434
    %3513 = vmatprep.mubr.f32.mxu0 %v3447
    %3514 = vmatmul.mubr.f32.gmra.mxu0 %v3415
    %v3515 = vpop.f32.mrf.mxu0
    %v3516 = vadd.f32 0.0, %v3515
    %v3517 = vpop.f32.mrf.mxu0
    %3518 = vdwg.mxu0
    %v3519 = vadd.f32 %v3395, %v3516
    %v3520 = vld [vmem:[#allocation4 + $0x80] sm:$0xff]
    %v3521 = vld [vmem:[#allocation4 + $0x88] sm:$0xff]
    %v3522 = vld [vmem:[#allocation4 + $0x90] sm:$0xff]
    %v3523 = vld [vmem:[#allocation4 + $0x98] sm:$0xff]
    %v3524 = vmax.f32 %v3520, %v3522
    %v3525 = vmax.f32 %v3521, %v3523
    %3528 = vrot.lane.b32.xlu0 %v3524, 112
    %v3529 = vpop.permute.xlu0 %3528
    %3530 = vrot.lane.b32.xlu0 %v3525, 112
    %v3531 = vpop.permute.xlu0 %3530
    %v3532 = vsel %vm3037, %v3529, %v3531
    %3535 = vrot.lane.b32.xlu0 %v3524, 80
    %v3536 = vpop.permute.xlu0 %3535
    %v3538 = vsel %vm3044, %v3531, %v3536
    %v3539 = vmax.f32 %v3524, %v3532
    %v3540 = vmax.f32 %v3525, %v3538
    %s3541 = scalar_lea.vmem [#allocation7], 896
    %v3542 = vld [vmem:[%s3541] sm:$0xff]
    %v3543 = vld [vmem:[%s3541 + $0x8] sm:$0xff]
    %v3544 = vld [vmem:[%s3541 + $0x10] sm:$0xff]
    %v3545 = vld [vmem:[%s3541 + $0x18] sm:$0xff]
    %v3546 = vld [vmem:[%s3541 + $0x20] sm:$0xff]
    %v3547 = vld [vmem:[%s3541 + $0x28] sm:$0xff]
    %v3548 = vld [vmem:[%s3541 + $0x30] sm:$0xff]
    %v3549 = vld [vmem:[%s3541 + $0x38] sm:$0xff]
    %v3550 = vld [vmem:[%s3541 + $0x40] sm:$0xff]
    %v3551 = vld [vmem:[%s3541 + $0x48] sm:$0xff]
    %v3552 = vld [vmem:[%s3541 + $0x50] sm:$0xff]
    %v3553 = vld [vmem:[%s3541 + $0x58] sm:$0xff]
    %v3554 = vld [vmem:[%s3541 + $0x60] sm:$0xff]
    %v3555 = vld [vmem:[%s3541 + $0x68] sm:$0xff]
    %v3556 = vld [vmem:[%s3541 + $0x70] sm:$0xff]
    %v3557 = vld [vmem:[%s3541 + $0x78] sm:$0xff]
    %v3558 = vld [vmem:[%s3541 + $0x80] sm:$0xff]
    %v3559 = vld [vmem:[%s3541 + $0x88] sm:$0xff]
    %v3560 = vld [vmem:[%s3541 + $0x90] sm:$0xff]
    %v3561 = vld [vmem:[%s3541 + $0x98] sm:$0xff]
    %v3562 = vld [vmem:[%s3541 + $0xa0] sm:$0xff]
    %v3563 = vld [vmem:[%s3541 + $0xa8] sm:$0xff]
    %v3564 = vld [vmem:[%s3541 + $0xb0] sm:$0xff]
    %v3565 = vld [vmem:[%s3541 + $0xb8] sm:$0xff]
    %v3566 = vld [vmem:[%s3541 + $0xc0] sm:$0xff]
    %v3567 = vld [vmem:[%s3541 + $0xc8] sm:$0xff]
    %v3568 = vld [vmem:[%s3541 + $0xd0] sm:$0xff]
    %v3569 = vld [vmem:[%s3541 + $0xd8] sm:$0xff]
    %v3571 = vsel %vm420, %v3540, 0
    %3573 = vmatprep.subr.mxu0 0.0
    %3574 = vmatpush1.msra.mxu0 %v3557
    %3575 = vmatprep.subr.mxu0 0.0
    %3576 = vmatpush1.msra.mxu0 %v3556
    %3577 = vmatprep.subr.mxu0 0.0
    %3578 = vmatpush1.msra.mxu0 %v3555
    %3579 = vmatprep.subr.mxu0 0.0
    %3580 = vmatpush1.msra.mxu0 %v3554
    %3581 = vmatprep.subr.mxu0 0.0
    %3582 = vmatpush1.msra.mxu0 %v3553
    %3583 = vmatprep.subr.mxu0 0.0
    %3584 = vmatpush1.msra.mxu0 %v3552
    %3585 = vmatprep.subr.mxu0 0.0
    %3586 = vmatpush1.msra.mxu0 %v3551
    %3587 = vmatprep.subr.mxu0 0.0
    %3588 = vmatpush1.msra.mxu0 %v3550
    %3589 = vmatprep.subr.mxu0 0.0
    %3590 = vmatpush1.msra.mxu0 %v3549
    %3591 = vmatprep.subr.mxu0 0.0
    %3592 = vmatpush1.msra.mxu0 %v3548
    %3593 = vmatprep.subr.mxu0 0.0
    %3594 = vmatpush1.msra.mxu0 %v3547
    %3595 = vmatprep.subr.mxu0 0.0
    %3596 = vmatpush1.msra.mxu0 %v3546
    %3597 = vmatprep.subr.mxu0 0.0
    %3598 = vmatpush1.msra.mxu0 %v3545
    %3599 = vmatprep.subr.mxu0 0.0
    %3600 = vmatpush1.msra.mxu0 %v3544
    %3601 = vmatprep.subr.mxu0 0.0
    %3602 = vmatpush1.msra.mxu0 %v3543
    %3603 = vmatprep.subr.mxu0 0.0
    %3604 = vmatpush1.msra.mxu0 %v3542
    %3605 = vmatprep.subr.mxu0 0.0
    %3606 = vmatpush2.msra.mxu0 0.0
    %3607 = vmatprep.subr.mxu0 0.0
    %3608 = vmatpush2.msra.mxu0 0.0
    %3609 = vmatprep.subr.mxu0 0.0
    %3610 = vmatpush2.msra.mxu0 0.0
    %3611 = vmatprep.subr.mxu0 0.0
    %3612 = vmatpush2.msra.mxu0 0.0
    %3613 = vmatprep.subr.mxu0 0.0
    %3614 = vmatpush2.msra.mxu0 %v3569
    %3615 = vmatprep.subr.mxu0 0.0
    %3616 = vmatpush2.msra.mxu0 %v3568
    %3617 = vmatprep.subr.mxu0 0.0
    %3618 = vmatpush2.msra.mxu0 %v3567
    %3619 = vmatprep.subr.mxu0 0.0
    %3620 = vmatpush2.msra.mxu0 %v3566
    %3621 = vmatprep.subr.mxu0 0.0
    %3622 = vmatpush2.msra.mxu0 %v3565
    %3623 = vmatprep.subr.mxu0 0.0
    %3624 = vmatpush2.msra.mxu0 %v3564
    %3625 = vmatprep.subr.mxu0 0.0
    %3626 = vmatpush2.msra.mxu0 %v3563
    %3627 = vmatprep.subr.mxu0 0.0
    %3628 = vmatpush2.msra.mxu0 %v3562
    %3629 = vmatprep.subr.mxu0 0.0
    %3630 = vmatpush2.msra.mxu0 %v3561
    %3631 = vmatprep.subr.mxu0 0.0
    %3632 = vmatpush2.msra.mxu0 %v3560
    %3633 = vmatprep.subr.mxu0 0.0
    %3634 = vmatpush2.msra.mxu0 %v3559
    %3635 = vmatprep.subr.mxu0 0.0
    %3636 = vmatpush2.msra.mxu0 %v3558
    %3637 = vmatprep.mubr.f32.mxu0 %v3571
    %3638 = vmatmul.mubr.f32.gmra.mxu0 %v3539
    %v3639 = vpop.f32.mrf.mxu0
    %v3640 = vadd.f32 0.0, %v3639
    %v3641 = vpop.f32.mrf.mxu0
    %3642 = vdwg.mxu0
    %v3643 = vadd.f32 %v3519, %v3640
    %v3644 = vld [vmem:[#allocation4 + $0xa0] sm:$0xff]
    %v3645 = vld [vmem:[#allocation4 + $0xa8] sm:$0xff]
    %v3646 = vld [vmem:[#allocation4 + $0xb0] sm:$0xff]
    %v3647 = vld [vmem:[#allocation4 + $0xb8] sm:$0xff]
    %v3648 = vmax.f32 %v3644, %v3646
    %v3649 = vmax.f32 %v3645, %v3647
    %3652 = vrot.lane.b32.xlu0 %v3648, 112
    %v3653 = vpop.permute.xlu0 %3652
    %3654 = vrot.lane.b32.xlu0 %v3649, 112
    %v3655 = vpop.permute.xlu0 %3654
    %v3656 = vsel %vm3037, %v3653, %v3655
    %3659 = vrot.lane.b32.xlu0 %v3648, 80
    %v3660 = vpop.permute.xlu0 %3659
    %v3662 = vsel %vm3044, %v3655, %v3660
    %v3663 = vmax.f32 %v3648, %v3656
    %v3664 = vmax.f32 %v3649, %v3662
    %s3665 = scalar_lea.vmem [#allocation7], 1120
    %v3666 = vld [vmem:[%s3665] sm:$0xff]
    %v3667 = vld [vmem:[%s3665 + $0x8] sm:$0xff]
    %v3668 = vld [vmem:[%s3665 + $0x10] sm:$0xff]
    %v3669 = vld [vmem:[%s3665 + $0x18] sm:$0xff]
    %v3670 = vld [vmem:[%s3665 + $0x20] sm:$0xff]
    %v3671 = vld [vmem:[%s3665 + $0x28] sm:$0xff]
    %v3672 = vld [vmem:[%s3665 + $0x30] sm:$0xff]
    %v3673 = vld [vmem:[%s3665 + $0x38] sm:$0xff]
    %v3674 = vld [vmem:[%s3665 + $0x40] sm:$0xff]
    %v3675 = vld [vmem:[%s3665 + $0x48] sm:$0xff]
    %v3676 = vld [vmem:[%s3665 + $0x50] sm:$0xff]
    %v3677 = vld [vmem:[%s3665 + $0x58] sm:$0xff]
    %v3678 = vld [vmem:[%s3665 + $0x60] sm:$0xff]
    %v3679 = vld [vmem:[%s3665 + $0x68] sm:$0xff]
    %v3680 = vld [vmem:[%s3665 + $0x70] sm:$0xff]
    %v3681 = vld [vmem:[%s3665 + $0x78] sm:$0xff]
    %v3682 = vld [vmem:[%s3665 + $0x80] sm:$0xff]
    %v3683 = vld [vmem:[%s3665 + $0x88] sm:$0xff]
    %v3684 = vld [vmem:[%s3665 + $0x90] sm:$0xff]
    %v3685 = vld [vmem:[%s3665 + $0x98] sm:$0xff]
    %v3686 = vld [vmem:[%s3665 + $0xa0] sm:$0xff]
    %v3687 = vld [vmem:[%s3665 + $0xa8] sm:$0xff]
    %v3688 = vld [vmem:[%s3665 + $0xb0] sm:$0xff]
    %v3689 = vld [vmem:[%s3665 + $0xb8] sm:$0xff]
    %v3690 = vld [vmem:[%s3665 + $0xc0] sm:$0xff]
    %v3691 = vld [vmem:[%s3665 + $0xc8] sm:$0xff]
    %v3692 = vld [vmem:[%s3665 + $0xd0] sm:$0xff]
    %v3693 = vld [vmem:[%s3665 + $0xd8] sm:$0xff]
    %v3695 = vsel %vm420, %v3664, 0
    %3697 = vmatprep.subr.mxu0 0.0
    %3698 = vmatpush1.msra.mxu0 %v3681
    %3699 = vmatprep.subr.mxu0 0.0
    %3700 = vmatpush1.msra.mxu0 %v3680
    %3701 = vmatprep.subr.mxu0 0.0
    %3702 = vmatpush1.msra.mxu0 %v3679
    %3703 = vmatprep.subr.mxu0 0.0
    %3704 = vmatpush1.msra.mxu0 %v3678
    %3705 = vmatprep.subr.mxu0 0.0
    %3706 = vmatpush1.msra.mxu0 %v3677
    %3707 = vmatprep.subr.mxu0 0.0
    %3708 = vmatpush1.msra.mxu0 %v3676
    %3709 = vmatprep.subr.mxu0 0.0
    %3710 = vmatpush1.msra.mxu0 %v3675
    %3711 = vmatprep.subr.mxu0 0.0
    %3712 = vmatpush1.msra.mxu0 %v3674
    %3713 = vmatprep.subr.mxu0 0.0
    %3714 = vmatpush1.msra.mxu0 %v3673
    %3715 = vmatprep.subr.mxu0 0.0
    %3716 = vmatpush1.msra.mxu0 %v3672
    %3717 = vmatprep.subr.mxu0 0.0
    %3718 = vmatpush1.msra.mxu0 %v3671
    %3719 = vmatprep.subr.mxu0 0.0
    %3720 = vmatpush1.msra.mxu0 %v3670
    %3721 = vmatprep.subr.mxu0 0.0
    %3722 = vmatpush1.msra.mxu0 %v3669
    %3723 = vmatprep.subr.mxu0 0.0
    %3724 = vmatpush1.msra.mxu0 %v3668
    %3725 = vmatprep.subr.mxu0 0.0
    %3726 = vmatpush1.msra.mxu0 %v3667
    %3727 = vmatprep.subr.mxu0 0.0
    %3728 = vmatpush1.msra.mxu0 %v3666
    %3729 = vmatprep.subr.mxu0 0.0
    %3730 = vmatpush2.msra.mxu0 0.0
    %3731 = vmatprep.subr.mxu0 0.0
    %3732 = vmatpush2.msra.mxu0 0.0
    %3733 = vmatprep.subr.mxu0 0.0
    %3734 = vmatpush2.msra.mxu0 0.0
    %3735 = vmatprep.subr.mxu0 0.0
    %3736 = vmatpush2.msra.mxu0 0.0
    %3737 = vmatprep.subr.mxu0 0.0
    %3738 = vmatpush2.msra.mxu0 %v3693
    %3739 = vmatprep.subr.mxu0 0.0
    %3740 = vmatpush2.msra.mxu0 %v3692
    %3741 = vmatprep.subr.mxu0 0.0
    %3742 = vmatpush2.msra.mxu0 %v3691
    %3743 = vmatprep.subr.mxu0 0.0
    %3744 = vmatpush2.msra.mxu0 %v3690
    %3745 = vmatprep.subr.mxu0 0.0
    %3746 = vmatpush2.msra.mxu0 %v3689
    %3747 = vmatprep.subr.mxu0 0.0
    %3748 = vmatpush2.msra.mxu0 %v3688
    %3749 = vmatprep.subr.mxu0 0.0
    %3750 = vmatpush2.msra.mxu0 %v3687
    %3751 = vmatprep.subr.mxu0 0.0
    %3752 = vmatpush2.msra.mxu0 %v3686
    %3753 = vmatprep.subr.mxu0 0.0
    %3754 = vmatpush2.msra.mxu0 %v3685
    %3755 = vmatprep.subr.mxu0 0.0
    %3756 = vmatpush2.msra.mxu0 %v3684
    %3757 = vmatprep.subr.mxu0 0.0
    %3758 = vmatpush2.msra.mxu0 %v3683
    %3759 = vmatprep.subr.mxu0 0.0
    %3760 = vmatpush2.msra.mxu0 %v3682
    %3761 = vmatprep.mubr.f32.mxu0 %v3695
    %3762 = vmatmul.mubr.f32.gmra.mxu0 %v3663
    %v3763 = vpop.f32.mrf.mxu0
    %v3764 = vadd.f32 0.0, %v3763
    %v3765 = vpop.f32.mrf.mxu0
    %3766 = vdwg.mxu0
    %v3767 = vadd.f32 %v3643, %v3764
    %v3768 = vld [vmem:[#allocation4 + $0xc0] sm:$0xff]
    %v3769 = vld [vmem:[#allocation4 + $0xc8] sm:$0xff]
    %v3770 = vld [vmem:[#allocation4 + $0xd0] sm:$0xff]
    %v3771 = vld [vmem:[#allocation4 + $0xd8] sm:$0xff]
    %v3772 = vmax.f32 %v3768, %v3770
    %v3773 = vmax.f32 %v3769, %v3771
    %3776 = vrot.lane.b32.xlu0 %v3772, 112
    %v3777 = vpop.permute.xlu0 %3776
    %3778 = vrot.lane.b32.xlu0 %v3773, 112
    %v3779 = vpop.permute.xlu0 %3778
    %v3780 = vsel %vm3037, %v3777, %v3779
    %3783 = vrot.lane.b32.xlu0 %v3772, 80
    %v3784 = vpop.permute.xlu0 %3783
    %v3786 = vsel %vm3044, %v3779, %v3784
    %v3787 = vmax.f32 %v3772, %v3780
    %v3788 = vmax.f32 %v3773, %v3786
    %s3789 = scalar_lea.vmem [#allocation7], 1344
    %v3790 = vld [vmem:[%s3789] sm:$0xff]
    %v3791 = vld [vmem:[%s3789 + $0x8] sm:$0xff]
    %v3792 = vld [vmem:[%s3789 + $0x10] sm:$0xff]
    %v3793 = vld [vmem:[%s3789 + $0x18] sm:$0xff]
    %v3794 = vld [vmem:[%s3789 + $0x20] sm:$0xff]
    %v3795 = vld [vmem:[%s3789 + $0x28] sm:$0xff]
    %v3796 = vld [vmem:[%s3789 + $0x30] sm:$0xff]
    %v3797 = vld [vmem:[%s3789 + $0x38] sm:$0xff]
    %v3798 = vld [vmem:[%s3789 + $0x40] sm:$0xff]
    %v3799 = vld [vmem:[%s3789 + $0x48] sm:$0xff]
    %v3800 = vld [vmem:[%s3789 + $0x50] sm:$0xff]
    %v3801 = vld [vmem:[%s3789 + $0x58] sm:$0xff]
    %v3802 = vld [vmem:[%s3789 + $0x60] sm:$0xff]
    %v3803 = vld [vmem:[%s3789 + $0x68] sm:$0xff]
    %v3804 = vld [vmem:[%s3789 + $0x70] sm:$0xff]
    %v3805 = vld [vmem:[%s3789 + $0x78] sm:$0xff]
    %v3806 = vld [vmem:[%s3789 + $0x80] sm:$0xff]
    %v3807 = vld [vmem:[%s3789 + $0x88] sm:$0xff]
    %v3808 = vld [vmem:[%s3789 + $0x90] sm:$0xff]
    %v3809 = vld [vmem:[%s3789 + $0x98] sm:$0xff]
    %v3810 = vld [vmem:[%s3789 + $0xa0] sm:$0xff]
    %v3811 = vld [vmem:[%s3789 + $0xa8] sm:$0xff]
    %v3812 = vld [vmem:[%s3789 + $0xb0] sm:$0xff]
    %v3813 = vld [vmem:[%s3789 + $0xb8] sm:$0xff]
    %v3814 = vld [vmem:[%s3789 + $0xc0] sm:$0xff]
    %v3815 = vld [vmem:[%s3789 + $0xc8] sm:$0xff]
    %v3816 = vld [vmem:[%s3789 + $0xd0] sm:$0xff]
    %v3817 = vld [vmem:[%s3789 + $0xd8] sm:$0xff]
    %v3819 = vsel %vm420, %v3788, 0
    %3821 = vmatprep.subr.mxu0 0.0
    %3822 = vmatpush1.msra.mxu0 %v3805
    %3823 = vmatprep.subr.mxu0 0.0
    %3824 = vmatpush1.msra.mxu0 %v3804
    %3825 = vmatprep.subr.mxu0 0.0
    %3826 = vmatpush1.msra.mxu0 %v3803
    %3827 = vmatprep.subr.mxu0 0.0
    %3828 = vmatpush1.msra.mxu0 %v3802
    %3829 = vmatprep.subr.mxu0 0.0
    %3830 = vmatpush1.msra.mxu0 %v3801
    %3831 = vmatprep.subr.mxu0 0.0
    %3832 = vmatpush1.msra.mxu0 %v3800
    %3833 = vmatprep.subr.mxu0 0.0
    %3834 = vmatpush1.msra.mxu0 %v3799
    %3835 = vmatprep.subr.mxu0 0.0
    %3836 = vmatpush1.msra.mxu0 %v3798
    %3837 = vmatprep.subr.mxu0 0.0
    %3838 = vmatpush1.msra.mxu0 %v3797
    %3839 = vmatprep.subr.mxu0 0.0
    %3840 = vmatpush1.msra.mxu0 %v3796
    %3841 = vmatprep.subr.mxu0 0.0
    %3842 = vmatpush1.msra.mxu0 %v3795
    %3843 = vmatprep.subr.mxu0 0.0
    %3844 = vmatpush1.msra.mxu0 %v3794
    %3845 = vmatprep.subr.mxu0 0.0
    %3846 = vmatpush1.msra.mxu0 %v3793
    %3847 = vmatprep.subr.mxu0 0.0
    %3848 = vmatpush1.msra.mxu0 %v3792
    %3849 = vmatprep.subr.mxu0 0.0
    %3850 = vmatpush1.msra.mxu0 %v3791
    %3851 = vmatprep.subr.mxu0 0.0
    %3852 = vmatpush1.msra.mxu0 %v3790
    %3853 = vmatprep.subr.mxu0 0.0
    %3854 = vmatpush2.msra.mxu0 0.0
    %3855 = vmatprep.subr.mxu0 0.0
    %3856 = vmatpush2.msra.mxu0 0.0
    %3857 = vmatprep.subr.mxu0 0.0
    %3858 = vmatpush2.msra.mxu0 0.0
    %3859 = vmatprep.subr.mxu0 0.0
    %3860 = vmatpush2.msra.mxu0 0.0
    %3861 = vmatprep.subr.mxu0 0.0
    %3862 = vmatpush2.msra.mxu0 %v3817
    %3863 = vmatprep.subr.mxu0 0.0
    %3864 = vmatpush2.msra.mxu0 %v3816
    %3865 = vmatprep.subr.mxu0 0.0
    %3866 = vmatpush2.msra.mxu0 %v3815
    %3867 = vmatprep.subr.mxu0 0.0
    %3868 = vmatpush2.msra.mxu0 %v3814
    %3869 = vmatprep.subr.mxu0 0.0
    %3870 = vmatpush2.msra.mxu0 %v3813
    %3871 = vmatprep.subr.mxu0 0.0
    %3872 = vmatpush2.msra.mxu0 %v3812
    %3873 = vmatprep.subr.mxu0 0.0
    %3874 = vmatpush2.msra.mxu0 %v3811
    %3875 = vmatprep.subr.mxu0 0.0
    %3876 = vmatpush2.msra.mxu0 %v3810
    %3877 = vmatprep.subr.mxu0 0.0
    %3878 = vmatpush2.msra.mxu0 %v3809
    %3879 = vmatprep.subr.mxu0 0.0
    %3880 = vmatpush2.msra.mxu0 %v3808
    %3881 = vmatprep.subr.mxu0 0.0
    %3882 = vmatpush2.msra.mxu0 %v3807
    %3883 = vmatprep.subr.mxu0 0.0
    %3884 = vmatpush2.msra.mxu0 %v3806
    %3885 = vmatprep.mubr.f32.mxu0 %v3819
    %3886 = vmatmul.mubr.f32.gmra.mxu0 %v3787
    %v3887 = vpop.f32.mrf.mxu0
    %v3888 = vadd.f32 0.0, %v3887
    %v3889 = vpop.f32.mrf.mxu0
    %3890 = vdwg.mxu0
    %v3891 = vadd.f32 %v3767, %v3888
    %v3892 = vld [vmem:[%s6] sm:$0x1]
    %v3894 = vlaneseq
    %v3895 = vshrl.u32 %v3894, 7
    %v3896 = vsub.s32 0, %v3895
    %v3897 = vrot.slane %v3892, %v3896
    %v3899 = vadd.f32 %v3891, %v3897
    %3900 = vst [vmem:[%s7] sm:$0xff] %v3899
    %3901 = vmax.xlane.f32.xlu0 %v3899
    %v3902 = vpop.xlane.xlu0 %3901
    %v3903 = vsub.f32 %v3899, %v3902
    %v3904 = vmul.f32 %v3903, 1.442695
    %v3905 = vpow.pop %v3904
    %3906 = vadd.xlane.f32.xlu0 %v3905
    %v3907 = vpop.xlane.xlu0 %3906
    %v3908 = vrcp.pop %v3907
    %v3909 = vmul.f32 %v3905, %v3908
    %3910 = vst [vmem:[%s8] sm:$0xff] %v3909
    // Predicated region
    $region38: #{convnet_forward.1} parent=1 // pred_check
      _
    $region39: #{convnet_forward.1} parent=1 // pred_check_branch
      %3912 = sbr.rel (0) target = $region41
    $region40: #{convnet_forward.1} parent=1 // pred_region
      _
    $region41: #{convnet_forward.1} parent=1 // pred_fallthru
      _
    // Predicated region
    $region42: #{convnet_forward.1} parent=1 // pred_check
      _
    $region43: #{convnet_forward.1} parent=1 // pred_check_branch
      %3914 = sbr.rel (0) target = $region45
    $region44: #{convnet_forward.1} parent=1 // pred_region
      _
    $region45: #{convnet_forward.1} parent=1 // pred_fallthru
      _
    // Predicated region
    $region46: #{convnet_forward.1} parent=1 // pred_check
      _
    $region47: #{convnet_forward.1} parent=1 // pred_check_branch
      %3916 = sbr.rel (0) target = $region49
    $region48: #{convnet_forward.1} parent=1 // pred_region
      _
    $region49: #{convnet_forward.1} parent=1 // pred_fallthru
      _
    // Predicated region
    $region50: #{convnet_forward.1} parent=1 // pred_check
      _
    $region51: #{convnet_forward.1} parent=1 // pred_check_branch
      %3918 = sbr.rel (0) target = $region53
    $region52: #{convnet_forward.1} parent=1 // pred_region
      _
    $region53: #{convnet_forward.1} parent=1 // pred_fallthru
      _
    %3919 = vsyncpa [#allocation6], 1
    %3920 = vsyncpa [#allocation8], 1

</llo_original>
